<compile_context>
chip_gen: v5e
topology: v5e:2x2
jax: 0.10.0
libtpu: 0.0.40
codegen_flags: <defaults>
</compile_context>

<pallas_src>
import jax
import jax.numpy as jnp
from jax.experimental import pallas as pl
from jax.experimental.pallas import tpu as pltpu

_HID0 = 1024          # 1000-wide base output, padded to 8*128
_HID1 = 256
_HID2 = 64
_K_GRAN = 512         # in_features padding granularity (decoupled from tile_k)
_SINGLE_K_MAX = 4096  # keep the whole padded wbase resident when in_pad <= this
_MAX_TILE_B = 512     # largest batch block


def _round_up(x, m):
    return (x + m - 1) // m * m


def _cdiv(a, b):
    return (a + b - 1) // b


def _dims(in_features, a_bins, b_bins):
    """Padding / tile sizes derived from the problem shape."""
    in_pad = _round_up(in_features, _K_GRAN)
    nout = a_bins * b_bins
    nout_pad = _round_up(nout, 128)                 # lane-dense output store
    if in_pad <= _SINGLE_K_MAX:
        tile_k = in_pad                             # single K tile, wbase resident
    else:
        tile_k = _K_GRAN                            # largest divisor of in_pad <= 2048
        for cand in (2048, 1024):
            if in_pad % cand == 0:
                tile_k = cand
                break
    return tile_k, in_pad, nout, nout_pad


# ----------------------------------------------------------------------------
# Kernels
# ----------------------------------------------------------------------------
def _mlp_tail(h0, w1_ref, b1_ref, w2_ref, b2_ref, wfh_ref, bfh_ref, out_ref):
    """ReLU -> Layer1 -> ReLU -> Layer2 -> ReLU -> fused(Layer3 + heatmap)."""
    h = jnp.maximum(h0, 0.0)
    h = jnp.dot(h.astype(jnp.bfloat16), w1_ref[...],
                preferred_element_type=jnp.float32) + b1_ref[...]
    h = jnp.maximum(h, 0.0)
    h = jnp.dot(h.astype(jnp.bfloat16), w2_ref[...],
                preferred_element_type=jnp.float32) + b2_ref[...]
    h = jnp.maximum(h, 0.0)
    out_ref[...] = jnp.dot(h.astype(jnp.bfloat16), wfh_ref[...],
                           preferred_element_type=jnp.float32) + bfh_ref[...]


def _kernel_single_k(x_ref, wbase_ref, bbase_ref,
                     w1_ref, b1_ref, w2_ref, b2_ref, wfh_ref, bfh_ref,
                     out_ref):
    """in_pad fits in one K tile: no accumulator, grid only over batch blocks."""
    h0 = jnp.dot(x_ref[...], wbase_ref[...],
                 preferred_element_type=jnp.float32) + bbase_ref[...]
    _mlp_tail(h0, w1_ref, b1_ref, w2_ref, b2_ref, wfh_ref, bfh_ref, out_ref)


def _kernel_tiled_k(x_ref, wbase_ref, bbase_ref,
                    w1_ref, b1_ref, w2_ref, b2_ref, wfh_ref, bfh_ref,
                    out_ref, acc_ref):
    """Large in_features: K-tiled base matmul with a VMEM f32 accumulator."""
    k = pl.program_id(1)

    @pl.when(k == 0)
    def _():
        acc_ref[...] = jnp.zeros_like(acc_ref)

    acc_ref[...] += jnp.dot(x_ref[...], wbase_ref[...],
                            preferred_element_type=jnp.float32)

    @pl.when(k == pl.num_programs(1) - 1)
    def _():
        _mlp_tail(acc_ref[...] + bbase_ref[...],
                  w1_ref, b1_ref, w2_ref, b2_ref, wfh_ref, bfh_ref, out_ref)


# ----------------------------------------------------------------------------
# Parameters
# ----------------------------------------------------------------------------
def _linear_params(key, fan_in, fan_out):
    """PyTorch-style uniform(-1/sqrt(fan_in), 1/sqrt(fan_in)), stored (in, out)."""
    kw, kb = jax.random.split(key)
    bound = 1.0 / jnp.sqrt(jnp.float32(fan_in))
    w = jax.random.uniform(kw, (fan_in, fan_out), jnp.float32, -bound, bound)
    b = jax.random.uniform(kb, (1, fan_out), jnp.float32, -bound, bound)
    return w, b


def make_params(key, in_features, a_bins, b_bins):
    """Raw f32 parameters mirroring the PyTorch module (weights stored (in, out))."""
    keys = jax.random.split(key, 6)
    p = {}
    p["wbase"], p["bbase"] = _linear_params(keys[0], in_features, 1000)  # base_model stand-in
    p["w1"], p["b1"] = _linear_params(keys[1], 1000, 256)
    p["w2"], p["b2"] = _linear_params(keys[2], 256, 64)
    p["w3"], p["b3"] = _linear_params(keys[3], 64, 64)
    p["wh"], p["bh"] = _linear_params(keys[4], 64, a_bins * b_bins)
    return p


def prepare_params(raw, in_features, a_bins, b_bins):
    """Fold Layer3 into the heatmap head, zero-pad to MXU-friendly shapes,
    cast weight matrices to bf16 (biases stay f32)."""
    _, in_pad, _, nout_pad = _dims(in_features, a_bins, b_bins)

    def pad2(a, rows, cols):
        return jnp.zeros((rows, cols), a.dtype).at[:a.shape[0], :a.shape[1]].set(a)

    wfh = raw["w3"] @ raw["wh"]                  # (64, nout)
    bfh = raw["b3"] @ raw["wh"] + raw["bh"]      # (1, nout)

    return {
        "wbase": pad2(raw["wbase"], in_pad, _HID0).astype(jnp.bfloat16),
        "bbase": pad2(raw["bbase"], 1, _HID0),
        "w1":    pad2(raw["w1"], _HID0, _HID1).astype(jnp.bfloat16),
        "b1":    raw["b1"],
        "w2":    raw["w2"].astype(jnp.bfloat16),
        "b2":    raw["b2"],
        "wfh":   pad2(wfh, _HID2, nout_pad).astype(jnp.bfloat16),
        "bfh":   pad2(bfh, 1, nout_pad),
    }


# ----------------------------------------------------------------------------
# Wrapper
# ----------------------------------------------------------------------------
def light_angles_head_heatmap(x_nchw, params, a_bins, b_bins):
    """Forward pass of LightAnglesHeadHeatmap. x_nchw: (B, C, H, W) float32.
    Returns heatmap of shape (B, a_bins * b_bins)."""
    B = x_nchw.shape[0]
    in_features = 1
    for d in x_nchw.shape[1:]:
        in_features *= d
    tile_k, in_pad, nout, nout_pad = _dims(in_features, a_bins, b_bins)
    single_k = (tile_k == in_pad)

    # Batch tiling: as few batch blocks as possible (the K-tiled wbase stream is
    # re-read once per batch block); tile_b is a multiple of 16 so bf16 x tiles
    # are fully sublane-packed, and sized to minimize zero-row padding waste.
    nb = _cdiv(B, _MAX_TILE_B)
    tile_b = _round_up(_cdiv(B, nb), 16)
    b_pad = nb * tile_b

    # Flatten + cast to bf16 once; skip the padded copy when no padding needed.
    x2 = x_nchw.reshape(B, in_features).astype(jnp.bfloat16)
    if b_pad == B and in_pad == in_features:
        x_prep = x2
    else:
        x_prep = jnp.pad(x2, ((0, b_pad - B), (0, in_pad - in_features)))

    # Block specs ------------------------------------------------------------
    tail_shapes = [
        (1, _HID0),            # bbase
        (_HID0, _HID1),        # w1
        (1, _HID1),            # b1
        (_HID1, _HID2),        # w2
        (1, _HID2),            # b2
        (_HID2, nout_pad),     # fused head W
        (1, nout_pad),         # fused head b
    ]

    if single_k:
        grid = (nb,)
        in_specs = (
            [pl.BlockSpec((tile_b, in_pad), lambda i: (i, 0)),       # x
             pl.BlockSpec((in_pad, _HID0), lambda i: (0, 0))]        # wbase (resident)
            + [pl.BlockSpec(s, lambda i: (0, 0)) for s in tail_shapes]
        )
        out_specs = pl.BlockSpec((tile_b, nout_pad), lambda i: (i, 0))
        scratch_shapes = []
        kernel = _kernel_single_k
        dims_sem = ("parallel",)
        in_block_shapes = [(tile_b, in_pad, 2), (in_pad, _HID0, 2)]
    else:
        grid = (nb, in_pad // tile_k)
        in_specs = (
            [pl.BlockSpec((tile_b, tile_k), lambda i, k: (i, k)),    # x
             pl.BlockSpec((tile_k, _HID0), lambda i, k: (k, 0))]     # wbase (K-tiled)
            + [pl.BlockSpec(s, lambda i, k: (0, 0)) for s in tail_shapes]
        )
        out_specs = pl.BlockSpec((tile_b, nout_pad), lambda i, k: (i, 0))
        scratch_shapes = [pltpu.VMEM((tile_b, _HID0), jnp.float32)]
        kernel = _kernel_tiled_k
        # On v7x, batch-parallel megacore split would re-stream wbase per core;
        # with nb == 1 (the common case after the tile_b change) this is moot.
        dims_sem = ("parallel", "arbitrary")
        in_block_shapes = [(tile_b, tile_k, 2), (tile_k, _HID0, 2)]

    # Explicit VMEM budget (blocks are known at trace time) --------------------
    def _blk_bytes(rows, cols, itemsize):
        return max(rows, 8) * _round_up(cols, 128) * itemsize

    tail_block_bytes = [
        _blk_bytes(r, c, 2 if (r > 1) else 4) for (r, c) in tail_shapes
    ]
    vmem_bytes = (
        sum(2 * _blk_bytes(r, c, s) for (r, c, s) in in_block_shapes)   # x, wbase (2 bufs)
        + sum(2 * b for b in tail_block_bytes)                          # resident tail (2 bufs)
        + 2 * _blk_bytes(tile_b, nout_pad, 4)                           # output (2 bufs)
        + (0 if single_k else tile_b * _HID0 * 4)                       # accumulator scratch
        + (4 << 20)                                                     # headroom
    )

    # Honest scheduler hint: wbase is re-streamed once per batch block when K-tiled.
    wbase_bytes = in_pad * _HID0 * 2
    tail_w_bytes = ((_HID0 * _HID1 + _HID1 * _HID2 + _HID2 * nout_pad) * 2
                    + (_HID0 + _HID1 + _HID2 + nout_pad) * 4)
    wbase_streams = 1 if single_k else nb
    cost = pl.CostEstimate(
        flops=2 * b_pad * (in_pad * _HID0 + _HID0 * _HID1
                           + _HID1 * _HID2 + _HID2 * nout_pad),
        transcendentals=0,
        bytes_accessed=int(x_prep.size * 2 + wbase_bytes * wbase_streams
                           + tail_w_bytes + b_pad * nout_pad * 4),
    )

    out = pl.pallas_call(
        kernel,
        out_shape=jax.ShapeDtypeStruct((b_pad, nout_pad), jnp.float32),
        grid_spec=pltpu.PrefetchScalarGridSpec(
            num_scalar_prefetch=0,
            grid=grid,
            in_specs=in_specs,
            out_specs=out_specs,
            scratch_shapes=scratch_shapes,
        ),
        compiler_params=pltpu.CompilerParams(
            dimension_semantics=dims_sem,
            vmem_limit_bytes=int(vmem_bytes),
        ),
        cost_estimate=cost,
    )(x_prep,
      params["wbase"], params["bbase"],
      params["w1"], params["b1"],
      params["w2"], params["b2"],
      params["wfh"], params["bfh"])

    return out[:B, :nout]


# ----------------------------------------------------------------------------
# References
# ----------------------------------------------------------------------------
def _reference_prepared(x_nchw, p, in_features, a_bins, b_bins):
    """Plain-JAX reference using the exact same prepared (folded/padded/bf16) params."""
    B = x_nchw.shape[0]
    _, in_pad, nout, _ = _dims(in_features, a_bins, b_bins)
    x = jnp.zeros((B, in_pad), jnp.bfloat16).at[:, :in_features].set(
        x_nchw.reshape(B, in_features).astype(jnp.bfloat16))
    h = jnp.maximum(jnp.dot(x, p["wbase"], preferred_element_type=jnp.float32)
                    + p["bbase"], 0.0)
    h = jnp.maximum(jnp.dot(h.astype(jnp.bfloat16), p["w1"],
                            preferred_element_type=jnp.float32) + p["b1"], 0.0)
    h = jnp.maximum(jnp.dot(h.astype(jnp.bfloat16), p["w2"],
                            preferred_element_type=jnp.float32) + p["b2"], 0.0)
    out = jnp.dot(h.astype(jnp.bfloat16), p["wfh"],
                  preferred_element_type=jnp.float32) + p["bfh"]
    return out[:, :nout]


def _reference_f32(x_nchw, raw):
    """Unfused full-f32 forward, mirroring the PyTorch module verbatim."""
    x = x_nchw.reshape(x_nchw.shape[0], -1)
    h = jnp.maximum(x @ raw["wbase"] + raw["bbase"], 0.0)
    h = jnp.maximum(h @ raw["w1"] + raw["b1"], 0.0)
    h = jnp.maximum(h @ raw["w2"] + raw["b2"], 0.0)
    h = h @ raw["w3"] + raw["b3"]
    return h @ raw["wh"] + raw["bh"]


if __name__ == "__main__":
    key = jax.random.PRNGKey(0)
    k_x, k_p = jax.random.split(key)

    B, C, H, W = 2, 4, 16, 16
    a_bins, b_bins = 16, 12
    in_features = C * H * W

    x = jax.random.normal(k_x, (B, C, H, W), jnp.float32)
    raw = make_params(k_p, in_features, a_bins, b_bins)
    params = prepare_params(raw, in_features, a_bins, b_bins)

    heatmap = light_angles_head_heatmap(x, params, a_bins, b_bins)
    heatmap = jax.block_until_ready(heatmap)
    assert heatmap.shape == (B, a_bins * b_bins)

    # Kernel-vs-reference with identical math (folded / padded / bf16 params).
    ref = _reference_prepared(x, params, in_features, a_bins, b_bins)
    assert jnp.allclose(heatmap, ref, atol=1e-3, rtol=1e-3)

    # End-to-end semantics check vs the unfused full-f32 PyTorch-style forward.
    ref_f32 = _reference_f32(x, raw)
    assert jnp.allclose(heatmap, ref_f32, atol=5e-2, rtol=5e-2)

    print("KERNEL_OK")
</pallas_src>

<mosaic_0001>
module attributes {stable_mosaic.version = 11 : i64} {
  func.func @_kernel_single_k(%arg0: i32, %arg1: memref<16x1024xbf16, #tpu.memory_space<vmem>>, %arg2: memref<1024x1024xbf16, #tpu.memory_space<vmem>>, %arg3: memref<1x1024xf32, #tpu.memory_space<vmem>>, %arg4: memref<1024x256xbf16, #tpu.memory_space<vmem>>, %arg5: memref<1x256xf32, #tpu.memory_space<vmem>>, %arg6: memref<256x64xbf16, #tpu.memory_space<vmem>>, %arg7: memref<1x64xf32, #tpu.memory_space<vmem>>, %arg8: memref<64x256xbf16, #tpu.memory_space<vmem>>, %arg9: memref<1x256xf32, #tpu.memory_space<vmem>>, %arg10: memref<16x256xf32, #tpu.memory_space<vmem>>) attributes {dimension_semantics = [#tpu.dimension_semantics<parallel>], iteration_bounds = array<i64: 1>, scalar_prefetch = 0 : i64, scratch_operands = 0 : i64, tpu.core_type = #tpu.core_type<tc>, window_params = [{transform_indices = @transform_0, window_bounds = array<i64: 16, 1024>}, {pipeline_mode = #tpu.pipeline_mode<synchronous>, transform_indices = @transform_1, window_bounds = array<i64: 1024, 1024>}, {pipeline_mode = #tpu.pipeline_mode<synchronous>, transform_indices = @transform_2, window_bounds = array<i64: 1, 1024>}, {pipeline_mode = #tpu.pipeline_mode<synchronous>, transform_indices = @transform_3, window_bounds = array<i64: 1024, 256>}, {pipeline_mode = #tpu.pipeline_mode<synchronous>, transform_indices = @transform_4, window_bounds = array<i64: 1, 256>}, {pipeline_mode = #tpu.pipeline_mode<synchronous>, transform_indices = @transform_5, window_bounds = array<i64: 256, 64>}, {pipeline_mode = #tpu.pipeline_mode<synchronous>, transform_indices = @transform_6, window_bounds = array<i64: 1, 64>}, {pipeline_mode = #tpu.pipeline_mode<synchronous>, transform_indices = @transform_7, window_bounds = array<i64: 64, 256>}, {pipeline_mode = #tpu.pipeline_mode<synchronous>, transform_indices = @transform_8, window_bounds = array<i64: 1, 256>}, {transform_indices = @transform_9, window_bounds = array<i64: 16, 256>}]} {
    %c0 = arith.constant 0 : index
    %c0_0 = arith.constant 0 : index
    %0 = vector.load %arg1[%c0, %c0_0] : memref<16x1024xbf16, #tpu.memory_space<vmem>>, vector<16x1024xbf16>
    %c0_1 = arith.constant 0 : index
    %c0_2 = arith.constant 0 : index
    %1 = vector.load %arg2[%c0_1, %c0_2] : memref<1024x1024xbf16, #tpu.memory_space<vmem>>, vector<1024x1024xbf16>
    %cst = arith.constant dense<0.000000e+00> : vector<16x1024xf32>
    %2 = tpu.matmul %0, %1, %cst {dimension_numbers = #tpu.dot_dimension_numbers<[1], [0], [0], [1], [0, 0, 1, 1], [], []>} : vector<16x1024xbf16>, vector<1024x1024xbf16>, vector<16x1024xf32> -> vector<16x1024xf32>
    %c0_3 = arith.constant 0 : index
    %c0_4 = arith.constant 0 : index
    %3 = vector.load %arg3[%c0_3, %c0_4] : memref<1x1024xf32, #tpu.memory_space<vmem>>, vector<1x1024xf32>
    %4 = vector.broadcast %3 : vector<1x1024xf32> to vector<16x1024xf32>
    %5 = arith.addf %2, %4 : vector<16x1024xf32>
    %cst_5 = arith.constant 0.000000e+00 : f32
    %6 = vector.broadcast %cst_5 : f32 to vector<16x1024xf32>
    %7 = arith.maximumf %5, %6 : vector<16x1024xf32>
    %8 = arith.truncf %7 : vector<16x1024xf32> to vector<16x1024xbf16>
    %c0_6 = arith.constant 0 : index
    %c0_7 = arith.constant 0 : index
    %9 = vector.load %arg4[%c0_6, %c0_7] : memref<1024x256xbf16, #tpu.memory_space<vmem>>, vector<1024x256xbf16>
    %cst_8 = arith.constant dense<0.000000e+00> : vector<16x256xf32>
    %10 = tpu.matmul %8, %9, %cst_8 {dimension_numbers = #tpu.dot_dimension_numbers<[1], [0], [0], [1], [0, 0, 1, 1], [], []>} : vector<16x1024xbf16>, vector<1024x256xbf16>, vector<16x256xf32> -> vector<16x256xf32>
    %c0_9 = arith.constant 0 : index
    %c0_10 = arith.constant 0 : index
    %11 = vector.load %arg5[%c0_9, %c0_10] : memref<1x256xf32, #tpu.memory_space<vmem>>, vector<1x256xf32>
    %12 = vector.broadcast %11 : vector<1x256xf32> to vector<16x256xf32>
    %13 = arith.addf %10, %12 : vector<16x256xf32>
    %cst_11 = arith.constant 0.000000e+00 : f32
    %14 = vector.broadcast %cst_11 : f32 to vector<16x256xf32>
    %15 = arith.maximumf %13, %14 : vector<16x256xf32>
    %16 = arith.truncf %15 : vector<16x256xf32> to vector<16x256xbf16>
    %c0_12 = arith.constant 0 : index
    %c0_13 = arith.constant 0 : index
    %17 = vector.load %arg6[%c0_12, %c0_13] : memref<256x64xbf16, #tpu.memory_space<vmem>>, vector<256x64xbf16>
    %cst_14 = arith.constant dense<0.000000e+00> : vector<16x64xf32>
    %18 = tpu.matmul %16, %17, %cst_14 {dimension_numbers = #tpu.dot_dimension_numbers<[1], [0], [0], [1], [0, 0, 1, 1], [], []>} : vector<16x256xbf16>, vector<256x64xbf16>, vector<16x64xf32> -> vector<16x64xf32>
    %c0_15 = arith.constant 0 : index
    %c0_16 = arith.constant 0 : index
    %19 = vector.load %arg7[%c0_15, %c0_16] : memref<1x64xf32, #tpu.memory_space<vmem>>, vector<1x64xf32>
    %20 = vector.broadcast %19 : vector<1x64xf32> to vector<16x64xf32>
    %21 = arith.addf %18, %20 : vector<16x64xf32>
    %cst_17 = arith.constant 0.000000e+00 : f32
    %22 = vector.broadcast %cst_17 : f32 to vector<16x64xf32>
    %23 = arith.maximumf %21, %22 : vector<16x64xf32>
    %24 = arith.truncf %23 : vector<16x64xf32> to vector<16x64xbf16>
    %c0_18 = arith.constant 0 : index
    %c0_19 = arith.constant 0 : index
    %25 = vector.load %arg8[%c0_18, %c0_19] : memref<64x256xbf16, #tpu.memory_space<vmem>>, vector<64x256xbf16>
    %cst_20 = arith.constant dense<0.000000e+00> : vector<16x256xf32>
    %26 = tpu.matmul %24, %25, %cst_20 {dimension_numbers = #tpu.dot_dimension_numbers<[1], [0], [0], [1], [0, 0, 1, 1], [], []>} : vector<16x64xbf16>, vector<64x256xbf16>, vector<16x256xf32> -> vector<16x256xf32>
    %c0_21 = arith.constant 0 : index
    %c0_22 = arith.constant 0 : index
    %27 = vector.load %arg9[%c0_21, %c0_22] : memref<1x256xf32, #tpu.memory_space<vmem>>, vector<1x256xf32>
    %28 = vector.broadcast %27 : vector<1x256xf32> to vector<16x256xf32>
    %29 = arith.addf %26, %28 : vector<16x256xf32>
    %c0_23 = arith.constant 0 : index
    %c0_24 = arith.constant 0 : index
    %30 = vector.load %arg10[%c0_23, %c0_24] : memref<16x256xf32, #tpu.memory_space<vmem>>, vector<16x256xf32>
    tpu.vector_store %arg10[%c0_23, %c0_24], %29 {strides = array<i32>} : memref<16x256xf32, #tpu.memory_space<vmem>>, vector<16x256xf32>,
    return
  }
  func.func @transform_0(%arg0: i32) -> (i32, i32) {
    %c0_i32 = arith.constant 0 : i32
    %c0_i32_0 = arith.constant 0 : i32
    return %arg0, %c0_i32 : i32, i32
  }
  func.func @transform_1(%arg0: i32) -> (i32, i32) {
    %c0_i32 = arith.constant 0 : i32
    %c0_i32_0 = arith.constant 0 : i32
    %c0_i32_1 = arith.constant 0 : i32
    return %c0_i32, %c0_i32_0 : i32, i32
  }
  func.func @transform_2(%arg0: i32) -> (i32, i32) {
    %c0_i32 = arith.constant 0 : i32
    %c0_i32_0 = arith.constant 0 : i32
    %c0_i32_1 = arith.constant 0 : i32
    return %c0_i32, %c0_i32_0 : i32, i32
  }
  func.func @transform_3(%arg0: i32) -> (i32, i32) {
    %c0_i32 = arith.constant 0 : i32
    %c0_i32_0 = arith.constant 0 : i32
    %c0_i32_1 = arith.constant 0 : i32
    return %c0_i32, %c0_i32_0 : i32, i32
  }
  func.func @transform_4(%arg0: i32) -> (i32, i32) {
    %c0_i32 = arith.constant 0 : i32
    %c0_i32_0 = arith.constant 0 : i32
    %c0_i32_1 = arith.constant 0 : i32
    return %c0_i32, %c0_i32_0 : i32, i32
  }
  func.func @transform_5(%arg0: i32) -> (i32, i32) {
    %c0_i32 = arith.constant 0 : i32
    %c0_i32_0 = arith.constant 0 : i32
    %c0_i32_1 = arith.constant 0 : i32
    return %c0_i32, %c0_i32_0 : i32, i32
  }
  func.func @transform_6(%arg0: i32) -> (i32, i32) {
    %c0_i32 = arith.constant 0 : i32
    %c0_i32_0 = arith.constant 0 : i32
    %c0_i32_1 = arith.constant 0 : i32
    return %c0_i32, %c0_i32_0 : i32, i32
  }
  func.func @transform_7(%arg0: i32) -> (i32, i32) {
    %c0_i32 = arith.constant 0 : i32
    %c0_i32_0 = arith.constant 0 : i32
    %c0_i32_1 = arith.constant 0 : i32
    return %c0_i32, %c0_i32_0 : i32, i32
  }
  func.func @transform_8(%arg0: i32) -> (i32, i32) {
    %c0_i32 = arith.constant 0 : i32
    %c0_i32_0 = arith.constant 0 : i32
    %c0_i32_1 = arith.constant 0 : i32
    return %c0_i32, %c0_i32_0 : i32, i32
  }
  func.func @transform_9(%arg0: i32) -> (i32, i32) {
    %c0_i32 = arith.constant 0 : i32
    %c0_i32_0 = arith.constant 0 : i32
    return %arg0, %c0_i32 : i32, i32
  }
}

</mosaic_0001>

<llo_original>
// kernel: tpu_custom_call.1
$region0: #{tpu_custom_call.1}
  #allocation0 [shape = 'u32[]', space=smem, size = 0x4, offset = 0x4, fixed_abs, tag = 'smem constant byte address 0x4 - core index']
  #allocation1 [shape = 'u32[72,128]{1,0:T(1,128)}', space=vmem, size = 0x9000, scoped, tag = 'internal scratch']
  %s0 = inlined_call_operand.hbm [shape: bf16[16,1024], index: 0, kind: input, shape index: {}]
  %s1 = inlined_call_operand.hbm [shape: bf16[1024,1024], index: 1, kind: input, shape index: {}]
  %s2 = inlined_call_operand.hbm [shape: f32[1,1024], index: 2, kind: input, shape index: {}]
  %s3 = inlined_call_operand.hbm [shape: bf16[1024,256], index: 3, kind: input, shape index: {}]
  %s4 = inlined_call_operand.hbm [shape: f32[1,256], index: 4, kind: input, shape index: {}]
  %s5 = inlined_call_operand.vmem [shape: bf16[256,64], index: 5, kind: input, shape index: {}]
  %s6 = inlined_call_operand.hbm [shape: f32[1,64], index: 6, kind: input, shape index: {}]
  %s7 = inlined_call_operand.hbm [shape: bf16[64,256], index: 7, kind: input, shape index: {}]
  %s8 = inlined_call_operand.hbm [shape: f32[1,256], index: 8, kind: input, shape index: {}]
  %s9 = inlined_call_operand.hbm [shape: f32[16,256], index: 9, kind: output, shape index: {}]
  %s10 = sld [smem:[#allocation0]]
  $region78: #{tpu_custom_call.1} parent=0
    _
  %s12 = ssub.s32 1, %s10
  %s13 = scalar_select 0, %s12, %s10
  $region1: #{tpu_custom_call.1} parent=0
    #allocation2 [shape = 'u8[32768]{0}', space=vmem, size = 0x8000, scoped, tag = 'input window, operand 0, single buffered']
    #allocation3 [shape = 's32[1]{0}', space=sflag, size = 0x4, scoped, tag = 'scoped memory for tpu_custom_call.1']
    #allocation4 [shape = 's32[1]{0}', space=sflag, size = 0x4, scoped, tag = 'scoped memory for tpu_custom_call.1']
    #allocation5 [shape = 'u8[2097152]{0}', space=vmem, size = 0x200000, scoped, tag = 'input window, operand 1, single buffered']
    #allocation6 [shape = 's32[1]{0}', space=sflag, size = 0x4, scoped, tag = 'scoped memory for tpu_custom_call.1']
    #allocation7 [shape = 'u8[4096]{0}', space=vmem, size = 0x1000, scoped, tag = 'input window, operand 2, single buffered']
    #allocation8 [shape = 'u8[524288]{0}', space=vmem, size = 0x80000, scoped, tag = 'input window, operand 3, single buffered']
    #allocation9 [shape = 's32[1]{0}', space=sflag, size = 0x4, scoped, tag = 'scoped memory for tpu_custom_call.1']
    #allocation10 [shape = 'u8[1024]{0}', space=vmem, size = 0x400, scoped, tag = 'input window, operand 4, single buffered']
    #allocation11 [shape = 'u8[512]{0}', space=vmem, size = 0x400, scoped, tag = 'input window, operand 6, single buffered']
    #allocation12 [shape = 's32[1]{0}', space=sflag, size = 0x4, scoped, tag = 'scoped memory for tpu_custom_call.1']
    #allocation13 [shape = 'u8[32768]{0}', space=vmem, size = 0x8000, scoped, tag = 'input window, operand 7, single buffered']
    #allocation14 [shape = 'u8[1024]{0}', space=vmem, size = 0x400, scoped, tag = 'input window, operand 8, single buffered']
    #allocation15 [shape = 's32[1]{0}', space=sflag, size = 0x4, scoped, tag = 'scoped memory for tpu_custom_call.1']
    #allocation16 [shape = 'u8[16384]{0}', space=vmem, size = 0x4000, scoped, tag = 'output window, operand 0, single buffered']
    %14 = vsyncpa [#allocation3], 0
    %15 = vsyncpa [#allocation6], 0
    %16 = vsyncpa [#allocation9], 0
    %17 = vsyncpa [#allocation12], 0
    %18 = vsyncpa [#allocation15], 0
    %19 = vsyncpa [#allocation4], 0
    // Predicated region
    $region2: #{tpu_custom_call.1} parent=1 // pred_check
      _
    $region3: #{tpu_custom_call.1} parent=1 // pred_check_branch
      %21 = sbr.rel (0) target = $region5
    $region4: #{tpu_custom_call.1} parent=1 // pred_region
      %23 = vsyncadd [#allocation3], 0
      %s24 = sshll.u32 %s0, 4
      %s25 = int_to_ptr.hbm [resolvable:$true] %s24
      %s26 = sshll.u32 [#allocation2], 4
      %s27 = int_to_ptr.vmem [resolvable:$true] %s26
      %32 = dma.hbm_to_vmem [thread:$0]  %s25, 1024, %s27, [#allocation3], 512, 512, 32
    $region5: #{tpu_custom_call.1} parent=1 // pred_fallthru
      _
    // Predicated region
    $region6: #{tpu_custom_call.1} parent=1 // pred_check
      _
    $region7: #{tpu_custom_call.1} parent=1 // pred_check_branch
      %34 = sbr.rel (0) target = $region9
    $region8: #{tpu_custom_call.1} parent=1 // pred_region
      %36 = vsyncadd [#allocation6], 0
      %s37 = sshll.u32 %s1, 4
      %s38 = int_to_ptr.hbm [resolvable:$true] %s37
      %s39 = sshll.u32 [#allocation5], 4
      %s40 = int_to_ptr.vmem [resolvable:$true] %s39
      %45 = dma.hbm_to_vmem [thread:$0]  %s38, 65536, %s40, [#allocation6], 512, 512, 32
    $region9: #{tpu_custom_call.1} parent=1 // pred_fallthru
      _
    // Predicated region
    $region10: #{tpu_custom_call.1} parent=1 // pred_check
      _
    $region11: #{tpu_custom_call.1} parent=1 // pred_check_branch
      %47 = sbr.rel (0) target = $region13
    $region12: #{tpu_custom_call.1} parent=1 // pred_region
      %49 = vsyncadd [#allocation6], 0
      %s51 = sshll.u32 %s2, 4
      %s52 = int_to_ptr.hbm [resolvable:$true] %s51
      %s53 = sshll.u32 [#allocation7], 4
      %s54 = int_to_ptr.vmem [resolvable:$true] %s53
      %56 = dma.hbm_to_vmem [thread:$0]  %s52, 128, %s54, [#allocation6]
    $region13: #{tpu_custom_call.1} parent=1 // pred_fallthru
      _
    // Predicated region
    $region14: #{tpu_custom_call.1} parent=1 // pred_check
      _
    $region15: #{tpu_custom_call.1} parent=1 // pred_check_branch
      %58 = sbr.rel (0) target = $region17
    $region16: #{tpu_custom_call.1} parent=1 // pred_region
      %60 = vsyncadd [#allocation9], 0
      %s61 = sshll.u32 %s3, 4
      %s62 = int_to_ptr.hbm [resolvable:$true] %s61
      %s63 = sshll.u32 [#allocation8], 4
      %s64 = int_to_ptr.vmem [resolvable:$true] %s63
      %69 = dma.hbm_to_vmem [thread:$0]  %s62, 16384, %s64, [#allocation9], 128, 128, 8
    $region17: #{tpu_custom_call.1} parent=1 // pred_fallthru
      _
    // Predicated region
    $region18: #{tpu_custom_call.1} parent=1 // pred_check
      _
    $region19: #{tpu_custom_call.1} parent=1 // pred_check_branch
      %71 = sbr.rel (0) target = $region21
    $region20: #{tpu_custom_call.1} parent=1 // pred_region
      %73 = vsyncadd [#allocation9], 0
      %s75 = sshll.u32 %s4, 4
      %s76 = int_to_ptr.hbm [resolvable:$true] %s75
      %s77 = sshll.u32 [#allocation10], 4
      %s78 = int_to_ptr.vmem [resolvable:$true] %s77
      %80 = dma.hbm_to_vmem [thread:$0]  %s76, 32, %s78, [#allocation9]
    $region21: #{tpu_custom_call.1} parent=1 // pred_fallthru
      _
    // Predicated region
    $region22: #{tpu_custom_call.1} parent=1 // pred_check
      _
    $region23: #{tpu_custom_call.1} parent=1 // pred_check_branch
      %82 = sbr.rel (0) target = $region25
    $region24: #{tpu_custom_call.1} parent=1 // pred_region
      _
    $region25: #{tpu_custom_call.1} parent=1 // pred_fallthru
      _
    // Predicated region
    $region26: #{tpu_custom_call.1} parent=1 // pred_check
      _
    $region27: #{tpu_custom_call.1} parent=1 // pred_check_branch
      %84 = sbr.rel (0) target = $region29
    $region28: #{tpu_custom_call.1} parent=1 // pred_region
      %86 = vsyncadd [#allocation12], 0
      %s88 = sshll.u32 %s6, 4
      %s89 = int_to_ptr.hbm [resolvable:$true] %s88
      %s90 = sshll.u32 [#allocation11], 4
      %s91 = int_to_ptr.vmem [resolvable:$true] %s90
      %93 = dma.hbm_to_vmem [thread:$0]  %s89, 16, %s91, [#allocation12]
    $region29: #{tpu_custom_call.1} parent=1 // pred_fallthru
      _
    // Predicated region
    $region30: #{tpu_custom_call.1} parent=1 // pred_check
      _
    $region31: #{tpu_custom_call.1} parent=1 // pred_check_branch
      %95 = sbr.rel (0) target = $region33
    $region32: #{tpu_custom_call.1} parent=1 // pred_region
      %97 = vsyncadd [#allocation12], 0
      %s98 = sshll.u32 %s7, 4
      %s99 = int_to_ptr.hbm [resolvable:$true] %s98
      %s100 = sshll.u32 [#allocation13], 4
      %s101 = int_to_ptr.vmem [resolvable:$true] %s100
      %106 = dma.hbm_to_vmem [thread:$0]  %s99, 1024, %s101, [#allocation12], 128, 128, 8
    $region33: #{tpu_custom_call.1} parent=1 // pred_fallthru
      _
    // Predicated region
    $region34: #{tpu_custom_call.1} parent=1 // pred_check
      _
    $region35: #{tpu_custom_call.1} parent=1 // pred_check_branch
      %108 = sbr.rel (0) target = $region37
    $region36: #{tpu_custom_call.1} parent=1 // pred_region
      %110 = vsyncadd [#allocation15], 0
      %s112 = sshll.u32 %s8, 4
      %s113 = int_to_ptr.hbm [resolvable:$true] %s112
      %s114 = sshll.u32 [#allocation14], 4
      %s115 = int_to_ptr.vmem [resolvable:$true] %s114
      %117 = dma.hbm_to_vmem [thread:$0]  %s113, 32, %s115, [#allocation15]
    $region37: #{tpu_custom_call.1} parent=1 // pred_fallthru
      _
    // Predicated region
    $region38: #{tpu_custom_call.1} parent=1 // pred_check
      _
    $region39: #{tpu_custom_call.1} parent=1 // pred_check_branch
      %119 = sbr.rel (0) target = $region41
    $region40: #{tpu_custom_call.1} parent=1 // pred_region
      %121 = dma.done [#allocation3], 1024
    $region41: #{tpu_custom_call.1} parent=1 // pred_fallthru
      _
    // Predicated region
    $region42: #{tpu_custom_call.1} parent=1 // pred_check
      _
    $region43: #{tpu_custom_call.1} parent=1 // pred_check_branch
      %123 = sbr.rel (0) target = $region45
    $region44: #{tpu_custom_call.1} parent=1 // pred_region
      %125 = dma.done [#allocation6], 65536
    $region45: #{tpu_custom_call.1} parent=1 // pred_fallthru
      _
    // Predicated region
    $region46: #{tpu_custom_call.1} parent=1 // pred_check
      _
    $region47: #{tpu_custom_call.1} parent=1 // pred_check_branch
      %127 = sbr.rel (0) target = $region49
    $region48: #{tpu_custom_call.1} parent=1 // pred_region
      %129 = dma.done [#allocation6], 128
    $region49: #{tpu_custom_call.1} parent=1 // pred_fallthru
      _
    // Predicated region
    $region50: #{tpu_custom_call.1} parent=1 // pred_check
      _
    $region51: #{tpu_custom_call.1} parent=1 // pred_check_branch
      %131 = sbr.rel (0) target = $region53
    $region52: #{tpu_custom_call.1} parent=1 // pred_region
      %133 = dma.done [#allocation9], 16384
    $region53: #{tpu_custom_call.1} parent=1 // pred_fallthru
      _
    // Predicated region
    $region54: #{tpu_custom_call.1} parent=1 // pred_check
      _
    $region55: #{tpu_custom_call.1} parent=1 // pred_check_branch
      %135 = sbr.rel (0) target = $region57
    $region56: #{tpu_custom_call.1} parent=1 // pred_region
      %137 = dma.done [#allocation9], 32
    $region57: #{tpu_custom_call.1} parent=1 // pred_fallthru
      _
    // Predicated region
    $region58: #{tpu_custom_call.1} parent=1 // pred_check
      _
    $region59: #{tpu_custom_call.1} parent=1 // pred_check_branch
      %139 = sbr.rel (0) target = $region61
    $region60: #{tpu_custom_call.1} parent=1 // pred_region
      %141 = dma.done [#allocation12], 16
    $region61: #{tpu_custom_call.1} parent=1 // pred_fallthru
      _
    // Predicated region
    $region62: #{tpu_custom_call.1} parent=1 // pred_check
      _
    $region63: #{tpu_custom_call.1} parent=1 // pred_check_branch
      %143 = sbr.rel (0) target = $region65
    $region64: #{tpu_custom_call.1} parent=1 // pred_region
      %145 = dma.done [#allocation12], 1024
    $region65: #{tpu_custom_call.1} parent=1 // pred_fallthru
      _
    // Predicated region
    $region66: #{tpu_custom_call.1} parent=1 // pred_check
      _
    $region67: #{tpu_custom_call.1} parent=1 // pred_check_branch
      %147 = sbr.rel (0) target = $region69
    $region68: #{tpu_custom_call.1} parent=1 // pred_region
      %149 = dma.done [#allocation15], 32
    $region69: #{tpu_custom_call.1} parent=1 // pred_fallthru
      _
    %v151 = vld [vmem:[#allocation2] sm:$0xff]
    %v152 = vld [vmem:[#allocation2 + $0x8] sm:$0xff]
    %v153 = vld [vmem:[#allocation2 + $0x10] sm:$0xff]
    %v154 = vld [vmem:[#allocation2 + $0x18] sm:$0xff]
    %v155 = vld [vmem:[#allocation2 + $0x20] sm:$0xff]
    %v156 = vld [vmem:[#allocation2 + $0x28] sm:$0xff]
    %v157 = vld [vmem:[#allocation2 + $0x30] sm:$0xff]
    %v158 = vld [vmem:[#allocation2 + $0x38] sm:$0xff]
    %v159 = vld [vmem:[#allocation5] sm:$0xff]
    %v160 = vld [vmem:[#allocation5 + $0x8] sm:$0xff]
    %v161 = vld [vmem:[#allocation5 + $0x10] sm:$0xff]
    %v162 = vld [vmem:[#allocation5 + $0x18] sm:$0xff]
    %v163 = vld [vmem:[#allocation5 + $0x20] sm:$0xff]
    %v164 = vld [vmem:[#allocation5 + $0x28] sm:$0xff]
    %v165 = vld [vmem:[#allocation5 + $0x30] sm:$0xff]
    %v166 = vld [vmem:[#allocation5 + $0x38] sm:$0xff]
    %v167 = vld [vmem:[#allocation5 + $0x40] sm:$0xff]
    %v168 = vld [vmem:[#allocation5 + $0x48] sm:$0xff]
    %v169 = vld [vmem:[#allocation5 + $0x50] sm:$0xff]
    %v170 = vld [vmem:[#allocation5 + $0x58] sm:$0xff]
    %v171 = vld [vmem:[#allocation5 + $0x60] sm:$0xff]
    %v172 = vld [vmem:[#allocation5 + $0x68] sm:$0xff]
    %v173 = vld [vmem:[#allocation5 + $0x70] sm:$0xff]
    %v174 = vld [vmem:[#allocation5 + $0x78] sm:$0xff]
    %v175 = vld [vmem:[#allocation5 + $0x80] sm:$0xff]
    %v176 = vld [vmem:[#allocation5 + $0x88] sm:$0xff]
    %v177 = vld [vmem:[#allocation5 + $0x90] sm:$0xff]
    %v178 = vld [vmem:[#allocation5 + $0x98] sm:$0xff]
    %v179 = vld [vmem:[#allocation5 + $0xa0] sm:$0xff]
    %v180 = vld [vmem:[#allocation5 + $0xa8] sm:$0xff]
    %v181 = vld [vmem:[#allocation5 + $0xb0] sm:$0xff]
    %v182 = vld [vmem:[#allocation5 + $0xb8] sm:$0xff]
    %v183 = vld [vmem:[#allocation5 + $0xc0] sm:$0xff]
    %v184 = vld [vmem:[#allocation5 + $0xc8] sm:$0xff]
    %v185 = vld [vmem:[#allocation5 + $0xd0] sm:$0xff]
    %v186 = vld [vmem:[#allocation5 + $0xd8] sm:$0xff]
    %v187 = vld [vmem:[#allocation5 + $0xe0] sm:$0xff]
    %v188 = vld [vmem:[#allocation5 + $0xe8] sm:$0xff]
    %v189 = vld [vmem:[#allocation5 + $0xf0] sm:$0xff]
    %v190 = vld [vmem:[#allocation5 + $0xf8] sm:$0xff]
    %v191 = vld [vmem:[#allocation5 + $0x100] sm:$0xff]
    %v192 = vld [vmem:[#allocation5 + $0x108] sm:$0xff]
    %v193 = vld [vmem:[#allocation5 + $0x110] sm:$0xff]
    %v194 = vld [vmem:[#allocation5 + $0x118] sm:$0xff]
    %v195 = vld [vmem:[#allocation5 + $0x120] sm:$0xff]
    %v196 = vld [vmem:[#allocation5 + $0x128] sm:$0xff]
    %v197 = vld [vmem:[#allocation5 + $0x130] sm:$0xff]
    %v198 = vld [vmem:[#allocation5 + $0x138] sm:$0xff]
    %v199 = vld [vmem:[#allocation5 + $0x140] sm:$0xff]
    %v200 = vld [vmem:[#allocation5 + $0x148] sm:$0xff]
    %v201 = vld [vmem:[#allocation5 + $0x150] sm:$0xff]
    %v202 = vld [vmem:[#allocation5 + $0x158] sm:$0xff]
    %v203 = vld [vmem:[#allocation5 + $0x160] sm:$0xff]
    %v204 = vld [vmem:[#allocation5 + $0x168] sm:$0xff]
    %v205 = vld [vmem:[#allocation5 + $0x170] sm:$0xff]
    %v206 = vld [vmem:[#allocation5 + $0x178] sm:$0xff]
    %v207 = vld [vmem:[#allocation5 + $0x180] sm:$0xff]
    %v208 = vld [vmem:[#allocation5 + $0x188] sm:$0xff]
    %v209 = vld [vmem:[#allocation5 + $0x190] sm:$0xff]
    %v210 = vld [vmem:[#allocation5 + $0x198] sm:$0xff]
    %v211 = vld [vmem:[#allocation5 + $0x1a0] sm:$0xff]
    %v212 = vld [vmem:[#allocation5 + $0x1a8] sm:$0xff]
    %v213 = vld [vmem:[#allocation5 + $0x1b0] sm:$0xff]
    %v214 = vld [vmem:[#allocation5 + $0x1b8] sm:$0xff]
    %v215 = vld [vmem:[#allocation5 + $0x1c0] sm:$0xff]
    %v216 = vld [vmem:[#allocation5 + $0x1c8] sm:$0xff]
    %v217 = vld [vmem:[#allocation5 + $0x1d0] sm:$0xff]
    %v218 = vld [vmem:[#allocation5 + $0x1d8] sm:$0xff]
    %v219 = vld [vmem:[#allocation5 + $0x1e0] sm:$0xff]
    %v220 = vld [vmem:[#allocation5 + $0x1e8] sm:$0xff]
    %v221 = vld [vmem:[#allocation5 + $0x1f0] sm:$0xff]
    %v222 = vld [vmem:[#allocation5 + $0x1f8] sm:$0xff]
    %v223 = vld [vmem:[#allocation5 + $0x200] sm:$0xff]
    %v224 = vld [vmem:[#allocation5 + $0x208] sm:$0xff]
    %v225 = vld [vmem:[#allocation5 + $0x210] sm:$0xff]
    %v226 = vld [vmem:[#allocation5 + $0x218] sm:$0xff]
    %v227 = vld [vmem:[#allocation5 + $0x220] sm:$0xff]
    %v228 = vld [vmem:[#allocation5 + $0x228] sm:$0xff]
    %v229 = vld [vmem:[#allocation5 + $0x230] sm:$0xff]
    %v230 = vld [vmem:[#allocation5 + $0x238] sm:$0xff]
    %v231 = vld [vmem:[#allocation5 + $0x240] sm:$0xff]
    %v232 = vld [vmem:[#allocation5 + $0x248] sm:$0xff]
    %v233 = vld [vmem:[#allocation5 + $0x250] sm:$0xff]
    %v234 = vld [vmem:[#allocation5 + $0x258] sm:$0xff]
    %v235 = vld [vmem:[#allocation5 + $0x260] sm:$0xff]
    %v236 = vld [vmem:[#allocation5 + $0x268] sm:$0xff]
    %v237 = vld [vmem:[#allocation5 + $0x270] sm:$0xff]
    %v238 = vld [vmem:[#allocation5 + $0x278] sm:$0xff]
    %v239 = vld [vmem:[#allocation5 + $0x280] sm:$0xff]
    %v240 = vld [vmem:[#allocation5 + $0x288] sm:$0xff]
    %v241 = vld [vmem:[#allocation5 + $0x290] sm:$0xff]
    %v242 = vld [vmem:[#allocation5 + $0x298] sm:$0xff]
    %v243 = vld [vmem:[#allocation5 + $0x2a0] sm:$0xff]
    %v244 = vld [vmem:[#allocation5 + $0x2a8] sm:$0xff]
    %v245 = vld [vmem:[#allocation5 + $0x2b0] sm:$0xff]
    %v246 = vld [vmem:[#allocation5 + $0x2b8] sm:$0xff]
    %v247 = vld [vmem:[#allocation5 + $0x2c0] sm:$0xff]
    %v248 = vld [vmem:[#allocation5 + $0x2c8] sm:$0xff]
    %v249 = vld [vmem:[#allocation5 + $0x2d0] sm:$0xff]
    %v250 = vld [vmem:[#allocation5 + $0x2d8] sm:$0xff]
    %v251 = vld [vmem:[#allocation5 + $0x2e0] sm:$0xff]
    %v252 = vld [vmem:[#allocation5 + $0x2e8] sm:$0xff]
    %v253 = vld [vmem:[#allocation5 + $0x2f0] sm:$0xff]
    %v254 = vld [vmem:[#allocation5 + $0x2f8] sm:$0xff]
    %v255 = vld [vmem:[#allocation5 + $0x300] sm:$0xff]
    %v256 = vld [vmem:[#allocation5 + $0x308] sm:$0xff]
    %v257 = vld [vmem:[#allocation5 + $0x310] sm:$0xff]
    %v258 = vld [vmem:[#allocation5 + $0x318] sm:$0xff]
    %v259 = vld [vmem:[#allocation5 + $0x320] sm:$0xff]
    %v260 = vld [vmem:[#allocation5 + $0x328] sm:$0xff]
    %v261 = vld [vmem:[#allocation5 + $0x330] sm:$0xff]
    %v262 = vld [vmem:[#allocation5 + $0x338] sm:$0xff]
    %v263 = vld [vmem:[#allocation5 + $0x340] sm:$0xff]
    %v264 = vld [vmem:[#allocation5 + $0x348] sm:$0xff]
    %v265 = vld [vmem:[#allocation5 + $0x350] sm:$0xff]
    %v266 = vld [vmem:[#allocation5 + $0x358] sm:$0xff]
    %v267 = vld [vmem:[#allocation5 + $0x360] sm:$0xff]
    %v268 = vld [vmem:[#allocation5 + $0x368] sm:$0xff]
    %v269 = vld [vmem:[#allocation5 + $0x370] sm:$0xff]
    %v270 = vld [vmem:[#allocation5 + $0x378] sm:$0xff]
    %v271 = vld [vmem:[#allocation5 + $0x380] sm:$0xff]
    %v272 = vld [vmem:[#allocation5 + $0x388] sm:$0xff]
    %v273 = vld [vmem:[#allocation5 + $0x390] sm:$0xff]
    %v274 = vld [vmem:[#allocation5 + $0x398] sm:$0xff]
    %v275 = vld [vmem:[#allocation5 + $0x3a0] sm:$0xff]
    %v276 = vld [vmem:[#allocation5 + $0x3a8] sm:$0xff]
    %v277 = vld [vmem:[#allocation5 + $0x3b0] sm:$0xff]
    %v278 = vld [vmem:[#allocation5 + $0x3b8] sm:$0xff]
    %v279 = vld [vmem:[#allocation5 + $0x3c0] sm:$0xff]
    %v280 = vld [vmem:[#allocation5 + $0x3c8] sm:$0xff]
    %v281 = vld [vmem:[#allocation5 + $0x3d0] sm:$0xff]
    %v282 = vld [vmem:[#allocation5 + $0x3d8] sm:$0xff]
    %v283 = vld [vmem:[#allocation5 + $0x3e0] sm:$0xff]
    %v284 = vld [vmem:[#allocation5 + $0x3e8] sm:$0xff]
    %v285 = vld [vmem:[#allocation5 + $0x3f0] sm:$0xff]
    %v286 = vld [vmem:[#allocation5 + $0x3f8] sm:$0xff]
    %v287 = vld [vmem:[#allocation5 + $0x400] sm:$0xff]
    %v288 = vld [vmem:[#allocation5 + $0x408] sm:$0xff]
    %v289 = vld [vmem:[#allocation5 + $0x410] sm:$0xff]
    %v290 = vld [vmem:[#allocation5 + $0x418] sm:$0xff]
    %v291 = vld [vmem:[#allocation5 + $0x420] sm:$0xff]
    %v292 = vld [vmem:[#allocation5 + $0x428] sm:$0xff]
    %v293 = vld [vmem:[#allocation5 + $0x430] sm:$0xff]
    %v294 = vld [vmem:[#allocation5 + $0x438] sm:$0xff]
    %v295 = vld [vmem:[#allocation5 + $0x440] sm:$0xff]
    %v296 = vld [vmem:[#allocation5 + $0x448] sm:$0xff]
    %v297 = vld [vmem:[#allocation5 + $0x450] sm:$0xff]
    %v298 = vld [vmem:[#allocation5 + $0x458] sm:$0xff]
    %v299 = vld [vmem:[#allocation5 + $0x460] sm:$0xff]
    %v300 = vld [vmem:[#allocation5 + $0x468] sm:$0xff]
    %v301 = vld [vmem:[#allocation5 + $0x470] sm:$0xff]
    %v302 = vld [vmem:[#allocation5 + $0x478] sm:$0xff]
    %v303 = vld [vmem:[#allocation5 + $0x480] sm:$0xff]
    %v304 = vld [vmem:[#allocation5 + $0x488] sm:$0xff]
    %v305 = vld [vmem:[#allocation5 + $0x490] sm:$0xff]
    %v306 = vld [vmem:[#allocation5 + $0x498] sm:$0xff]
    %v307 = vld [vmem:[#allocation5 + $0x4a0] sm:$0xff]
    %v308 = vld [vmem:[#allocation5 + $0x4a8] sm:$0xff]
    %v309 = vld [vmem:[#allocation5 + $0x4b0] sm:$0xff]
    %v310 = vld [vmem:[#allocation5 + $0x4b8] sm:$0xff]
    %v311 = vld [vmem:[#allocation5 + $0x4c0] sm:$0xff]
    %v312 = vld [vmem:[#allocation5 + $0x4c8] sm:$0xff]
    %v313 = vld [vmem:[#allocation5 + $0x4d0] sm:$0xff]
    %v314 = vld [vmem:[#allocation5 + $0x4d8] sm:$0xff]
    %v315 = vld [vmem:[#allocation5 + $0x4e0] sm:$0xff]
    %v316 = vld [vmem:[#allocation5 + $0x4e8] sm:$0xff]
    %v317 = vld [vmem:[#allocation5 + $0x4f0] sm:$0xff]
    %v318 = vld [vmem:[#allocation5 + $0x4f8] sm:$0xff]
    %v319 = vld [vmem:[#allocation5 + $0x500] sm:$0xff]
    %v320 = vld [vmem:[#allocation5 + $0x508] sm:$0xff]
    %v321 = vld [vmem:[#allocation5 + $0x510] sm:$0xff]
    %v322 = vld [vmem:[#allocation5 + $0x518] sm:$0xff]
    %v323 = vld [vmem:[#allocation5 + $0x520] sm:$0xff]
    %v324 = vld [vmem:[#allocation5 + $0x528] sm:$0xff]
    %v325 = vld [vmem:[#allocation5 + $0x530] sm:$0xff]
    %v326 = vld [vmem:[#allocation5 + $0x538] sm:$0xff]
    %v327 = vld [vmem:[#allocation5 + $0x540] sm:$0xff]
    %v328 = vld [vmem:[#allocation5 + $0x548] sm:$0xff]
    %v329 = vld [vmem:[#allocation5 + $0x550] sm:$0xff]
    %v330 = vld [vmem:[#allocation5 + $0x558] sm:$0xff]
    %v331 = vld [vmem:[#allocation5 + $0x560] sm:$0xff]
    %v332 = vld [vmem:[#allocation5 + $0x568] sm:$0xff]
    %v333 = vld [vmem:[#allocation5 + $0x570] sm:$0xff]
    %v334 = vld [vmem:[#allocation5 + $0x578] sm:$0xff]
    %v335 = vld [vmem:[#allocation5 + $0x580] sm:$0xff]
    %v336 = vld [vmem:[#allocation5 + $0x588] sm:$0xff]
    %v337 = vld [vmem:[#allocation5 + $0x590] sm:$0xff]
    %v338 = vld [vmem:[#allocation5 + $0x598] sm:$0xff]
    %v339 = vld [vmem:[#allocation5 + $0x5a0] sm:$0xff]
    %v340 = vld [vmem:[#allocation5 + $0x5a8] sm:$0xff]
    %v341 = vld [vmem:[#allocation5 + $0x5b0] sm:$0xff]
    %v342 = vld [vmem:[#allocation5 + $0x5b8] sm:$0xff]
    %v343 = vld [vmem:[#allocation5 + $0x5c0] sm:$0xff]
    %v344 = vld [vmem:[#allocation5 + $0x5c8] sm:$0xff]
    %v345 = vld [vmem:[#allocation5 + $0x5d0] sm:$0xff]
    %v346 = vld [vmem:[#allocation5 + $0x5d8] sm:$0xff]
    %v347 = vld [vmem:[#allocation5 + $0x5e0] sm:$0xff]
    %v348 = vld [vmem:[#allocation5 + $0x5e8] sm:$0xff]
    %v349 = vld [vmem:[#allocation5 + $0x5f0] sm:$0xff]
    %v350 = vld [vmem:[#allocation5 + $0x5f8] sm:$0xff]
    %v351 = vld [vmem:[#allocation5 + $0x600] sm:$0xff]
    %v352 = vld [vmem:[#allocation5 + $0x608] sm:$0xff]
    %v353 = vld [vmem:[#allocation5 + $0x610] sm:$0xff]
    %v354 = vld [vmem:[#allocation5 + $0x618] sm:$0xff]
    %v355 = vld [vmem:[#allocation5 + $0x620] sm:$0xff]
    %v356 = vld [vmem:[#allocation5 + $0x628] sm:$0xff]
    %v357 = vld [vmem:[#allocation5 + $0x630] sm:$0xff]
    %v358 = vld [vmem:[#allocation5 + $0x638] sm:$0xff]
    %v359 = vld [vmem:[#allocation5 + $0x640] sm:$0xff]
    %v360 = vld [vmem:[#allocation5 + $0x648] sm:$0xff]
    %v361 = vld [vmem:[#allocation5 + $0x650] sm:$0xff]
    %v362 = vld [vmem:[#allocation5 + $0x658] sm:$0xff]
    %v363 = vld [vmem:[#allocation5 + $0x660] sm:$0xff]
    %v364 = vld [vmem:[#allocation5 + $0x668] sm:$0xff]
    %v365 = vld [vmem:[#allocation5 + $0x670] sm:$0xff]
    %v366 = vld [vmem:[#allocation5 + $0x678] sm:$0xff]
    %v367 = vld [vmem:[#allocation5 + $0x680] sm:$0xff]
    %v368 = vld [vmem:[#allocation5 + $0x688] sm:$0xff]
    %v369 = vld [vmem:[#allocation5 + $0x690] sm:$0xff]
    %v370 = vld [vmem:[#allocation5 + $0x698] sm:$0xff]
    %v371 = vld [vmem:[#allocation5 + $0x6a0] sm:$0xff]
    %v372 = vld [vmem:[#allocation5 + $0x6a8] sm:$0xff]
    %v373 = vld [vmem:[#allocation5 + $0x6b0] sm:$0xff]
    %v374 = vld [vmem:[#allocation5 + $0x6b8] sm:$0xff]
    %v375 = vld [vmem:[#allocation5 + $0x6c0] sm:$0xff]
    %v376 = vld [vmem:[#allocation5 + $0x6c8] sm:$0xff]
    %v377 = vld [vmem:[#allocation5 + $0x6d0] sm:$0xff]
    %v378 = vld [vmem:[#allocation5 + $0x6d8] sm:$0xff]
    %v379 = vld [vmem:[#allocation5 + $0x6e0] sm:$0xff]
    %v380 = vld [vmem:[#allocation5 + $0x6e8] sm:$0xff]
    %v381 = vld [vmem:[#allocation5 + $0x6f0] sm:$0xff]
    %v382 = vld [vmem:[#allocation5 + $0x6f8] sm:$0xff]
    %v383 = vld [vmem:[#allocation5 + $0x700] sm:$0xff]
    %v384 = vld [vmem:[#allocation5 + $0x708] sm:$0xff]
    %v385 = vld [vmem:[#allocation5 + $0x710] sm:$0xff]
    %v386 = vld [vmem:[#allocation5 + $0x718] sm:$0xff]
    %v387 = vld [vmem:[#allocation5 + $0x720] sm:$0xff]
    %v388 = vld [vmem:[#allocation5 + $0x728] sm:$0xff]
    %v389 = vld [vmem:[#allocation5 + $0x730] sm:$0xff]
    %v390 = vld [vmem:[#allocation5 + $0x738] sm:$0xff]
    %v391 = vld [vmem:[#allocation5 + $0x740] sm:$0xff]
    %v392 = vld [vmem:[#allocation5 + $0x748] sm:$0xff]
    %v393 = vld [vmem:[#allocation5 + $0x750] sm:$0xff]
    %v394 = vld [vmem:[#allocation5 + $0x758] sm:$0xff]
    %v395 = vld [vmem:[#allocation5 + $0x760] sm:$0xff]
    %v396 = vld [vmem:[#allocation5 + $0x768] sm:$0xff]
    %v397 = vld [vmem:[#allocation5 + $0x770] sm:$0xff]
    %v398 = vld [vmem:[#allocation5 + $0x778] sm:$0xff]
    %v399 = vld [vmem:[#allocation5 + $0x780] sm:$0xff]
    %v400 = vld [vmem:[#allocation5 + $0x788] sm:$0xff]
    %v401 = vld [vmem:[#allocation5 + $0x790] sm:$0xff]
    %v402 = vld [vmem:[#allocation5 + $0x798] sm:$0xff]
    %v403 = vld [vmem:[#allocation5 + $0x7a0] sm:$0xff]
    %v404 = vld [vmem:[#allocation5 + $0x7a8] sm:$0xff]
    %v405 = vld [vmem:[#allocation5 + $0x7b0] sm:$0xff]
    %v406 = vld [vmem:[#allocation5 + $0x7b8] sm:$0xff]
    %v407 = vld [vmem:[#allocation5 + $0x7c0] sm:$0xff]
    %v408 = vld [vmem:[#allocation5 + $0x7c8] sm:$0xff]
    %v409 = vld [vmem:[#allocation5 + $0x7d0] sm:$0xff]
    %v410 = vld [vmem:[#allocation5 + $0x7d8] sm:$0xff]
    %v411 = vld [vmem:[#allocation5 + $0x7e0] sm:$0xff]
    %v412 = vld [vmem:[#allocation5 + $0x7e8] sm:$0xff]
    %v413 = vld [vmem:[#allocation5 + $0x7f0] sm:$0xff]
    %v414 = vld [vmem:[#allocation5 + $0x7f8] sm:$0xff]
    %v415 = vld [vmem:[#allocation5 + $0x800] sm:$0xff]
    %v416 = vld [vmem:[#allocation5 + $0x808] sm:$0xff]
    %v417 = vld [vmem:[#allocation5 + $0x810] sm:$0xff]
    %v418 = vld [vmem:[#allocation5 + $0x818] sm:$0xff]
    %v419 = vld [vmem:[#allocation5 + $0x820] sm:$0xff]
    %v420 = vld [vmem:[#allocation5 + $0x828] sm:$0xff]
    %v421 = vld [vmem:[#allocation5 + $0x830] sm:$0xff]
    %v422 = vld [vmem:[#allocation5 + $0x838] sm:$0xff]
    %v423 = vld [vmem:[#allocation5 + $0x840] sm:$0xff]
    %v424 = vld [vmem:[#allocation5 + $0x848] sm:$0xff]
    %v425 = vld [vmem:[#allocation5 + $0x850] sm:$0xff]
    %v426 = vld [vmem:[#allocation5 + $0x858] sm:$0xff]
    %v427 = vld [vmem:[#allocation5 + $0x860] sm:$0xff]
    %v428 = vld [vmem:[#allocation5 + $0x868] sm:$0xff]
    %v429 = vld [vmem:[#allocation5 + $0x870] sm:$0xff]
    %v430 = vld [vmem:[#allocation5 + $0x878] sm:$0xff]
    %v431 = vld [vmem:[#allocation5 + $0x880] sm:$0xff]
    %v432 = vld [vmem:[#allocation5 + $0x888] sm:$0xff]
    %v433 = vld [vmem:[#allocation5 + $0x890] sm:$0xff]
    %v434 = vld [vmem:[#allocation5 + $0x898] sm:$0xff]
    %v435 = vld [vmem:[#allocation5 + $0x8a0] sm:$0xff]
    %v436 = vld [vmem:[#allocation5 + $0x8a8] sm:$0xff]
    %v437 = vld [vmem:[#allocation5 + $0x8b0] sm:$0xff]
    %v438 = vld [vmem:[#allocation5 + $0x8b8] sm:$0xff]
    %v439 = vld [vmem:[#allocation5 + $0x8c0] sm:$0xff]
    %v440 = vld [vmem:[#allocation5 + $0x8c8] sm:$0xff]
    %v441 = vld [vmem:[#allocation5 + $0x8d0] sm:$0xff]
    %v442 = vld [vmem:[#allocation5 + $0x8d8] sm:$0xff]
    %v443 = vld [vmem:[#allocation5 + $0x8e0] sm:$0xff]
    %v444 = vld [vmem:[#allocation5 + $0x8e8] sm:$0xff]
    %v445 = vld [vmem:[#allocation5 + $0x8f0] sm:$0xff]
    %v446 = vld [vmem:[#allocation5 + $0x8f8] sm:$0xff]
    %v447 = vld [vmem:[#allocation5 + $0x900] sm:$0xff]
    %v448 = vld [vmem:[#allocation5 + $0x908] sm:$0xff]
    %v449 = vld [vmem:[#allocation5 + $0x910] sm:$0xff]
    %v450 = vld [vmem:[#allocation5 + $0x918] sm:$0xff]
    %v451 = vld [vmem:[#allocation5 + $0x920] sm:$0xff]
    %v452 = vld [vmem:[#allocation5 + $0x928] sm:$0xff]
    %v453 = vld [vmem:[#allocation5 + $0x930] sm:$0xff]
    %v454 = vld [vmem:[#allocation5 + $0x938] sm:$0xff]
    %v455 = vld [vmem:[#allocation5 + $0x940] sm:$0xff]
    %v456 = vld [vmem:[#allocation5 + $0x948] sm:$0xff]
    %v457 = vld [vmem:[#allocation5 + $0x950] sm:$0xff]
    %v458 = vld [vmem:[#allocation5 + $0x958] sm:$0xff]
    %v459 = vld [vmem:[#allocation5 + $0x960] sm:$0xff]
    %v460 = vld [vmem:[#allocation5 + $0x968] sm:$0xff]
    %v461 = vld [vmem:[#allocation5 + $0x970] sm:$0xff]
    %v462 = vld [vmem:[#allocation5 + $0x978] sm:$0xff]
    %v463 = vld [vmem:[#allocation5 + $0x980] sm:$0xff]
    %v464 = vld [vmem:[#allocation5 + $0x988] sm:$0xff]
    %v465 = vld [vmem:[#allocation5 + $0x990] sm:$0xff]
    %v466 = vld [vmem:[#allocation5 + $0x998] sm:$0xff]
    %v467 = vld [vmem:[#allocation5 + $0x9a0] sm:$0xff]
    %v468 = vld [vmem:[#allocation5 + $0x9a8] sm:$0xff]
    %v469 = vld [vmem:[#allocation5 + $0x9b0] sm:$0xff]
    %v470 = vld [vmem:[#allocation5 + $0x9b8] sm:$0xff]
    %v471 = vld [vmem:[#allocation5 + $0x9c0] sm:$0xff]
    %v472 = vld [vmem:[#allocation5 + $0x9c8] sm:$0xff]
    %v473 = vld [vmem:[#allocation5 + $0x9d0] sm:$0xff]
    %v474 = vld [vmem:[#allocation5 + $0x9d8] sm:$0xff]
    %v475 = vld [vmem:[#allocation5 + $0x9e0] sm:$0xff]
    %v476 = vld [vmem:[#allocation5 + $0x9e8] sm:$0xff]
    %v477 = vld [vmem:[#allocation5 + $0x9f0] sm:$0xff]
    %v478 = vld [vmem:[#allocation5 + $0x9f8] sm:$0xff]
    %v479 = vld [vmem:[#allocation5 + $0xa00] sm:$0xff]
    %v480 = vld [vmem:[#allocation5 + $0xa08] sm:$0xff]
    %v481 = vld [vmem:[#allocation5 + $0xa10] sm:$0xff]
    %v482 = vld [vmem:[#allocation5 + $0xa18] sm:$0xff]
    %v483 = vld [vmem:[#allocation5 + $0xa20] sm:$0xff]
    %v484 = vld [vmem:[#allocation5 + $0xa28] sm:$0xff]
    %v485 = vld [vmem:[#allocation5 + $0xa30] sm:$0xff]
    %v486 = vld [vmem:[#allocation5 + $0xa38] sm:$0xff]
    %v487 = vld [vmem:[#allocation5 + $0xa40] sm:$0xff]
    %v488 = vld [vmem:[#allocation5 + $0xa48] sm:$0xff]
    %v489 = vld [vmem:[#allocation5 + $0xa50] sm:$0xff]
    %v490 = vld [vmem:[#allocation5 + $0xa58] sm:$0xff]
    %v491 = vld [vmem:[#allocation5 + $0xa60] sm:$0xff]
    %v492 = vld [vmem:[#allocation5 + $0xa68] sm:$0xff]
    %v493 = vld [vmem:[#allocation5 + $0xa70] sm:$0xff]
    %v494 = vld [vmem:[#allocation5 + $0xa78] sm:$0xff]
    %v495 = vld [vmem:[#allocation5 + $0xa80] sm:$0xff]
    %v496 = vld [vmem:[#allocation5 + $0xa88] sm:$0xff]
    %v497 = vld [vmem:[#allocation5 + $0xa90] sm:$0xff]
    %v498 = vld [vmem:[#allocation5 + $0xa98] sm:$0xff]
    %v499 = vld [vmem:[#allocation5 + $0xaa0] sm:$0xff]
    %v500 = vld [vmem:[#allocation5 + $0xaa8] sm:$0xff]
    %v501 = vld [vmem:[#allocation5 + $0xab0] sm:$0xff]
    %v502 = vld [vmem:[#allocation5 + $0xab8] sm:$0xff]
    %v503 = vld [vmem:[#allocation5 + $0xac0] sm:$0xff]
    %v504 = vld [vmem:[#allocation5 + $0xac8] sm:$0xff]
    %v505 = vld [vmem:[#allocation5 + $0xad0] sm:$0xff]
    %v506 = vld [vmem:[#allocation5 + $0xad8] sm:$0xff]
    %v507 = vld [vmem:[#allocation5 + $0xae0] sm:$0xff]
    %v508 = vld [vmem:[#allocation5 + $0xae8] sm:$0xff]
    %v509 = vld [vmem:[#allocation5 + $0xaf0] sm:$0xff]
    %v510 = vld [vmem:[#allocation5 + $0xaf8] sm:$0xff]
    %v511 = vld [vmem:[#allocation5 + $0xb00] sm:$0xff]
    %v512 = vld [vmem:[#allocation5 + $0xb08] sm:$0xff]
    %v513 = vld [vmem:[#allocation5 + $0xb10] sm:$0xff]
    %v514 = vld [vmem:[#allocation5 + $0xb18] sm:$0xff]
    %v515 = vld [vmem:[#allocation5 + $0xb20] sm:$0xff]
    %v516 = vld [vmem:[#allocation5 + $0xb28] sm:$0xff]
    %v517 = vld [vmem:[#allocation5 + $0xb30] sm:$0xff]
    %v518 = vld [vmem:[#allocation5 + $0xb38] sm:$0xff]
    %v519 = vld [vmem:[#allocation5 + $0xb40] sm:$0xff]
    %v520 = vld [vmem:[#allocation5 + $0xb48] sm:$0xff]
    %v521 = vld [vmem:[#allocation5 + $0xb50] sm:$0xff]
    %v522 = vld [vmem:[#allocation5 + $0xb58] sm:$0xff]
    %v523 = vld [vmem:[#allocation5 + $0xb60] sm:$0xff]
    %v524 = vld [vmem:[#allocation5 + $0xb68] sm:$0xff]
    %v525 = vld [vmem:[#allocation5 + $0xb70] sm:$0xff]
    %v526 = vld [vmem:[#allocation5 + $0xb78] sm:$0xff]
    %v527 = vld [vmem:[#allocation5 + $0xb80] sm:$0xff]
    %v528 = vld [vmem:[#allocation5 + $0xb88] sm:$0xff]
    %v529 = vld [vmem:[#allocation5 + $0xb90] sm:$0xff]
    %v530 = vld [vmem:[#allocation5 + $0xb98] sm:$0xff]
    %v531 = vld [vmem:[#allocation5 + $0xba0] sm:$0xff]
    %v532 = vld [vmem:[#allocation5 + $0xba8] sm:$0xff]
    %v533 = vld [vmem:[#allocation5 + $0xbb0] sm:$0xff]
    %v534 = vld [vmem:[#allocation5 + $0xbb8] sm:$0xff]
    %v535 = vld [vmem:[#allocation5 + $0xbc0] sm:$0xff]
    %v536 = vld [vmem:[#allocation5 + $0xbc8] sm:$0xff]
    %v537 = vld [vmem:[#allocation5 + $0xbd0] sm:$0xff]
    %v538 = vld [vmem:[#allocation5 + $0xbd8] sm:$0xff]
    %v539 = vld [vmem:[#allocation5 + $0xbe0] sm:$0xff]
    %v540 = vld [vmem:[#allocation5 + $0xbe8] sm:$0xff]
    %v541 = vld [vmem:[#allocation5 + $0xbf0] sm:$0xff]
    %v542 = vld [vmem:[#allocation5 + $0xbf8] sm:$0xff]
    %v543 = vld [vmem:[#allocation5 + $0xc00] sm:$0xff]
    %v544 = vld [vmem:[#allocation5 + $0xc08] sm:$0xff]
    %v545 = vld [vmem:[#allocation5 + $0xc10] sm:$0xff]
    %v546 = vld [vmem:[#allocation5 + $0xc18] sm:$0xff]
    %v547 = vld [vmem:[#allocation5 + $0xc20] sm:$0xff]
    %v548 = vld [vmem:[#allocation5 + $0xc28] sm:$0xff]
    %v549 = vld [vmem:[#allocation5 + $0xc30] sm:$0xff]
    %v550 = vld [vmem:[#allocation5 + $0xc38] sm:$0xff]
    %v551 = vld [vmem:[#allocation5 + $0xc40] sm:$0xff]
    %v552 = vld [vmem:[#allocation5 + $0xc48] sm:$0xff]
    %v553 = vld [vmem:[#allocation5 + $0xc50] sm:$0xff]
    %v554 = vld [vmem:[#allocation5 + $0xc58] sm:$0xff]
    %v555 = vld [vmem:[#allocation5 + $0xc60] sm:$0xff]
    %v556 = vld [vmem:[#allocation5 + $0xc68] sm:$0xff]
    %v557 = vld [vmem:[#allocation5 + $0xc70] sm:$0xff]
    %v558 = vld [vmem:[#allocation5 + $0xc78] sm:$0xff]
    %v559 = vld [vmem:[#allocation5 + $0xc80] sm:$0xff]
    %v560 = vld [vmem:[#allocation5 + $0xc88] sm:$0xff]
    %v561 = vld [vmem:[#allocation5 + $0xc90] sm:$0xff]
    %v562 = vld [vmem:[#allocation5 + $0xc98] sm:$0xff]
    %v563 = vld [vmem:[#allocation5 + $0xca0] sm:$0xff]
    %v564 = vld [vmem:[#allocation5 + $0xca8] sm:$0xff]
    %v565 = vld [vmem:[#allocation5 + $0xcb0] sm:$0xff]
    %v566 = vld [vmem:[#allocation5 + $0xcb8] sm:$0xff]
    %v567 = vld [vmem:[#allocation5 + $0xcc0] sm:$0xff]
    %v568 = vld [vmem:[#allocation5 + $0xcc8] sm:$0xff]
    %v569 = vld [vmem:[#allocation5 + $0xcd0] sm:$0xff]
    %v570 = vld [vmem:[#allocation5 + $0xcd8] sm:$0xff]
    %v571 = vld [vmem:[#allocation5 + $0xce0] sm:$0xff]
    %v572 = vld [vmem:[#allocation5 + $0xce8] sm:$0xff]
    %v573 = vld [vmem:[#allocation5 + $0xcf0] sm:$0xff]
    %v574 = vld [vmem:[#allocation5 + $0xcf8] sm:$0xff]
    %v575 = vld [vmem:[#allocation5 + $0xd00] sm:$0xff]
    %v576 = vld [vmem:[#allocation5 + $0xd08] sm:$0xff]
    %v577 = vld [vmem:[#allocation5 + $0xd10] sm:$0xff]
    %v578 = vld [vmem:[#allocation5 + $0xd18] sm:$0xff]
    %v579 = vld [vmem:[#allocation5 + $0xd20] sm:$0xff]
    %v580 = vld [vmem:[#allocation5 + $0xd28] sm:$0xff]
    %v581 = vld [vmem:[#allocation5 + $0xd30] sm:$0xff]
    %v582 = vld [vmem:[#allocation5 + $0xd38] sm:$0xff]
    %v583 = vld [vmem:[#allocation5 + $0xd40] sm:$0xff]
    %v584 = vld [vmem:[#allocation5 + $0xd48] sm:$0xff]
    %v585 = vld [vmem:[#allocation5 + $0xd50] sm:$0xff]
    %v586 = vld [vmem:[#allocation5 + $0xd58] sm:$0xff]
    %v587 = vld [vmem:[#allocation5 + $0xd60] sm:$0xff]
    %v588 = vld [vmem:[#allocation5 + $0xd68] sm:$0xff]
    %v589 = vld [vmem:[#allocation5 + $0xd70] sm:$0xff]
    %v590 = vld [vmem:[#allocation5 + $0xd78] sm:$0xff]
    %v591 = vld [vmem:[#allocation5 + $0xd80] sm:$0xff]
    %v592 = vld [vmem:[#allocation5 + $0xd88] sm:$0xff]
    %v593 = vld [vmem:[#allocation5 + $0xd90] sm:$0xff]
    %v594 = vld [vmem:[#allocation5 + $0xd98] sm:$0xff]
    %v595 = vld [vmem:[#allocation5 + $0xda0] sm:$0xff]
    %v596 = vld [vmem:[#allocation5 + $0xda8] sm:$0xff]
    %v597 = vld [vmem:[#allocation5 + $0xdb0] sm:$0xff]
    %v598 = vld [vmem:[#allocation5 + $0xdb8] sm:$0xff]
    %v599 = vld [vmem:[#allocation5 + $0xdc0] sm:$0xff]
    %v600 = vld [vmem:[#allocation5 + $0xdc8] sm:$0xff]
    %v601 = vld [vmem:[#allocation5 + $0xdd0] sm:$0xff]
    %v602 = vld [vmem:[#allocation5 + $0xdd8] sm:$0xff]
    %v603 = vld [vmem:[#allocation5 + $0xde0] sm:$0xff]
    %v604 = vld [vmem:[#allocation5 + $0xde8] sm:$0xff]
    %v605 = vld [vmem:[#allocation5 + $0xdf0] sm:$0xff]
    %v606 = vld [vmem:[#allocation5 + $0xdf8] sm:$0xff]
    %v607 = vld [vmem:[#allocation5 + $0xe00] sm:$0xff]
    %v608 = vld [vmem:[#allocation5 + $0xe08] sm:$0xff]
    %v609 = vld [vmem:[#allocation5 + $0xe10] sm:$0xff]
    %v610 = vld [vmem:[#allocation5 + $0xe18] sm:$0xff]
    %v611 = vld [vmem:[#allocation5 + $0xe20] sm:$0xff]
    %v612 = vld [vmem:[#allocation5 + $0xe28] sm:$0xff]
    %v613 = vld [vmem:[#allocation5 + $0xe30] sm:$0xff]
    %v614 = vld [vmem:[#allocation5 + $0xe38] sm:$0xff]
    %v615 = vld [vmem:[#allocation5 + $0xe40] sm:$0xff]
    %v616 = vld [vmem:[#allocation5 + $0xe48] sm:$0xff]
    %v617 = vld [vmem:[#allocation5 + $0xe50] sm:$0xff]
    %v618 = vld [vmem:[#allocation5 + $0xe58] sm:$0xff]
    %v619 = vld [vmem:[#allocation5 + $0xe60] sm:$0xff]
    %v620 = vld [vmem:[#allocation5 + $0xe68] sm:$0xff]
    %v621 = vld [vmem:[#allocation5 + $0xe70] sm:$0xff]
    %v622 = vld [vmem:[#allocation5 + $0xe78] sm:$0xff]
    %v623 = vld [vmem:[#allocation5 + $0xe80] sm:$0xff]
    %v624 = vld [vmem:[#allocation5 + $0xe88] sm:$0xff]
    %v625 = vld [vmem:[#allocation5 + $0xe90] sm:$0xff]
    %v626 = vld [vmem:[#allocation5 + $0xe98] sm:$0xff]
    %v627 = vld [vmem:[#allocation5 + $0xea0] sm:$0xff]
    %v628 = vld [vmem:[#allocation5 + $0xea8] sm:$0xff]
    %v629 = vld [vmem:[#allocation5 + $0xeb0] sm:$0xff]
    %v630 = vld [vmem:[#allocation5 + $0xeb8] sm:$0xff]
    %v631 = vld [vmem:[#allocation5 + $0xec0] sm:$0xff]
    %v632 = vld [vmem:[#allocation5 + $0xec8] sm:$0xff]
    %v633 = vld [vmem:[#allocation5 + $0xed0] sm:$0xff]
    %v634 = vld [vmem:[#allocation5 + $0xed8] sm:$0xff]
    %v635 = vld [vmem:[#allocation5 + $0xee0] sm:$0xff]
    %v636 = vld [vmem:[#allocation5 + $0xee8] sm:$0xff]
    %v637 = vld [vmem:[#allocation5 + $0xef0] sm:$0xff]
    %v638 = vld [vmem:[#allocation5 + $0xef8] sm:$0xff]
    %v639 = vld [vmem:[#allocation5 + $0xf00] sm:$0xff]
    %v640 = vld [vmem:[#allocation5 + $0xf08] sm:$0xff]
    %v641 = vld [vmem:[#allocation5 + $0xf10] sm:$0xff]
    %v642 = vld [vmem:[#allocation5 + $0xf18] sm:$0xff]
    %v643 = vld [vmem:[#allocation5 + $0xf20] sm:$0xff]
    %v644 = vld [vmem:[#allocation5 + $0xf28] sm:$0xff]
    %v645 = vld [vmem:[#allocation5 + $0xf30] sm:$0xff]
    %v646 = vld [vmem:[#allocation5 + $0xf38] sm:$0xff]
    %v647 = vld [vmem:[#allocation5 + $0xf40] sm:$0xff]
    %v648 = vld [vmem:[#allocation5 + $0xf48] sm:$0xff]
    %v649 = vld [vmem:[#allocation5 + $0xf50] sm:$0xff]
    %v650 = vld [vmem:[#allocation5 + $0xf58] sm:$0xff]
    %v651 = vld [vmem:[#allocation5 + $0xf60] sm:$0xff]
    %v652 = vld [vmem:[#allocation5 + $0xf68] sm:$0xff]
    %v653 = vld [vmem:[#allocation5 + $0xf70] sm:$0xff]
    %v654 = vld [vmem:[#allocation5 + $0xf78] sm:$0xff]
    %v655 = vld [vmem:[#allocation5 + $0xf80] sm:$0xff]
    %v656 = vld [vmem:[#allocation5 + $0xf88] sm:$0xff]
    %v657 = vld [vmem:[#allocation5 + $0xf90] sm:$0xff]
    %v658 = vld [vmem:[#allocation5 + $0xf98] sm:$0xff]
    %v659 = vld [vmem:[#allocation5 + $0xfa0] sm:$0xff]
    %v660 = vld [vmem:[#allocation5 + $0xfa8] sm:$0xff]
    %v661 = vld [vmem:[#allocation5 + $0xfb0] sm:$0xff]
    %v662 = vld [vmem:[#allocation5 + $0xfb8] sm:$0xff]
    %v663 = vld [vmem:[#allocation5 + $0xfc0] sm:$0xff]
    %v664 = vld [vmem:[#allocation5 + $0xfc8] sm:$0xff]
    %v665 = vld [vmem:[#allocation5 + $0xfd0] sm:$0xff]
    %v666 = vld [vmem:[#allocation5 + $0xfd8] sm:$0xff]
    %v667 = vld [vmem:[#allocation5 + $0xfe0] sm:$0xff]
    %v668 = vld [vmem:[#allocation5 + $0xfe8] sm:$0xff]
    %v669 = vld [vmem:[#allocation5 + $0xff0] sm:$0xff]
    %v670 = vld [vmem:[#allocation5 + $0xff8] sm:$0xff]
    %v671 = vld [vmem:[#allocation7] sm:$0xff]
    %v673 = vperm.slane %v671, 0
    %v674 = vperm.slane %v671, 1
    %v675 = vperm.slane %v671, 2
    %v676 = vperm.slane %v671, 3
    %v677 = vperm.slane %v671, 4
    %v678 = vperm.slane %v671, 5
    %v679 = vperm.slane %v671, 6
    %v680 = vperm.slane %v671, 7
    %v697 = vunpack.c.l.b16 %v151
    %v698 = vunpack.c.h.b16 %v151
    %v699 = vunpack.c.l.b16 %v152
    %v700 = vunpack.c.h.b16 %v152
    %v701 = vunpack.c.l.b16 %v153
    %v702 = vunpack.c.h.b16 %v153
    %v703 = vunpack.c.l.b16 %v154
    %v704 = vunpack.c.h.b16 %v154
    %v705 = vunpack.c.l.b16 %v155
    %v706 = vunpack.c.h.b16 %v155
    %v707 = vunpack.c.l.b16 %v156
    %v708 = vunpack.c.h.b16 %v156
    %v709 = vunpack.c.l.b16 %v157
    %v710 = vunpack.c.h.b16 %v157
    %v711 = vunpack.c.l.b16 %v158
    %v712 = vunpack.c.h.b16 %v158
    %v713 = vpack.c.b16 %v705, %v697
    %v714 = vpack.c.b16 %v706, %v698
    %v715 = vpack.c.b16 %v707, %v699
    %v716 = vpack.c.b16 %v708, %v700
    %v717 = vpack.c.b16 %v709, %v701
    %v718 = vpack.c.b16 %v710, %v702
    %v719 = vpack.c.b16 %v711, %v703
    %v720 = vpack.c.b16 %v712, %v704
    %v1241 = vunpack.c.l.b16 %v159
    %v1242 = vunpack.c.h.b16 %v159
    %v1243 = vunpack.c.l.b16 %v160
    %v1244 = vunpack.c.h.b16 %v160
    %v1245 = vunpack.c.l.b16 %v161
    %v1246 = vunpack.c.h.b16 %v161
    %v1247 = vunpack.c.l.b16 %v162
    %v1248 = vunpack.c.h.b16 %v162
    %v1249 = vunpack.c.l.b16 %v163
    %v1250 = vunpack.c.h.b16 %v163
    %v1251 = vunpack.c.l.b16 %v164
    %v1252 = vunpack.c.h.b16 %v164
    %v1253 = vunpack.c.l.b16 %v165
    %v1254 = vunpack.c.h.b16 %v165
    %v1255 = vunpack.c.l.b16 %v166
    %v1256 = vunpack.c.h.b16 %v166
    %v1257 = vunpack.c.l.b16 %v167
    %v1258 = vunpack.c.h.b16 %v167
    %v1259 = vunpack.c.l.b16 %v168
    %v1260 = vunpack.c.h.b16 %v168
    %v1261 = vunpack.c.l.b16 %v169
    %v1262 = vunpack.c.h.b16 %v169
    %v1263 = vunpack.c.l.b16 %v170
    %v1264 = vunpack.c.h.b16 %v170
    %v1265 = vunpack.c.l.b16 %v171
    %v1266 = vunpack.c.h.b16 %v171
    %v1267 = vunpack.c.l.b16 %v172
    %v1268 = vunpack.c.h.b16 %v172
    %v1269 = vunpack.c.l.b16 %v173
    %v1270 = vunpack.c.h.b16 %v173
    %v1271 = vunpack.c.l.b16 %v174
    %v1272 = vunpack.c.h.b16 %v174
    %v1273 = vunpack.c.l.b16 %v175
    %v1274 = vunpack.c.h.b16 %v175
    %v1275 = vunpack.c.l.b16 %v176
    %v1276 = vunpack.c.h.b16 %v176
    %v1277 = vunpack.c.l.b16 %v177
    %v1278 = vunpack.c.h.b16 %v177
    %v1279 = vunpack.c.l.b16 %v178
    %v1280 = vunpack.c.h.b16 %v178
    %v1281 = vunpack.c.l.b16 %v179
    %v1282 = vunpack.c.h.b16 %v179
    %v1283 = vunpack.c.l.b16 %v180
    %v1284 = vunpack.c.h.b16 %v180
    %v1285 = vunpack.c.l.b16 %v181
    %v1286 = vunpack.c.h.b16 %v181
    %v1287 = vunpack.c.l.b16 %v182
    %v1288 = vunpack.c.h.b16 %v182
    %v1289 = vunpack.c.l.b16 %v183
    %v1290 = vunpack.c.h.b16 %v183
    %v1291 = vunpack.c.l.b16 %v184
    %v1292 = vunpack.c.h.b16 %v184
    %v1293 = vunpack.c.l.b16 %v185
    %v1294 = vunpack.c.h.b16 %v185
    %v1295 = vunpack.c.l.b16 %v186
    %v1296 = vunpack.c.h.b16 %v186
    %v1297 = vunpack.c.l.b16 %v187
    %v1298 = vunpack.c.h.b16 %v187
    %v1299 = vunpack.c.l.b16 %v188
    %v1300 = vunpack.c.h.b16 %v188
    %v1301 = vunpack.c.l.b16 %v189
    %v1302 = vunpack.c.h.b16 %v189
    %v1303 = vunpack.c.l.b16 %v190
    %v1304 = vunpack.c.h.b16 %v190
    %v1305 = vunpack.c.l.b16 %v191
    %v1306 = vunpack.c.h.b16 %v191
    %v1307 = vunpack.c.l.b16 %v192
    %v1308 = vunpack.c.h.b16 %v192
    %v1309 = vunpack.c.l.b16 %v193
    %v1310 = vunpack.c.h.b16 %v193
    %v1311 = vunpack.c.l.b16 %v194
    %v1312 = vunpack.c.h.b16 %v194
    %v1313 = vunpack.c.l.b16 %v195
    %v1314 = vunpack.c.h.b16 %v195
    %v1315 = vunpack.c.l.b16 %v196
    %v1316 = vunpack.c.h.b16 %v196
    %v1317 = vunpack.c.l.b16 %v197
    %v1318 = vunpack.c.h.b16 %v197
    %v1319 = vunpack.c.l.b16 %v198
    %v1320 = vunpack.c.h.b16 %v198
    %v1321 = vunpack.c.l.b16 %v199
    %v1322 = vunpack.c.h.b16 %v199
    %v1323 = vunpack.c.l.b16 %v200
    %v1324 = vunpack.c.h.b16 %v200
    %v1325 = vunpack.c.l.b16 %v201
    %v1326 = vunpack.c.h.b16 %v201
    %v1327 = vunpack.c.l.b16 %v202
    %v1328 = vunpack.c.h.b16 %v202
    %v1329 = vunpack.c.l.b16 %v203
    %v1330 = vunpack.c.h.b16 %v203
    %v1331 = vunpack.c.l.b16 %v204
    %v1332 = vunpack.c.h.b16 %v204
    %v1333 = vunpack.c.l.b16 %v205
    %v1334 = vunpack.c.h.b16 %v205
    %v1335 = vunpack.c.l.b16 %v206
    %v1336 = vunpack.c.h.b16 %v206
    %v1337 = vunpack.c.l.b16 %v207
    %v1338 = vunpack.c.h.b16 %v207
    %v1339 = vunpack.c.l.b16 %v208
    %v1340 = vunpack.c.h.b16 %v208
    %v1341 = vunpack.c.l.b16 %v209
    %v1342 = vunpack.c.h.b16 %v209
    %v1343 = vunpack.c.l.b16 %v210
    %v1344 = vunpack.c.h.b16 %v210
    %v1345 = vunpack.c.l.b16 %v211
    %v1346 = vunpack.c.h.b16 %v211
    %v1347 = vunpack.c.l.b16 %v212
    %v1348 = vunpack.c.h.b16 %v212
    %v1349 = vunpack.c.l.b16 %v213
    %v1350 = vunpack.c.h.b16 %v213
    %v1351 = vunpack.c.l.b16 %v214
    %v1352 = vunpack.c.h.b16 %v214
    %v1353 = vunpack.c.l.b16 %v215
    %v1354 = vunpack.c.h.b16 %v215
    %v1355 = vunpack.c.l.b16 %v216
    %v1356 = vunpack.c.h.b16 %v216
    %v1357 = vunpack.c.l.b16 %v217
    %v1358 = vunpack.c.h.b16 %v217
    %v1359 = vunpack.c.l.b16 %v218
    %v1360 = vunpack.c.h.b16 %v218
    %v1361 = vunpack.c.l.b16 %v219
    %v1362 = vunpack.c.h.b16 %v219
    %v1363 = vunpack.c.l.b16 %v220
    %v1364 = vunpack.c.h.b16 %v220
    %v1365 = vunpack.c.l.b16 %v221
    %v1366 = vunpack.c.h.b16 %v221
    %v1367 = vunpack.c.l.b16 %v222
    %v1368 = vunpack.c.h.b16 %v222
    %v1369 = vunpack.c.l.b16 %v223
    %v1370 = vunpack.c.h.b16 %v223
    %v1371 = vunpack.c.l.b16 %v224
    %v1372 = vunpack.c.h.b16 %v224
    %v1373 = vunpack.c.l.b16 %v225
    %v1374 = vunpack.c.h.b16 %v225
    %v1375 = vunpack.c.l.b16 %v226
    %v1376 = vunpack.c.h.b16 %v226
    %v1377 = vunpack.c.l.b16 %v227
    %v1378 = vunpack.c.h.b16 %v227
    %v1379 = vunpack.c.l.b16 %v228
    %v1380 = vunpack.c.h.b16 %v228
    %v1381 = vunpack.c.l.b16 %v229
    %v1382 = vunpack.c.h.b16 %v229
    %v1383 = vunpack.c.l.b16 %v230
    %v1384 = vunpack.c.h.b16 %v230
    %v1385 = vunpack.c.l.b16 %v231
    %v1386 = vunpack.c.h.b16 %v231
    %v1387 = vunpack.c.l.b16 %v232
    %v1388 = vunpack.c.h.b16 %v232
    %v1389 = vunpack.c.l.b16 %v233
    %v1390 = vunpack.c.h.b16 %v233
    %v1391 = vunpack.c.l.b16 %v234
    %v1392 = vunpack.c.h.b16 %v234
    %v1393 = vunpack.c.l.b16 %v235
    %v1394 = vunpack.c.h.b16 %v235
    %v1395 = vunpack.c.l.b16 %v236
    %v1396 = vunpack.c.h.b16 %v236
    %v1397 = vunpack.c.l.b16 %v237
    %v1398 = vunpack.c.h.b16 %v237
    %v1399 = vunpack.c.l.b16 %v238
    %v1400 = vunpack.c.h.b16 %v238
    %v1401 = vunpack.c.l.b16 %v239
    %v1402 = vunpack.c.h.b16 %v239
    %v1403 = vunpack.c.l.b16 %v240
    %v1404 = vunpack.c.h.b16 %v240
    %v1405 = vunpack.c.l.b16 %v241
    %v1406 = vunpack.c.h.b16 %v241
    %v1407 = vunpack.c.l.b16 %v242
    %v1408 = vunpack.c.h.b16 %v242
    %v1409 = vunpack.c.l.b16 %v243
    %v1410 = vunpack.c.h.b16 %v243
    %v1411 = vunpack.c.l.b16 %v244
    %v1412 = vunpack.c.h.b16 %v244
    %v1413 = vunpack.c.l.b16 %v245
    %v1414 = vunpack.c.h.b16 %v245
    %v1415 = vunpack.c.l.b16 %v246
    %v1416 = vunpack.c.h.b16 %v246
    %v1417 = vunpack.c.l.b16 %v247
    %v1418 = vunpack.c.h.b16 %v247
    %v1419 = vunpack.c.l.b16 %v248
    %v1420 = vunpack.c.h.b16 %v248
    %v1421 = vunpack.c.l.b16 %v249
    %v1422 = vunpack.c.h.b16 %v249
    %v1423 = vunpack.c.l.b16 %v250
    %v1424 = vunpack.c.h.b16 %v250
    %v1425 = vunpack.c.l.b16 %v251
    %v1426 = vunpack.c.h.b16 %v251
    %v1427 = vunpack.c.l.b16 %v252
    %v1428 = vunpack.c.h.b16 %v252
    %v1429 = vunpack.c.l.b16 %v253
    %v1430 = vunpack.c.h.b16 %v253
    %v1431 = vunpack.c.l.b16 %v254
    %v1432 = vunpack.c.h.b16 %v254
    %v1433 = vunpack.c.l.b16 %v255
    %v1434 = vunpack.c.h.b16 %v255
    %v1435 = vunpack.c.l.b16 %v256
    %v1436 = vunpack.c.h.b16 %v256
    %v1437 = vunpack.c.l.b16 %v257
    %v1438 = vunpack.c.h.b16 %v257
    %v1439 = vunpack.c.l.b16 %v258
    %v1440 = vunpack.c.h.b16 %v258
    %v1441 = vunpack.c.l.b16 %v259
    %v1442 = vunpack.c.h.b16 %v259
    %v1443 = vunpack.c.l.b16 %v260
    %v1444 = vunpack.c.h.b16 %v260
    %v1445 = vunpack.c.l.b16 %v261
    %v1446 = vunpack.c.h.b16 %v261
    %v1447 = vunpack.c.l.b16 %v262
    %v1448 = vunpack.c.h.b16 %v262
    %v1449 = vunpack.c.l.b16 %v263
    %v1450 = vunpack.c.h.b16 %v263
    %v1451 = vunpack.c.l.b16 %v264
    %v1452 = vunpack.c.h.b16 %v264
    %v1453 = vunpack.c.l.b16 %v265
    %v1454 = vunpack.c.h.b16 %v265
    %v1455 = vunpack.c.l.b16 %v266
    %v1456 = vunpack.c.h.b16 %v266
    %v1457 = vunpack.c.l.b16 %v267
    %v1458 = vunpack.c.h.b16 %v267
    %v1459 = vunpack.c.l.b16 %v268
    %v1460 = vunpack.c.h.b16 %v268
    %v1461 = vunpack.c.l.b16 %v269
    %v1462 = vunpack.c.h.b16 %v269
    %v1463 = vunpack.c.l.b16 %v270
    %v1464 = vunpack.c.h.b16 %v270
    %v1465 = vunpack.c.l.b16 %v271
    %v1466 = vunpack.c.h.b16 %v271
    %v1467 = vunpack.c.l.b16 %v272
    %v1468 = vunpack.c.h.b16 %v272
    %v1469 = vunpack.c.l.b16 %v273
    %v1470 = vunpack.c.h.b16 %v273
    %v1471 = vunpack.c.l.b16 %v274
    %v1472 = vunpack.c.h.b16 %v274
    %v1473 = vunpack.c.l.b16 %v275
    %v1474 = vunpack.c.h.b16 %v275
    %v1475 = vunpack.c.l.b16 %v276
    %v1476 = vunpack.c.h.b16 %v276
    %v1477 = vunpack.c.l.b16 %v277
    %v1478 = vunpack.c.h.b16 %v277
    %v1479 = vunpack.c.l.b16 %v278
    %v1480 = vunpack.c.h.b16 %v278
    %v1481 = vunpack.c.l.b16 %v279
    %v1482 = vunpack.c.h.b16 %v279
    %v1483 = vunpack.c.l.b16 %v280
    %v1484 = vunpack.c.h.b16 %v280
    %v1485 = vunpack.c.l.b16 %v281
    %v1486 = vunpack.c.h.b16 %v281
    %v1487 = vunpack.c.l.b16 %v282
    %v1488 = vunpack.c.h.b16 %v282
    %v1489 = vunpack.c.l.b16 %v283
    %v1490 = vunpack.c.h.b16 %v283
    %v1491 = vunpack.c.l.b16 %v284
    %v1492 = vunpack.c.h.b16 %v284
    %v1493 = vunpack.c.l.b16 %v285
    %v1494 = vunpack.c.h.b16 %v285
    %v1495 = vunpack.c.l.b16 %v286
    %v1496 = vunpack.c.h.b16 %v286
    %v1497 = vunpack.c.l.b16 %v287
    %v1498 = vunpack.c.h.b16 %v287
    %v1499 = vunpack.c.l.b16 %v288
    %v1500 = vunpack.c.h.b16 %v288
    %v1501 = vunpack.c.l.b16 %v289
    %v1502 = vunpack.c.h.b16 %v289
    %v1503 = vunpack.c.l.b16 %v290
    %v1504 = vunpack.c.h.b16 %v290
    %v1505 = vunpack.c.l.b16 %v291
    %v1506 = vunpack.c.h.b16 %v291
    %v1507 = vunpack.c.l.b16 %v292
    %v1508 = vunpack.c.h.b16 %v292
    %v1509 = vunpack.c.l.b16 %v293
    %v1510 = vunpack.c.h.b16 %v293
    %v1511 = vunpack.c.l.b16 %v294
    %v1512 = vunpack.c.h.b16 %v294
    %v1513 = vunpack.c.l.b16 %v295
    %v1514 = vunpack.c.h.b16 %v295
    %v1515 = vunpack.c.l.b16 %v296
    %v1516 = vunpack.c.h.b16 %v296
    %v1517 = vunpack.c.l.b16 %v297
    %v1518 = vunpack.c.h.b16 %v297
    %v1519 = vunpack.c.l.b16 %v298
    %v1520 = vunpack.c.h.b16 %v298
    %v1521 = vunpack.c.l.b16 %v299
    %v1522 = vunpack.c.h.b16 %v299
    %v1523 = vunpack.c.l.b16 %v300
    %v1524 = vunpack.c.h.b16 %v300
    %v1525 = vunpack.c.l.b16 %v301
    %v1526 = vunpack.c.h.b16 %v301
    %v1527 = vunpack.c.l.b16 %v302
    %v1528 = vunpack.c.h.b16 %v302
    %v1529 = vunpack.c.l.b16 %v303
    %v1530 = vunpack.c.h.b16 %v303
    %v1531 = vunpack.c.l.b16 %v304
    %v1532 = vunpack.c.h.b16 %v304
    %v1533 = vunpack.c.l.b16 %v305
    %v1534 = vunpack.c.h.b16 %v305
    %v1535 = vunpack.c.l.b16 %v306
    %v1536 = vunpack.c.h.b16 %v306
    %v1537 = vunpack.c.l.b16 %v307
    %v1538 = vunpack.c.h.b16 %v307
    %v1539 = vunpack.c.l.b16 %v308
    %v1540 = vunpack.c.h.b16 %v308
    %v1541 = vunpack.c.l.b16 %v309
    %v1542 = vunpack.c.h.b16 %v309
    %v1543 = vunpack.c.l.b16 %v310
    %v1544 = vunpack.c.h.b16 %v310
    %v1545 = vunpack.c.l.b16 %v311
    %v1546 = vunpack.c.h.b16 %v311
    %v1547 = vunpack.c.l.b16 %v312
    %v1548 = vunpack.c.h.b16 %v312
    %v1549 = vunpack.c.l.b16 %v313
    %v1550 = vunpack.c.h.b16 %v313
    %v1551 = vunpack.c.l.b16 %v314
    %v1552 = vunpack.c.h.b16 %v314
    %v1553 = vunpack.c.l.b16 %v315
    %v1554 = vunpack.c.h.b16 %v315
    %v1555 = vunpack.c.l.b16 %v316
    %v1556 = vunpack.c.h.b16 %v316
    %v1557 = vunpack.c.l.b16 %v317
    %v1558 = vunpack.c.h.b16 %v317
    %v1559 = vunpack.c.l.b16 %v318
    %v1560 = vunpack.c.h.b16 %v318
    %v1561 = vunpack.c.l.b16 %v319
    %v1562 = vunpack.c.h.b16 %v319
    %v1563 = vunpack.c.l.b16 %v320
    %v1564 = vunpack.c.h.b16 %v320
    %v1565 = vunpack.c.l.b16 %v321
    %v1566 = vunpack.c.h.b16 %v321
    %v1567 = vunpack.c.l.b16 %v322
    %v1568 = vunpack.c.h.b16 %v322
    %v1569 = vunpack.c.l.b16 %v323
    %v1570 = vunpack.c.h.b16 %v323
    %v1571 = vunpack.c.l.b16 %v324
    %v1572 = vunpack.c.h.b16 %v324
    %v1573 = vunpack.c.l.b16 %v325
    %v1574 = vunpack.c.h.b16 %v325
    %v1575 = vunpack.c.l.b16 %v326
    %v1576 = vunpack.c.h.b16 %v326
    %v1577 = vunpack.c.l.b16 %v327
    %v1578 = vunpack.c.h.b16 %v327
    %v1579 = vunpack.c.l.b16 %v328
    %v1580 = vunpack.c.h.b16 %v328
    %v1581 = vunpack.c.l.b16 %v329
    %v1582 = vunpack.c.h.b16 %v329
    %v1583 = vunpack.c.l.b16 %v330
    %v1584 = vunpack.c.h.b16 %v330
    %v1585 = vunpack.c.l.b16 %v331
    %v1586 = vunpack.c.h.b16 %v331
    %v1587 = vunpack.c.l.b16 %v332
    %v1588 = vunpack.c.h.b16 %v332
    %v1589 = vunpack.c.l.b16 %v333
    %v1590 = vunpack.c.h.b16 %v333
    %v1591 = vunpack.c.l.b16 %v334
    %v1592 = vunpack.c.h.b16 %v334
    %v1593 = vunpack.c.l.b16 %v335
    %v1594 = vunpack.c.h.b16 %v335
    %v1595 = vunpack.c.l.b16 %v336
    %v1596 = vunpack.c.h.b16 %v336
    %v1597 = vunpack.c.l.b16 %v337
    %v1598 = vunpack.c.h.b16 %v337
    %v1599 = vunpack.c.l.b16 %v338
    %v1600 = vunpack.c.h.b16 %v338
    %v1601 = vunpack.c.l.b16 %v339
    %v1602 = vunpack.c.h.b16 %v339
    %v1603 = vunpack.c.l.b16 %v340
    %v1604 = vunpack.c.h.b16 %v340
    %v1605 = vunpack.c.l.b16 %v341
    %v1606 = vunpack.c.h.b16 %v341
    %v1607 = vunpack.c.l.b16 %v342
    %v1608 = vunpack.c.h.b16 %v342
    %v1609 = vunpack.c.l.b16 %v343
    %v1610 = vunpack.c.h.b16 %v343
    %v1611 = vunpack.c.l.b16 %v344
    %v1612 = vunpack.c.h.b16 %v344
    %v1613 = vunpack.c.l.b16 %v345
    %v1614 = vunpack.c.h.b16 %v345
    %v1615 = vunpack.c.l.b16 %v346
    %v1616 = vunpack.c.h.b16 %v346
    %v1617 = vunpack.c.l.b16 %v347
    %v1618 = vunpack.c.h.b16 %v347
    %v1619 = vunpack.c.l.b16 %v348
    %v1620 = vunpack.c.h.b16 %v348
    %v1621 = vunpack.c.l.b16 %v349
    %v1622 = vunpack.c.h.b16 %v349
    %v1623 = vunpack.c.l.b16 %v350
    %v1624 = vunpack.c.h.b16 %v350
    %v1625 = vunpack.c.l.b16 %v351
    %v1626 = vunpack.c.h.b16 %v351
    %v1627 = vunpack.c.l.b16 %v352
    %v1628 = vunpack.c.h.b16 %v352
    %v1629 = vunpack.c.l.b16 %v353
    %v1630 = vunpack.c.h.b16 %v353
    %v1631 = vunpack.c.l.b16 %v354
    %v1632 = vunpack.c.h.b16 %v354
    %v1633 = vunpack.c.l.b16 %v355
    %v1634 = vunpack.c.h.b16 %v355
    %v1635 = vunpack.c.l.b16 %v356
    %v1636 = vunpack.c.h.b16 %v356
    %v1637 = vunpack.c.l.b16 %v357
    %v1638 = vunpack.c.h.b16 %v357
    %v1639 = vunpack.c.l.b16 %v358
    %v1640 = vunpack.c.h.b16 %v358
    %v1641 = vunpack.c.l.b16 %v359
    %v1642 = vunpack.c.h.b16 %v359
    %v1643 = vunpack.c.l.b16 %v360
    %v1644 = vunpack.c.h.b16 %v360
    %v1645 = vunpack.c.l.b16 %v361
    %v1646 = vunpack.c.h.b16 %v361
    %v1647 = vunpack.c.l.b16 %v362
    %v1648 = vunpack.c.h.b16 %v362
    %v1649 = vunpack.c.l.b16 %v363
    %v1650 = vunpack.c.h.b16 %v363
    %v1651 = vunpack.c.l.b16 %v364
    %v1652 = vunpack.c.h.b16 %v364
    %v1653 = vunpack.c.l.b16 %v365
    %v1654 = vunpack.c.h.b16 %v365
    %v1655 = vunpack.c.l.b16 %v366
    %v1656 = vunpack.c.h.b16 %v366
    %v1657 = vunpack.c.l.b16 %v367
    %v1658 = vunpack.c.h.b16 %v367
    %v1659 = vunpack.c.l.b16 %v368
    %v1660 = vunpack.c.h.b16 %v368
    %v1661 = vunpack.c.l.b16 %v369
    %v1662 = vunpack.c.h.b16 %v369
    %v1663 = vunpack.c.l.b16 %v370
    %v1664 = vunpack.c.h.b16 %v370
    %v1665 = vunpack.c.l.b16 %v371
    %v1666 = vunpack.c.h.b16 %v371
    %v1667 = vunpack.c.l.b16 %v372
    %v1668 = vunpack.c.h.b16 %v372
    %v1669 = vunpack.c.l.b16 %v373
    %v1670 = vunpack.c.h.b16 %v373
    %v1671 = vunpack.c.l.b16 %v374
    %v1672 = vunpack.c.h.b16 %v374
    %v1673 = vunpack.c.l.b16 %v375
    %v1674 = vunpack.c.h.b16 %v375
    %v1675 = vunpack.c.l.b16 %v376
    %v1676 = vunpack.c.h.b16 %v376
    %v1677 = vunpack.c.l.b16 %v377
    %v1678 = vunpack.c.h.b16 %v377
    %v1679 = vunpack.c.l.b16 %v378
    %v1680 = vunpack.c.h.b16 %v378
    %v1681 = vunpack.c.l.b16 %v379
    %v1682 = vunpack.c.h.b16 %v379
    %v1683 = vunpack.c.l.b16 %v380
    %v1684 = vunpack.c.h.b16 %v380
    %v1685 = vunpack.c.l.b16 %v381
    %v1686 = vunpack.c.h.b16 %v381
    %v1687 = vunpack.c.l.b16 %v382
    %v1688 = vunpack.c.h.b16 %v382
    %v1689 = vunpack.c.l.b16 %v383
    %v1690 = vunpack.c.h.b16 %v383
    %v1691 = vunpack.c.l.b16 %v384
    %v1692 = vunpack.c.h.b16 %v384
    %v1693 = vunpack.c.l.b16 %v385
    %v1694 = vunpack.c.h.b16 %v385
    %v1695 = vunpack.c.l.b16 %v386
    %v1696 = vunpack.c.h.b16 %v386
    %v1697 = vunpack.c.l.b16 %v387
    %v1698 = vunpack.c.h.b16 %v387
    %v1699 = vunpack.c.l.b16 %v388
    %v1700 = vunpack.c.h.b16 %v388
    %v1701 = vunpack.c.l.b16 %v389
    %v1702 = vunpack.c.h.b16 %v389
    %v1703 = vunpack.c.l.b16 %v390
    %v1704 = vunpack.c.h.b16 %v390
    %v1705 = vunpack.c.l.b16 %v391
    %v1706 = vunpack.c.h.b16 %v391
    %v1707 = vunpack.c.l.b16 %v392
    %v1708 = vunpack.c.h.b16 %v392
    %v1709 = vunpack.c.l.b16 %v393
    %v1710 = vunpack.c.h.b16 %v393
    %v1711 = vunpack.c.l.b16 %v394
    %v1712 = vunpack.c.h.b16 %v394
    %v1713 = vunpack.c.l.b16 %v395
    %v1714 = vunpack.c.h.b16 %v395
    %v1715 = vunpack.c.l.b16 %v396
    %v1716 = vunpack.c.h.b16 %v396
    %v1717 = vunpack.c.l.b16 %v397
    %v1718 = vunpack.c.h.b16 %v397
    %v1719 = vunpack.c.l.b16 %v398
    %v1720 = vunpack.c.h.b16 %v398
    %v1721 = vunpack.c.l.b16 %v399
    %v1722 = vunpack.c.h.b16 %v399
    %v1723 = vunpack.c.l.b16 %v400
    %v1724 = vunpack.c.h.b16 %v400
    %v1725 = vunpack.c.l.b16 %v401
    %v1726 = vunpack.c.h.b16 %v401
    %v1727 = vunpack.c.l.b16 %v402
    %v1728 = vunpack.c.h.b16 %v402
    %v1729 = vunpack.c.l.b16 %v403
    %v1730 = vunpack.c.h.b16 %v403
    %v1731 = vunpack.c.l.b16 %v404
    %v1732 = vunpack.c.h.b16 %v404
    %v1733 = vunpack.c.l.b16 %v405
    %v1734 = vunpack.c.h.b16 %v405
    %v1735 = vunpack.c.l.b16 %v406
    %v1736 = vunpack.c.h.b16 %v406
    %v1737 = vunpack.c.l.b16 %v407
    %v1738 = vunpack.c.h.b16 %v407
    %v1739 = vunpack.c.l.b16 %v408
    %v1740 = vunpack.c.h.b16 %v408
    %v1741 = vunpack.c.l.b16 %v409
    %v1742 = vunpack.c.h.b16 %v409
    %v1743 = vunpack.c.l.b16 %v410
    %v1744 = vunpack.c.h.b16 %v410
    %v1745 = vunpack.c.l.b16 %v411
    %v1746 = vunpack.c.h.b16 %v411
    %v1747 = vunpack.c.l.b16 %v412
    %v1748 = vunpack.c.h.b16 %v412
    %v1749 = vunpack.c.l.b16 %v413
    %v1750 = vunpack.c.h.b16 %v413
    %v1751 = vunpack.c.l.b16 %v414
    %v1752 = vunpack.c.h.b16 %v414
    %v1753 = vunpack.c.l.b16 %v415
    %v1754 = vunpack.c.h.b16 %v415
    %v1755 = vunpack.c.l.b16 %v416
    %v1756 = vunpack.c.h.b16 %v416
    %v1757 = vunpack.c.l.b16 %v417
    %v1758 = vunpack.c.h.b16 %v417
    %v1759 = vunpack.c.l.b16 %v418
    %v1760 = vunpack.c.h.b16 %v418
    %v1761 = vunpack.c.l.b16 %v419
    %v1762 = vunpack.c.h.b16 %v419
    %v1763 = vunpack.c.l.b16 %v420
    %v1764 = vunpack.c.h.b16 %v420
    %v1765 = vunpack.c.l.b16 %v421
    %v1766 = vunpack.c.h.b16 %v421
    %v1767 = vunpack.c.l.b16 %v422
    %v1768 = vunpack.c.h.b16 %v422
    %v1769 = vunpack.c.l.b16 %v423
    %v1770 = vunpack.c.h.b16 %v423
    %v1771 = vunpack.c.l.b16 %v424
    %v1772 = vunpack.c.h.b16 %v424
    %v1773 = vunpack.c.l.b16 %v425
    %v1774 = vunpack.c.h.b16 %v425
    %v1775 = vunpack.c.l.b16 %v426
    %v1776 = vunpack.c.h.b16 %v426
    %v1777 = vunpack.c.l.b16 %v427
    %v1778 = vunpack.c.h.b16 %v427
    %v1779 = vunpack.c.l.b16 %v428
    %v1780 = vunpack.c.h.b16 %v428
    %v1781 = vunpack.c.l.b16 %v429
    %v1782 = vunpack.c.h.b16 %v429
    %v1783 = vunpack.c.l.b16 %v430
    %v1784 = vunpack.c.h.b16 %v430
    %v1785 = vunpack.c.l.b16 %v431
    %v1786 = vunpack.c.h.b16 %v431
    %v1787 = vunpack.c.l.b16 %v432
    %v1788 = vunpack.c.h.b16 %v432
    %v1789 = vunpack.c.l.b16 %v433
    %v1790 = vunpack.c.h.b16 %v433
    %v1791 = vunpack.c.l.b16 %v434
    %v1792 = vunpack.c.h.b16 %v434
    %v1793 = vunpack.c.l.b16 %v435
    %v1794 = vunpack.c.h.b16 %v435
    %v1795 = vunpack.c.l.b16 %v436
    %v1796 = vunpack.c.h.b16 %v436
    %v1797 = vunpack.c.l.b16 %v437
    %v1798 = vunpack.c.h.b16 %v437
    %v1799 = vunpack.c.l.b16 %v438
    %v1800 = vunpack.c.h.b16 %v438
    %v1801 = vunpack.c.l.b16 %v439
    %v1802 = vunpack.c.h.b16 %v439
    %v1803 = vunpack.c.l.b16 %v440
    %v1804 = vunpack.c.h.b16 %v440
    %v1805 = vunpack.c.l.b16 %v441
    %v1806 = vunpack.c.h.b16 %v441
    %v1807 = vunpack.c.l.b16 %v442
    %v1808 = vunpack.c.h.b16 %v442
    %v1809 = vunpack.c.l.b16 %v443
    %v1810 = vunpack.c.h.b16 %v443
    %v1811 = vunpack.c.l.b16 %v444
    %v1812 = vunpack.c.h.b16 %v444
    %v1813 = vunpack.c.l.b16 %v445
    %v1814 = vunpack.c.h.b16 %v445
    %v1815 = vunpack.c.l.b16 %v446
    %v1816 = vunpack.c.h.b16 %v446
    %v1817 = vunpack.c.l.b16 %v447
    %v1818 = vunpack.c.h.b16 %v447
    %v1819 = vunpack.c.l.b16 %v448
    %v1820 = vunpack.c.h.b16 %v448
    %v1821 = vunpack.c.l.b16 %v449
    %v1822 = vunpack.c.h.b16 %v449
    %v1823 = vunpack.c.l.b16 %v450
    %v1824 = vunpack.c.h.b16 %v450
    %v1825 = vunpack.c.l.b16 %v451
    %v1826 = vunpack.c.h.b16 %v451
    %v1827 = vunpack.c.l.b16 %v452
    %v1828 = vunpack.c.h.b16 %v452
    %v1829 = vunpack.c.l.b16 %v453
    %v1830 = vunpack.c.h.b16 %v453
    %v1831 = vunpack.c.l.b16 %v454
    %v1832 = vunpack.c.h.b16 %v454
    %v1833 = vunpack.c.l.b16 %v455
    %v1834 = vunpack.c.h.b16 %v455
    %v1835 = vunpack.c.l.b16 %v456
    %v1836 = vunpack.c.h.b16 %v456
    %v1837 = vunpack.c.l.b16 %v457
    %v1838 = vunpack.c.h.b16 %v457
    %v1839 = vunpack.c.l.b16 %v458
    %v1840 = vunpack.c.h.b16 %v458
    %v1841 = vunpack.c.l.b16 %v459
    %v1842 = vunpack.c.h.b16 %v459
    %v1843 = vunpack.c.l.b16 %v460
    %v1844 = vunpack.c.h.b16 %v460
    %v1845 = vunpack.c.l.b16 %v461
    %v1846 = vunpack.c.h.b16 %v461
    %v1847 = vunpack.c.l.b16 %v462
    %v1848 = vunpack.c.h.b16 %v462
    %v1849 = vunpack.c.l.b16 %v463
    %v1850 = vunpack.c.h.b16 %v463
    %v1851 = vunpack.c.l.b16 %v464
    %v1852 = vunpack.c.h.b16 %v464
    %v1853 = vunpack.c.l.b16 %v465
    %v1854 = vunpack.c.h.b16 %v465
    %v1855 = vunpack.c.l.b16 %v466
    %v1856 = vunpack.c.h.b16 %v466
    %v1857 = vunpack.c.l.b16 %v467
    %v1858 = vunpack.c.h.b16 %v467
    %v1859 = vunpack.c.l.b16 %v468
    %v1860 = vunpack.c.h.b16 %v468
    %v1861 = vunpack.c.l.b16 %v469
    %v1862 = vunpack.c.h.b16 %v469
    %v1863 = vunpack.c.l.b16 %v470
    %v1864 = vunpack.c.h.b16 %v470
    %v1865 = vunpack.c.l.b16 %v471
    %v1866 = vunpack.c.h.b16 %v471
    %v1867 = vunpack.c.l.b16 %v472
    %v1868 = vunpack.c.h.b16 %v472
    %v1869 = vunpack.c.l.b16 %v473
    %v1870 = vunpack.c.h.b16 %v473
    %v1871 = vunpack.c.l.b16 %v474
    %v1872 = vunpack.c.h.b16 %v474
    %v1873 = vunpack.c.l.b16 %v475
    %v1874 = vunpack.c.h.b16 %v475
    %v1875 = vunpack.c.l.b16 %v476
    %v1876 = vunpack.c.h.b16 %v476
    %v1877 = vunpack.c.l.b16 %v477
    %v1878 = vunpack.c.h.b16 %v477
    %v1879 = vunpack.c.l.b16 %v478
    %v1880 = vunpack.c.h.b16 %v478
    %v1881 = vunpack.c.l.b16 %v479
    %v1882 = vunpack.c.h.b16 %v479
    %v1883 = vunpack.c.l.b16 %v480
    %v1884 = vunpack.c.h.b16 %v480
    %v1885 = vunpack.c.l.b16 %v481
    %v1886 = vunpack.c.h.b16 %v481
    %v1887 = vunpack.c.l.b16 %v482
    %v1888 = vunpack.c.h.b16 %v482
    %v1889 = vunpack.c.l.b16 %v483
    %v1890 = vunpack.c.h.b16 %v483
    %v1891 = vunpack.c.l.b16 %v484
    %v1892 = vunpack.c.h.b16 %v484
    %v1893 = vunpack.c.l.b16 %v485
    %v1894 = vunpack.c.h.b16 %v485
    %v1895 = vunpack.c.l.b16 %v486
    %v1896 = vunpack.c.h.b16 %v486
    %v1897 = vunpack.c.l.b16 %v487
    %v1898 = vunpack.c.h.b16 %v487
    %v1899 = vunpack.c.l.b16 %v488
    %v1900 = vunpack.c.h.b16 %v488
    %v1901 = vunpack.c.l.b16 %v489
    %v1902 = vunpack.c.h.b16 %v489
    %v1903 = vunpack.c.l.b16 %v490
    %v1904 = vunpack.c.h.b16 %v490
    %v1905 = vunpack.c.l.b16 %v491
    %v1906 = vunpack.c.h.b16 %v491
    %v1907 = vunpack.c.l.b16 %v492
    %v1908 = vunpack.c.h.b16 %v492
    %v1909 = vunpack.c.l.b16 %v493
    %v1910 = vunpack.c.h.b16 %v493
    %v1911 = vunpack.c.l.b16 %v494
    %v1912 = vunpack.c.h.b16 %v494
    %v1913 = vunpack.c.l.b16 %v495
    %v1914 = vunpack.c.h.b16 %v495
    %v1915 = vunpack.c.l.b16 %v496
    %v1916 = vunpack.c.h.b16 %v496
    %v1917 = vunpack.c.l.b16 %v497
    %v1918 = vunpack.c.h.b16 %v497
    %v1919 = vunpack.c.l.b16 %v498
    %v1920 = vunpack.c.h.b16 %v498
    %v1921 = vunpack.c.l.b16 %v499
    %v1922 = vunpack.c.h.b16 %v499
    %v1923 = vunpack.c.l.b16 %v500
    %v1924 = vunpack.c.h.b16 %v500
    %v1925 = vunpack.c.l.b16 %v501
    %v1926 = vunpack.c.h.b16 %v501
    %v1927 = vunpack.c.l.b16 %v502
    %v1928 = vunpack.c.h.b16 %v502
    %v1929 = vunpack.c.l.b16 %v503
    %v1930 = vunpack.c.h.b16 %v503
    %v1931 = vunpack.c.l.b16 %v504
    %v1932 = vunpack.c.h.b16 %v504
    %v1933 = vunpack.c.l.b16 %v505
    %v1934 = vunpack.c.h.b16 %v505
    %v1935 = vunpack.c.l.b16 %v506
    %v1936 = vunpack.c.h.b16 %v506
    %v1937 = vunpack.c.l.b16 %v507
    %v1938 = vunpack.c.h.b16 %v507
    %v1939 = vunpack.c.l.b16 %v508
    %v1940 = vunpack.c.h.b16 %v508
    %v1941 = vunpack.c.l.b16 %v509
    %v1942 = vunpack.c.h.b16 %v509
    %v1943 = vunpack.c.l.b16 %v510
    %v1944 = vunpack.c.h.b16 %v510
    %v1945 = vunpack.c.l.b16 %v511
    %v1946 = vunpack.c.h.b16 %v511
    %v1947 = vunpack.c.l.b16 %v512
    %v1948 = vunpack.c.h.b16 %v512
    %v1949 = vunpack.c.l.b16 %v513
    %v1950 = vunpack.c.h.b16 %v513
    %v1951 = vunpack.c.l.b16 %v514
    %v1952 = vunpack.c.h.b16 %v514
    %v1953 = vunpack.c.l.b16 %v515
    %v1954 = vunpack.c.h.b16 %v515
    %v1955 = vunpack.c.l.b16 %v516
    %v1956 = vunpack.c.h.b16 %v516
    %v1957 = vunpack.c.l.b16 %v517
    %v1958 = vunpack.c.h.b16 %v517
    %v1959 = vunpack.c.l.b16 %v518
    %v1960 = vunpack.c.h.b16 %v518
    %v1961 = vunpack.c.l.b16 %v519
    %v1962 = vunpack.c.h.b16 %v519
    %v1963 = vunpack.c.l.b16 %v520
    %v1964 = vunpack.c.h.b16 %v520
    %v1965 = vunpack.c.l.b16 %v521
    %v1966 = vunpack.c.h.b16 %v521
    %v1967 = vunpack.c.l.b16 %v522
    %v1968 = vunpack.c.h.b16 %v522
    %v1969 = vunpack.c.l.b16 %v523
    %v1970 = vunpack.c.h.b16 %v523
    %v1971 = vunpack.c.l.b16 %v524
    %v1972 = vunpack.c.h.b16 %v524
    %v1973 = vunpack.c.l.b16 %v525
    %v1974 = vunpack.c.h.b16 %v525
    %v1975 = vunpack.c.l.b16 %v526
    %v1976 = vunpack.c.h.b16 %v526
    %v1977 = vunpack.c.l.b16 %v527
    %v1978 = vunpack.c.h.b16 %v527
    %v1979 = vunpack.c.l.b16 %v528
    %v1980 = vunpack.c.h.b16 %v528
    %v1981 = vunpack.c.l.b16 %v529
    %v1982 = vunpack.c.h.b16 %v529
    %v1983 = vunpack.c.l.b16 %v530
    %v1984 = vunpack.c.h.b16 %v530
    %v1985 = vunpack.c.l.b16 %v531
    %v1986 = vunpack.c.h.b16 %v531
    %v1987 = vunpack.c.l.b16 %v532
    %v1988 = vunpack.c.h.b16 %v532
    %v1989 = vunpack.c.l.b16 %v533
    %v1990 = vunpack.c.h.b16 %v533
    %v1991 = vunpack.c.l.b16 %v534
    %v1992 = vunpack.c.h.b16 %v534
    %v1993 = vunpack.c.l.b16 %v535
    %v1994 = vunpack.c.h.b16 %v535
    %v1995 = vunpack.c.l.b16 %v536
    %v1996 = vunpack.c.h.b16 %v536
    %v1997 = vunpack.c.l.b16 %v537
    %v1998 = vunpack.c.h.b16 %v537
    %v1999 = vunpack.c.l.b16 %v538
    %v2000 = vunpack.c.h.b16 %v538
    %v2001 = vunpack.c.l.b16 %v539
    %v2002 = vunpack.c.h.b16 %v539
    %v2003 = vunpack.c.l.b16 %v540
    %v2004 = vunpack.c.h.b16 %v540
    %v2005 = vunpack.c.l.b16 %v541
    %v2006 = vunpack.c.h.b16 %v541
    %v2007 = vunpack.c.l.b16 %v542
    %v2008 = vunpack.c.h.b16 %v542
    %v2009 = vunpack.c.l.b16 %v543
    %v2010 = vunpack.c.h.b16 %v543
    %v2011 = vunpack.c.l.b16 %v544
    %v2012 = vunpack.c.h.b16 %v544
    %v2013 = vunpack.c.l.b16 %v545
    %v2014 = vunpack.c.h.b16 %v545
    %v2015 = vunpack.c.l.b16 %v546
    %v2016 = vunpack.c.h.b16 %v546
    %v2017 = vunpack.c.l.b16 %v547
    %v2018 = vunpack.c.h.b16 %v547
    %v2019 = vunpack.c.l.b16 %v548
    %v2020 = vunpack.c.h.b16 %v548
    %v2021 = vunpack.c.l.b16 %v549
    %v2022 = vunpack.c.h.b16 %v549
    %v2023 = vunpack.c.l.b16 %v550
    %v2024 = vunpack.c.h.b16 %v550
    %v2025 = vunpack.c.l.b16 %v551
    %v2026 = vunpack.c.h.b16 %v551
    %v2027 = vunpack.c.l.b16 %v552
    %v2028 = vunpack.c.h.b16 %v552
    %v2029 = vunpack.c.l.b16 %v553
    %v2030 = vunpack.c.h.b16 %v553
    %v2031 = vunpack.c.l.b16 %v554
    %v2032 = vunpack.c.h.b16 %v554
    %v2033 = vunpack.c.l.b16 %v555
    %v2034 = vunpack.c.h.b16 %v555
    %v2035 = vunpack.c.l.b16 %v556
    %v2036 = vunpack.c.h.b16 %v556
    %v2037 = vunpack.c.l.b16 %v557
    %v2038 = vunpack.c.h.b16 %v557
    %v2039 = vunpack.c.l.b16 %v558
    %v2040 = vunpack.c.h.b16 %v558
    %v2041 = vunpack.c.l.b16 %v559
    %v2042 = vunpack.c.h.b16 %v559
    %v2043 = vunpack.c.l.b16 %v560
    %v2044 = vunpack.c.h.b16 %v560
    %v2045 = vunpack.c.l.b16 %v561
    %v2046 = vunpack.c.h.b16 %v561
    %v2047 = vunpack.c.l.b16 %v562
    %v2048 = vunpack.c.h.b16 %v562
    %v2049 = vunpack.c.l.b16 %v563
    %v2050 = vunpack.c.h.b16 %v563
    %v2051 = vunpack.c.l.b16 %v564
    %v2052 = vunpack.c.h.b16 %v564
    %v2053 = vunpack.c.l.b16 %v565
    %v2054 = vunpack.c.h.b16 %v565
    %v2055 = vunpack.c.l.b16 %v566
    %v2056 = vunpack.c.h.b16 %v566
    %v2057 = vunpack.c.l.b16 %v567
    %v2058 = vunpack.c.h.b16 %v567
    %v2059 = vunpack.c.l.b16 %v568
    %v2060 = vunpack.c.h.b16 %v568
    %v2061 = vunpack.c.l.b16 %v569
    %v2062 = vunpack.c.h.b16 %v569
    %v2063 = vunpack.c.l.b16 %v570
    %v2064 = vunpack.c.h.b16 %v570
    %v2065 = vunpack.c.l.b16 %v571
    %v2066 = vunpack.c.h.b16 %v571
    %v2067 = vunpack.c.l.b16 %v572
    %v2068 = vunpack.c.h.b16 %v572
    %v2069 = vunpack.c.l.b16 %v573
    %v2070 = vunpack.c.h.b16 %v573
    %v2071 = vunpack.c.l.b16 %v574
    %v2072 = vunpack.c.h.b16 %v574
    %v2073 = vunpack.c.l.b16 %v575
    %v2074 = vunpack.c.h.b16 %v575
    %v2075 = vunpack.c.l.b16 %v576
    %v2076 = vunpack.c.h.b16 %v576
    %v2077 = vunpack.c.l.b16 %v577
    %v2078 = vunpack.c.h.b16 %v577
    %v2079 = vunpack.c.l.b16 %v578
    %v2080 = vunpack.c.h.b16 %v578
    %v2081 = vunpack.c.l.b16 %v579
    %v2082 = vunpack.c.h.b16 %v579
    %v2083 = vunpack.c.l.b16 %v580
    %v2084 = vunpack.c.h.b16 %v580
    %v2085 = vunpack.c.l.b16 %v581
    %v2086 = vunpack.c.h.b16 %v581
    %v2087 = vunpack.c.l.b16 %v582
    %v2088 = vunpack.c.h.b16 %v582
    %v2089 = vunpack.c.l.b16 %v583
    %v2090 = vunpack.c.h.b16 %v583
    %v2091 = vunpack.c.l.b16 %v584
    %v2092 = vunpack.c.h.b16 %v584
    %v2093 = vunpack.c.l.b16 %v585
    %v2094 = vunpack.c.h.b16 %v585
    %v2095 = vunpack.c.l.b16 %v586
    %v2096 = vunpack.c.h.b16 %v586
    %v2097 = vunpack.c.l.b16 %v587
    %v2098 = vunpack.c.h.b16 %v587
    %v2099 = vunpack.c.l.b16 %v588
    %v2100 = vunpack.c.h.b16 %v588
    %v2101 = vunpack.c.l.b16 %v589
    %v2102 = vunpack.c.h.b16 %v589
    %v2103 = vunpack.c.l.b16 %v590
    %v2104 = vunpack.c.h.b16 %v590
    %v2105 = vunpack.c.l.b16 %v591
    %v2106 = vunpack.c.h.b16 %v591
    %v2107 = vunpack.c.l.b16 %v592
    %v2108 = vunpack.c.h.b16 %v592
    %v2109 = vunpack.c.l.b16 %v593
    %v2110 = vunpack.c.h.b16 %v593
    %v2111 = vunpack.c.l.b16 %v594
    %v2112 = vunpack.c.h.b16 %v594
    %v2113 = vunpack.c.l.b16 %v595
    %v2114 = vunpack.c.h.b16 %v595
    %v2115 = vunpack.c.l.b16 %v596
    %v2116 = vunpack.c.h.b16 %v596
    %v2117 = vunpack.c.l.b16 %v597
    %v2118 = vunpack.c.h.b16 %v597
    %v2119 = vunpack.c.l.b16 %v598
    %v2120 = vunpack.c.h.b16 %v598
    %v2121 = vunpack.c.l.b16 %v599
    %v2122 = vunpack.c.h.b16 %v599
    %v2123 = vunpack.c.l.b16 %v600
    %v2124 = vunpack.c.h.b16 %v600
    %v2125 = vunpack.c.l.b16 %v601
    %v2126 = vunpack.c.h.b16 %v601
    %v2127 = vunpack.c.l.b16 %v602
    %v2128 = vunpack.c.h.b16 %v602
    %v2129 = vunpack.c.l.b16 %v603
    %v2130 = vunpack.c.h.b16 %v603
    %v2131 = vunpack.c.l.b16 %v604
    %v2132 = vunpack.c.h.b16 %v604
    %v2133 = vunpack.c.l.b16 %v605
    %v2134 = vunpack.c.h.b16 %v605
    %v2135 = vunpack.c.l.b16 %v606
    %v2136 = vunpack.c.h.b16 %v606
    %v2137 = vunpack.c.l.b16 %v607
    %v2138 = vunpack.c.h.b16 %v607
    %v2139 = vunpack.c.l.b16 %v608
    %v2140 = vunpack.c.h.b16 %v608
    %v2141 = vunpack.c.l.b16 %v609
    %v2142 = vunpack.c.h.b16 %v609
    %v2143 = vunpack.c.l.b16 %v610
    %v2144 = vunpack.c.h.b16 %v610
    %v2145 = vunpack.c.l.b16 %v611
    %v2146 = vunpack.c.h.b16 %v611
    %v2147 = vunpack.c.l.b16 %v612
    %v2148 = vunpack.c.h.b16 %v612
    %v2149 = vunpack.c.l.b16 %v613
    %v2150 = vunpack.c.h.b16 %v613
    %v2151 = vunpack.c.l.b16 %v614
    %v2152 = vunpack.c.h.b16 %v614
    %v2153 = vunpack.c.l.b16 %v615
    %v2154 = vunpack.c.h.b16 %v615
    %v2155 = vunpack.c.l.b16 %v616
    %v2156 = vunpack.c.h.b16 %v616
    %v2157 = vunpack.c.l.b16 %v617
    %v2158 = vunpack.c.h.b16 %v617
    %v2159 = vunpack.c.l.b16 %v618
    %v2160 = vunpack.c.h.b16 %v618
    %v2161 = vunpack.c.l.b16 %v619
    %v2162 = vunpack.c.h.b16 %v619
    %v2163 = vunpack.c.l.b16 %v620
    %v2164 = vunpack.c.h.b16 %v620
    %v2165 = vunpack.c.l.b16 %v621
    %v2166 = vunpack.c.h.b16 %v621
    %v2167 = vunpack.c.l.b16 %v622
    %v2168 = vunpack.c.h.b16 %v622
    %v2169 = vunpack.c.l.b16 %v623
    %v2170 = vunpack.c.h.b16 %v623
    %v2171 = vunpack.c.l.b16 %v624
    %v2172 = vunpack.c.h.b16 %v624
    %v2173 = vunpack.c.l.b16 %v625
    %v2174 = vunpack.c.h.b16 %v625
    %v2175 = vunpack.c.l.b16 %v626
    %v2176 = vunpack.c.h.b16 %v626
    %v2177 = vunpack.c.l.b16 %v627
    %v2178 = vunpack.c.h.b16 %v627
    %v2179 = vunpack.c.l.b16 %v628
    %v2180 = vunpack.c.h.b16 %v628
    %v2181 = vunpack.c.l.b16 %v629
    %v2182 = vunpack.c.h.b16 %v629
    %v2183 = vunpack.c.l.b16 %v630
    %v2184 = vunpack.c.h.b16 %v630
    %v2185 = vunpack.c.l.b16 %v631
    %v2186 = vunpack.c.h.b16 %v631
    %v2187 = vunpack.c.l.b16 %v632
    %v2188 = vunpack.c.h.b16 %v632
    %v2189 = vunpack.c.l.b16 %v633
    %v2190 = vunpack.c.h.b16 %v633
    %v2191 = vunpack.c.l.b16 %v634
    %v2192 = vunpack.c.h.b16 %v634
    %v2193 = vunpack.c.l.b16 %v635
    %v2194 = vunpack.c.h.b16 %v635
    %v2195 = vunpack.c.l.b16 %v636
    %v2196 = vunpack.c.h.b16 %v636
    %v2197 = vunpack.c.l.b16 %v637
    %v2198 = vunpack.c.h.b16 %v637
    %v2199 = vunpack.c.l.b16 %v638
    %v2200 = vunpack.c.h.b16 %v638
    %v2201 = vunpack.c.l.b16 %v639
    %v2202 = vunpack.c.h.b16 %v639
    %v2203 = vunpack.c.l.b16 %v640
    %v2204 = vunpack.c.h.b16 %v640
    %v2205 = vunpack.c.l.b16 %v641
    %v2206 = vunpack.c.h.b16 %v641
    %v2207 = vunpack.c.l.b16 %v642
    %v2208 = vunpack.c.h.b16 %v642
    %v2209 = vunpack.c.l.b16 %v643
    %v2210 = vunpack.c.h.b16 %v643
    %v2211 = vunpack.c.l.b16 %v644
    %v2212 = vunpack.c.h.b16 %v644
    %v2213 = vunpack.c.l.b16 %v645
    %v2214 = vunpack.c.h.b16 %v645
    %v2215 = vunpack.c.l.b16 %v646
    %v2216 = vunpack.c.h.b16 %v646
    %v2217 = vunpack.c.l.b16 %v647
    %v2218 = vunpack.c.h.b16 %v647
    %v2219 = vunpack.c.l.b16 %v648
    %v2220 = vunpack.c.h.b16 %v648
    %v2221 = vunpack.c.l.b16 %v649
    %v2222 = vunpack.c.h.b16 %v649
    %v2223 = vunpack.c.l.b16 %v650
    %v2224 = vunpack.c.h.b16 %v650
    %v2225 = vunpack.c.l.b16 %v651
    %v2226 = vunpack.c.h.b16 %v651
    %v2227 = vunpack.c.l.b16 %v652
    %v2228 = vunpack.c.h.b16 %v652
    %v2229 = vunpack.c.l.b16 %v653
    %v2230 = vunpack.c.h.b16 %v653
    %v2231 = vunpack.c.l.b16 %v654
    %v2232 = vunpack.c.h.b16 %v654
    %v2233 = vunpack.c.l.b16 %v655
    %v2234 = vunpack.c.h.b16 %v655
    %v2235 = vunpack.c.l.b16 %v656
    %v2236 = vunpack.c.h.b16 %v656
    %v2237 = vunpack.c.l.b16 %v657
    %v2238 = vunpack.c.h.b16 %v657
    %v2239 = vunpack.c.l.b16 %v658
    %v2240 = vunpack.c.h.b16 %v658
    %v2241 = vunpack.c.l.b16 %v659
    %v2242 = vunpack.c.h.b16 %v659
    %v2243 = vunpack.c.l.b16 %v660
    %v2244 = vunpack.c.h.b16 %v660
    %v2245 = vunpack.c.l.b16 %v661
    %v2246 = vunpack.c.h.b16 %v661
    %v2247 = vunpack.c.l.b16 %v662
    %v2248 = vunpack.c.h.b16 %v662
    %v2249 = vunpack.c.l.b16 %v663
    %v2250 = vunpack.c.h.b16 %v663
    %v2251 = vunpack.c.l.b16 %v664
    %v2252 = vunpack.c.h.b16 %v664
    %v2253 = vunpack.c.l.b16 %v665
    %v2254 = vunpack.c.h.b16 %v665
    %v2255 = vunpack.c.l.b16 %v666
    %v2256 = vunpack.c.h.b16 %v666
    %v2257 = vunpack.c.l.b16 %v667
    %v2258 = vunpack.c.h.b16 %v667
    %v2259 = vunpack.c.l.b16 %v668
    %v2260 = vunpack.c.h.b16 %v668
    %v2261 = vunpack.c.l.b16 %v669
    %v2262 = vunpack.c.h.b16 %v669
    %v2263 = vunpack.c.l.b16 %v670
    %v2264 = vunpack.c.h.b16 %v670
    %v2265 = vpack.c.b16 %v1249, %v1241
    %v2266 = vpack.c.b16 %v1250, %v1242
    %v2267 = vpack.c.b16 %v1251, %v1243
    %v2268 = vpack.c.b16 %v1252, %v1244
    %v2269 = vpack.c.b16 %v1253, %v1245
    %v2270 = vpack.c.b16 %v1254, %v1246
    %v2271 = vpack.c.b16 %v1255, %v1247
    %v2272 = vpack.c.b16 %v1256, %v1248
    %v2273 = vpack.c.b16 %v1265, %v1257
    %v2274 = vpack.c.b16 %v1266, %v1258
    %v2275 = vpack.c.b16 %v1267, %v1259
    %v2276 = vpack.c.b16 %v1268, %v1260
    %v2277 = vpack.c.b16 %v1269, %v1261
    %v2278 = vpack.c.b16 %v1270, %v1262
    %v2279 = vpack.c.b16 %v1271, %v1263
    %v2280 = vpack.c.b16 %v1272, %v1264
    %v2281 = vpack.c.b16 %v1281, %v1273
    %v2282 = vpack.c.b16 %v1282, %v1274
    %v2283 = vpack.c.b16 %v1283, %v1275
    %v2284 = vpack.c.b16 %v1284, %v1276
    %v2285 = vpack.c.b16 %v1285, %v1277
    %v2286 = vpack.c.b16 %v1286, %v1278
    %v2287 = vpack.c.b16 %v1287, %v1279
    %v2288 = vpack.c.b16 %v1288, %v1280
    %v2289 = vpack.c.b16 %v1297, %v1289
    %v2290 = vpack.c.b16 %v1298, %v1290
    %v2291 = vpack.c.b16 %v1299, %v1291
    %v2292 = vpack.c.b16 %v1300, %v1292
    %v2293 = vpack.c.b16 %v1301, %v1293
    %v2294 = vpack.c.b16 %v1302, %v1294
    %v2295 = vpack.c.b16 %v1303, %v1295
    %v2296 = vpack.c.b16 %v1304, %v1296
    %v2297 = vpack.c.b16 %v1313, %v1305
    %v2298 = vpack.c.b16 %v1314, %v1306
    %v2299 = vpack.c.b16 %v1315, %v1307
    %v2300 = vpack.c.b16 %v1316, %v1308
    %v2301 = vpack.c.b16 %v1317, %v1309
    %v2302 = vpack.c.b16 %v1318, %v1310
    %v2303 = vpack.c.b16 %v1319, %v1311
    %v2304 = vpack.c.b16 %v1320, %v1312
    %v2305 = vpack.c.b16 %v1329, %v1321
    %v2306 = vpack.c.b16 %v1330, %v1322
    %v2307 = vpack.c.b16 %v1331, %v1323
    %v2308 = vpack.c.b16 %v1332, %v1324
    %v2309 = vpack.c.b16 %v1333, %v1325
    %v2310 = vpack.c.b16 %v1334, %v1326
    %v2311 = vpack.c.b16 %v1335, %v1327
    %v2312 = vpack.c.b16 %v1336, %v1328
    %v2313 = vpack.c.b16 %v1345, %v1337
    %v2314 = vpack.c.b16 %v1346, %v1338
    %v2315 = vpack.c.b16 %v1347, %v1339
    %v2316 = vpack.c.b16 %v1348, %v1340
    %v2317 = vpack.c.b16 %v1349, %v1341
    %v2318 = vpack.c.b16 %v1350, %v1342
    %v2319 = vpack.c.b16 %v1351, %v1343
    %v2320 = vpack.c.b16 %v1352, %v1344
    %v2321 = vpack.c.b16 %v1361, %v1353
    %v2322 = vpack.c.b16 %v1362, %v1354
    %v2323 = vpack.c.b16 %v1363, %v1355
    %v2324 = vpack.c.b16 %v1364, %v1356
    %v2325 = vpack.c.b16 %v1365, %v1357
    %v2326 = vpack.c.b16 %v1366, %v1358
    %v2327 = vpack.c.b16 %v1367, %v1359
    %v2328 = vpack.c.b16 %v1368, %v1360
    %v2329 = vpack.c.b16 %v1377, %v1369
    %v2330 = vpack.c.b16 %v1378, %v1370
    %v2331 = vpack.c.b16 %v1379, %v1371
    %v2332 = vpack.c.b16 %v1380, %v1372
    %v2333 = vpack.c.b16 %v1381, %v1373
    %v2334 = vpack.c.b16 %v1382, %v1374
    %v2335 = vpack.c.b16 %v1383, %v1375
    %v2336 = vpack.c.b16 %v1384, %v1376
    %v2337 = vpack.c.b16 %v1393, %v1385
    %v2338 = vpack.c.b16 %v1394, %v1386
    %v2339 = vpack.c.b16 %v1395, %v1387
    %v2340 = vpack.c.b16 %v1396, %v1388
    %v2341 = vpack.c.b16 %v1397, %v1389
    %v2342 = vpack.c.b16 %v1398, %v1390
    %v2343 = vpack.c.b16 %v1399, %v1391
    %v2344 = vpack.c.b16 %v1400, %v1392
    %v2345 = vpack.c.b16 %v1409, %v1401
    %v2346 = vpack.c.b16 %v1410, %v1402
    %v2347 = vpack.c.b16 %v1411, %v1403
    %v2348 = vpack.c.b16 %v1412, %v1404
    %v2349 = vpack.c.b16 %v1413, %v1405
    %v2350 = vpack.c.b16 %v1414, %v1406
    %v2351 = vpack.c.b16 %v1415, %v1407
    %v2352 = vpack.c.b16 %v1416, %v1408
    %v2353 = vpack.c.b16 %v1425, %v1417
    %v2354 = vpack.c.b16 %v1426, %v1418
    %v2355 = vpack.c.b16 %v1427, %v1419
    %v2356 = vpack.c.b16 %v1428, %v1420
    %v2357 = vpack.c.b16 %v1429, %v1421
    %v2358 = vpack.c.b16 %v1430, %v1422
    %v2359 = vpack.c.b16 %v1431, %v1423
    %v2360 = vpack.c.b16 %v1432, %v1424
    %v2361 = vpack.c.b16 %v1441, %v1433
    %v2362 = vpack.c.b16 %v1442, %v1434
    %v2363 = vpack.c.b16 %v1443, %v1435
    %v2364 = vpack.c.b16 %v1444, %v1436
    %v2365 = vpack.c.b16 %v1445, %v1437
    %v2366 = vpack.c.b16 %v1446, %v1438
    %v2367 = vpack.c.b16 %v1447, %v1439
    %v2368 = vpack.c.b16 %v1448, %v1440
    %v2369 = vpack.c.b16 %v1457, %v1449
    %v2370 = vpack.c.b16 %v1458, %v1450
    %v2371 = vpack.c.b16 %v1459, %v1451
    %v2372 = vpack.c.b16 %v1460, %v1452
    %v2373 = vpack.c.b16 %v1461, %v1453
    %v2374 = vpack.c.b16 %v1462, %v1454
    %v2375 = vpack.c.b16 %v1463, %v1455
    %v2376 = vpack.c.b16 %v1464, %v1456
    %v2377 = vpack.c.b16 %v1473, %v1465
    %v2378 = vpack.c.b16 %v1474, %v1466
    %v2379 = vpack.c.b16 %v1475, %v1467
    %v2380 = vpack.c.b16 %v1476, %v1468
    %v2381 = vpack.c.b16 %v1477, %v1469
    %v2382 = vpack.c.b16 %v1478, %v1470
    %v2383 = vpack.c.b16 %v1479, %v1471
    %v2384 = vpack.c.b16 %v1480, %v1472
    %v2385 = vpack.c.b16 %v1489, %v1481
    %v2386 = vpack.c.b16 %v1490, %v1482
    %v2387 = vpack.c.b16 %v1491, %v1483
    %v2388 = vpack.c.b16 %v1492, %v1484
    %v2389 = vpack.c.b16 %v1493, %v1485
    %v2390 = vpack.c.b16 %v1494, %v1486
    %v2391 = vpack.c.b16 %v1495, %v1487
    %v2392 = vpack.c.b16 %v1496, %v1488
    %v2393 = vpack.c.b16 %v1505, %v1497
    %v2394 = vpack.c.b16 %v1506, %v1498
    %v2395 = vpack.c.b16 %v1507, %v1499
    %v2396 = vpack.c.b16 %v1508, %v1500
    %v2397 = vpack.c.b16 %v1509, %v1501
    %v2398 = vpack.c.b16 %v1510, %v1502
    %v2399 = vpack.c.b16 %v1511, %v1503
    %v2400 = vpack.c.b16 %v1512, %v1504
    %v2401 = vpack.c.b16 %v1521, %v1513
    %v2402 = vpack.c.b16 %v1522, %v1514
    %v2403 = vpack.c.b16 %v1523, %v1515
    %v2404 = vpack.c.b16 %v1524, %v1516
    %v2405 = vpack.c.b16 %v1525, %v1517
    %v2406 = vpack.c.b16 %v1526, %v1518
    %v2407 = vpack.c.b16 %v1527, %v1519
    %v2408 = vpack.c.b16 %v1528, %v1520
    %v2409 = vpack.c.b16 %v1537, %v1529
    %v2410 = vpack.c.b16 %v1538, %v1530
    %v2411 = vpack.c.b16 %v1539, %v1531
    %v2412 = vpack.c.b16 %v1540, %v1532
    %v2413 = vpack.c.b16 %v1541, %v1533
    %v2414 = vpack.c.b16 %v1542, %v1534
    %v2415 = vpack.c.b16 %v1543, %v1535
    %v2416 = vpack.c.b16 %v1544, %v1536
    %v2417 = vpack.c.b16 %v1553, %v1545
    %v2418 = vpack.c.b16 %v1554, %v1546
    %v2419 = vpack.c.b16 %v1555, %v1547
    %v2420 = vpack.c.b16 %v1556, %v1548
    %v2421 = vpack.c.b16 %v1557, %v1549
    %v2422 = vpack.c.b16 %v1558, %v1550
    %v2423 = vpack.c.b16 %v1559, %v1551
    %v2424 = vpack.c.b16 %v1560, %v1552
    %v2425 = vpack.c.b16 %v1569, %v1561
    %v2426 = vpack.c.b16 %v1570, %v1562
    %v2427 = vpack.c.b16 %v1571, %v1563
    %v2428 = vpack.c.b16 %v1572, %v1564
    %v2429 = vpack.c.b16 %v1573, %v1565
    %v2430 = vpack.c.b16 %v1574, %v1566
    %v2431 = vpack.c.b16 %v1575, %v1567
    %v2432 = vpack.c.b16 %v1576, %v1568
    %v2433 = vpack.c.b16 %v1585, %v1577
    %v2434 = vpack.c.b16 %v1586, %v1578
    %v2435 = vpack.c.b16 %v1587, %v1579
    %v2436 = vpack.c.b16 %v1588, %v1580
    %v2437 = vpack.c.b16 %v1589, %v1581
    %v2438 = vpack.c.b16 %v1590, %v1582
    %v2439 = vpack.c.b16 %v1591, %v1583
    %v2440 = vpack.c.b16 %v1592, %v1584
    %v2441 = vpack.c.b16 %v1601, %v1593
    %v2442 = vpack.c.b16 %v1602, %v1594
    %v2443 = vpack.c.b16 %v1603, %v1595
    %v2444 = vpack.c.b16 %v1604, %v1596
    %v2445 = vpack.c.b16 %v1605, %v1597
    %v2446 = vpack.c.b16 %v1606, %v1598
    %v2447 = vpack.c.b16 %v1607, %v1599
    %v2448 = vpack.c.b16 %v1608, %v1600
    %v2449 = vpack.c.b16 %v1617, %v1609
    %v2450 = vpack.c.b16 %v1618, %v1610
    %v2451 = vpack.c.b16 %v1619, %v1611
    %v2452 = vpack.c.b16 %v1620, %v1612
    %v2453 = vpack.c.b16 %v1621, %v1613
    %v2454 = vpack.c.b16 %v1622, %v1614
    %v2455 = vpack.c.b16 %v1623, %v1615
    %v2456 = vpack.c.b16 %v1624, %v1616
    %v2457 = vpack.c.b16 %v1633, %v1625
    %v2458 = vpack.c.b16 %v1634, %v1626
    %v2459 = vpack.c.b16 %v1635, %v1627
    %v2460 = vpack.c.b16 %v1636, %v1628
    %v2461 = vpack.c.b16 %v1637, %v1629
    %v2462 = vpack.c.b16 %v1638, %v1630
    %v2463 = vpack.c.b16 %v1639, %v1631
    %v2464 = vpack.c.b16 %v1640, %v1632
    %v2465 = vpack.c.b16 %v1649, %v1641
    %v2466 = vpack.c.b16 %v1650, %v1642
    %v2467 = vpack.c.b16 %v1651, %v1643
    %v2468 = vpack.c.b16 %v1652, %v1644
    %v2469 = vpack.c.b16 %v1653, %v1645
    %v2470 = vpack.c.b16 %v1654, %v1646
    %v2471 = vpack.c.b16 %v1655, %v1647
    %v2472 = vpack.c.b16 %v1656, %v1648
    %v2473 = vpack.c.b16 %v1665, %v1657
    %v2474 = vpack.c.b16 %v1666, %v1658
    %v2475 = vpack.c.b16 %v1667, %v1659
    %v2476 = vpack.c.b16 %v1668, %v1660
    %v2477 = vpack.c.b16 %v1669, %v1661
    %v2478 = vpack.c.b16 %v1670, %v1662
    %v2479 = vpack.c.b16 %v1671, %v1663
    %v2480 = vpack.c.b16 %v1672, %v1664
    %v2481 = vpack.c.b16 %v1681, %v1673
    %v2482 = vpack.c.b16 %v1682, %v1674
    %v2483 = vpack.c.b16 %v1683, %v1675
    %v2484 = vpack.c.b16 %v1684, %v1676
    %v2485 = vpack.c.b16 %v1685, %v1677
    %v2486 = vpack.c.b16 %v1686, %v1678
    %v2487 = vpack.c.b16 %v1687, %v1679
    %v2488 = vpack.c.b16 %v1688, %v1680
    %v2489 = vpack.c.b16 %v1697, %v1689
    %v2490 = vpack.c.b16 %v1698, %v1690
    %v2491 = vpack.c.b16 %v1699, %v1691
    %v2492 = vpack.c.b16 %v1700, %v1692
    %v2493 = vpack.c.b16 %v1701, %v1693
    %v2494 = vpack.c.b16 %v1702, %v1694
    %v2495 = vpack.c.b16 %v1703, %v1695
    %v2496 = vpack.c.b16 %v1704, %v1696
    %v2497 = vpack.c.b16 %v1713, %v1705
    %v2498 = vpack.c.b16 %v1714, %v1706
    %v2499 = vpack.c.b16 %v1715, %v1707
    %v2500 = vpack.c.b16 %v1716, %v1708
    %v2501 = vpack.c.b16 %v1717, %v1709
    %v2502 = vpack.c.b16 %v1718, %v1710
    %v2503 = vpack.c.b16 %v1719, %v1711
    %v2504 = vpack.c.b16 %v1720, %v1712
    %v2505 = vpack.c.b16 %v1729, %v1721
    %v2506 = vpack.c.b16 %v1730, %v1722
    %v2507 = vpack.c.b16 %v1731, %v1723
    %v2508 = vpack.c.b16 %v1732, %v1724
    %v2509 = vpack.c.b16 %v1733, %v1725
    %v2510 = vpack.c.b16 %v1734, %v1726
    %v2511 = vpack.c.b16 %v1735, %v1727
    %v2512 = vpack.c.b16 %v1736, %v1728
    %v2513 = vpack.c.b16 %v1745, %v1737
    %v2514 = vpack.c.b16 %v1746, %v1738
    %v2515 = vpack.c.b16 %v1747, %v1739
    %v2516 = vpack.c.b16 %v1748, %v1740
    %v2517 = vpack.c.b16 %v1749, %v1741
    %v2518 = vpack.c.b16 %v1750, %v1742
    %v2519 = vpack.c.b16 %v1751, %v1743
    %v2520 = vpack.c.b16 %v1752, %v1744
    %v2521 = vpack.c.b16 %v1761, %v1753
    %v2522 = vpack.c.b16 %v1762, %v1754
    %v2523 = vpack.c.b16 %v1763, %v1755
    %v2524 = vpack.c.b16 %v1764, %v1756
    %v2525 = vpack.c.b16 %v1765, %v1757
    %v2526 = vpack.c.b16 %v1766, %v1758
    %v2527 = vpack.c.b16 %v1767, %v1759
    %v2528 = vpack.c.b16 %v1768, %v1760
    %v2529 = vpack.c.b16 %v1777, %v1769
    %v2530 = vpack.c.b16 %v1778, %v1770
    %v2531 = vpack.c.b16 %v1779, %v1771
    %v2532 = vpack.c.b16 %v1780, %v1772
    %v2533 = vpack.c.b16 %v1781, %v1773
    %v2534 = vpack.c.b16 %v1782, %v1774
    %v2535 = vpack.c.b16 %v1783, %v1775
    %v2536 = vpack.c.b16 %v1784, %v1776
    %v2537 = vpack.c.b16 %v1793, %v1785
    %v2538 = vpack.c.b16 %v1794, %v1786
    %v2539 = vpack.c.b16 %v1795, %v1787
    %v2540 = vpack.c.b16 %v1796, %v1788
    %v2541 = vpack.c.b16 %v1797, %v1789
    %v2542 = vpack.c.b16 %v1798, %v1790
    %v2543 = vpack.c.b16 %v1799, %v1791
    %v2544 = vpack.c.b16 %v1800, %v1792
    %v2545 = vpack.c.b16 %v1809, %v1801
    %v2546 = vpack.c.b16 %v1810, %v1802
    %v2547 = vpack.c.b16 %v1811, %v1803
    %v2548 = vpack.c.b16 %v1812, %v1804
    %v2549 = vpack.c.b16 %v1813, %v1805
    %v2550 = vpack.c.b16 %v1814, %v1806
    %v2551 = vpack.c.b16 %v1815, %v1807
    %v2552 = vpack.c.b16 %v1816, %v1808
    %v2553 = vpack.c.b16 %v1825, %v1817
    %v2554 = vpack.c.b16 %v1826, %v1818
    %v2555 = vpack.c.b16 %v1827, %v1819
    %v2556 = vpack.c.b16 %v1828, %v1820
    %v2557 = vpack.c.b16 %v1829, %v1821
    %v2558 = vpack.c.b16 %v1830, %v1822
    %v2559 = vpack.c.b16 %v1831, %v1823
    %v2560 = vpack.c.b16 %v1832, %v1824
    %v2561 = vpack.c.b16 %v1841, %v1833
    %v2562 = vpack.c.b16 %v1842, %v1834
    %v2563 = vpack.c.b16 %v1843, %v1835
    %v2564 = vpack.c.b16 %v1844, %v1836
    %v2565 = vpack.c.b16 %v1845, %v1837
    %v2566 = vpack.c.b16 %v1846, %v1838
    %v2567 = vpack.c.b16 %v1847, %v1839
    %v2568 = vpack.c.b16 %v1848, %v1840
    %v2569 = vpack.c.b16 %v1857, %v1849
    %v2570 = vpack.c.b16 %v1858, %v1850
    %v2571 = vpack.c.b16 %v1859, %v1851
    %v2572 = vpack.c.b16 %v1860, %v1852
    %v2573 = vpack.c.b16 %v1861, %v1853
    %v2574 = vpack.c.b16 %v1862, %v1854
    %v2575 = vpack.c.b16 %v1863, %v1855
    %v2576 = vpack.c.b16 %v1864, %v1856
    %v2577 = vpack.c.b16 %v1873, %v1865
    %v2578 = vpack.c.b16 %v1874, %v1866
    %v2579 = vpack.c.b16 %v1875, %v1867
    %v2580 = vpack.c.b16 %v1876, %v1868
    %v2581 = vpack.c.b16 %v1877, %v1869
    %v2582 = vpack.c.b16 %v1878, %v1870
    %v2583 = vpack.c.b16 %v1879, %v1871
    %v2584 = vpack.c.b16 %v1880, %v1872
    %v2585 = vpack.c.b16 %v1889, %v1881
    %v2586 = vpack.c.b16 %v1890, %v1882
    %v2587 = vpack.c.b16 %v1891, %v1883
    %v2588 = vpack.c.b16 %v1892, %v1884
    %v2589 = vpack.c.b16 %v1893, %v1885
    %v2590 = vpack.c.b16 %v1894, %v1886
    %v2591 = vpack.c.b16 %v1895, %v1887
    %v2592 = vpack.c.b16 %v1896, %v1888
    %v2593 = vpack.c.b16 %v1905, %v1897
    %v2594 = vpack.c.b16 %v1906, %v1898
    %v2595 = vpack.c.b16 %v1907, %v1899
    %v2596 = vpack.c.b16 %v1908, %v1900
    %v2597 = vpack.c.b16 %v1909, %v1901
    %v2598 = vpack.c.b16 %v1910, %v1902
    %v2599 = vpack.c.b16 %v1911, %v1903
    %v2600 = vpack.c.b16 %v1912, %v1904
    %v2601 = vpack.c.b16 %v1921, %v1913
    %v2602 = vpack.c.b16 %v1922, %v1914
    %v2603 = vpack.c.b16 %v1923, %v1915
    %v2604 = vpack.c.b16 %v1924, %v1916
    %v2605 = vpack.c.b16 %v1925, %v1917
    %v2606 = vpack.c.b16 %v1926, %v1918
    %v2607 = vpack.c.b16 %v1927, %v1919
    %v2608 = vpack.c.b16 %v1928, %v1920
    %v2609 = vpack.c.b16 %v1937, %v1929
    %v2610 = vpack.c.b16 %v1938, %v1930
    %v2611 = vpack.c.b16 %v1939, %v1931
    %v2612 = vpack.c.b16 %v1940, %v1932
    %v2613 = vpack.c.b16 %v1941, %v1933
    %v2614 = vpack.c.b16 %v1942, %v1934
    %v2615 = vpack.c.b16 %v1943, %v1935
    %v2616 = vpack.c.b16 %v1944, %v1936
    %v2617 = vpack.c.b16 %v1953, %v1945
    %v2618 = vpack.c.b16 %v1954, %v1946
    %v2619 = vpack.c.b16 %v1955, %v1947
    %v2620 = vpack.c.b16 %v1956, %v1948
    %v2621 = vpack.c.b16 %v1957, %v1949
    %v2622 = vpack.c.b16 %v1958, %v1950
    %v2623 = vpack.c.b16 %v1959, %v1951
    %v2624 = vpack.c.b16 %v1960, %v1952
    %v2625 = vpack.c.b16 %v1969, %v1961
    %v2626 = vpack.c.b16 %v1970, %v1962
    %v2627 = vpack.c.b16 %v1971, %v1963
    %v2628 = vpack.c.b16 %v1972, %v1964
    %v2629 = vpack.c.b16 %v1973, %v1965
    %v2630 = vpack.c.b16 %v1974, %v1966
    %v2631 = vpack.c.b16 %v1975, %v1967
    %v2632 = vpack.c.b16 %v1976, %v1968
    %v2633 = vpack.c.b16 %v1985, %v1977
    %v2634 = vpack.c.b16 %v1986, %v1978
    %v2635 = vpack.c.b16 %v1987, %v1979
    %v2636 = vpack.c.b16 %v1988, %v1980
    %v2637 = vpack.c.b16 %v1989, %v1981
    %v2638 = vpack.c.b16 %v1990, %v1982
    %v2639 = vpack.c.b16 %v1991, %v1983
    %v2640 = vpack.c.b16 %v1992, %v1984
    %v2641 = vpack.c.b16 %v2001, %v1993
    %v2642 = vpack.c.b16 %v2002, %v1994
    %v2643 = vpack.c.b16 %v2003, %v1995
    %v2644 = vpack.c.b16 %v2004, %v1996
    %v2645 = vpack.c.b16 %v2005, %v1997
    %v2646 = vpack.c.b16 %v2006, %v1998
    %v2647 = vpack.c.b16 %v2007, %v1999
    %v2648 = vpack.c.b16 %v2008, %v2000
    %v2649 = vpack.c.b16 %v2017, %v2009
    %v2650 = vpack.c.b16 %v2018, %v2010
    %v2651 = vpack.c.b16 %v2019, %v2011
    %v2652 = vpack.c.b16 %v2020, %v2012
    %v2653 = vpack.c.b16 %v2021, %v2013
    %v2654 = vpack.c.b16 %v2022, %v2014
    %v2655 = vpack.c.b16 %v2023, %v2015
    %v2656 = vpack.c.b16 %v2024, %v2016
    %v2657 = vpack.c.b16 %v2033, %v2025
    %v2658 = vpack.c.b16 %v2034, %v2026
    %v2659 = vpack.c.b16 %v2035, %v2027
    %v2660 = vpack.c.b16 %v2036, %v2028
    %v2661 = vpack.c.b16 %v2037, %v2029
    %v2662 = vpack.c.b16 %v2038, %v2030
    %v2663 = vpack.c.b16 %v2039, %v2031
    %v2664 = vpack.c.b16 %v2040, %v2032
    %v2665 = vpack.c.b16 %v2049, %v2041
    %v2666 = vpack.c.b16 %v2050, %v2042
    %v2667 = vpack.c.b16 %v2051, %v2043
    %v2668 = vpack.c.b16 %v2052, %v2044
    %v2669 = vpack.c.b16 %v2053, %v2045
    %v2670 = vpack.c.b16 %v2054, %v2046
    %v2671 = vpack.c.b16 %v2055, %v2047
    %v2672 = vpack.c.b16 %v2056, %v2048
    %v2673 = vpack.c.b16 %v2065, %v2057
    %v2674 = vpack.c.b16 %v2066, %v2058
    %v2675 = vpack.c.b16 %v2067, %v2059
    %v2676 = vpack.c.b16 %v2068, %v2060
    %v2677 = vpack.c.b16 %v2069, %v2061
    %v2678 = vpack.c.b16 %v2070, %v2062
    %v2679 = vpack.c.b16 %v2071, %v2063
    %v2680 = vpack.c.b16 %v2072, %v2064
    %v2681 = vpack.c.b16 %v2081, %v2073
    %v2682 = vpack.c.b16 %v2082, %v2074
    %v2683 = vpack.c.b16 %v2083, %v2075
    %v2684 = vpack.c.b16 %v2084, %v2076
    %v2685 = vpack.c.b16 %v2085, %v2077
    %v2686 = vpack.c.b16 %v2086, %v2078
    %v2687 = vpack.c.b16 %v2087, %v2079
    %v2688 = vpack.c.b16 %v2088, %v2080
    %v2689 = vpack.c.b16 %v2097, %v2089
    %v2690 = vpack.c.b16 %v2098, %v2090
    %v2691 = vpack.c.b16 %v2099, %v2091
    %v2692 = vpack.c.b16 %v2100, %v2092
    %v2693 = vpack.c.b16 %v2101, %v2093
    %v2694 = vpack.c.b16 %v2102, %v2094
    %v2695 = vpack.c.b16 %v2103, %v2095
    %v2696 = vpack.c.b16 %v2104, %v2096
    %v2697 = vpack.c.b16 %v2113, %v2105
    %v2698 = vpack.c.b16 %v2114, %v2106
    %v2699 = vpack.c.b16 %v2115, %v2107
    %v2700 = vpack.c.b16 %v2116, %v2108
    %v2701 = vpack.c.b16 %v2117, %v2109
    %v2702 = vpack.c.b16 %v2118, %v2110
    %v2703 = vpack.c.b16 %v2119, %v2111
    %v2704 = vpack.c.b16 %v2120, %v2112
    %v2705 = vpack.c.b16 %v2129, %v2121
    %v2706 = vpack.c.b16 %v2130, %v2122
    %v2707 = vpack.c.b16 %v2131, %v2123
    %v2708 = vpack.c.b16 %v2132, %v2124
    %v2709 = vpack.c.b16 %v2133, %v2125
    %v2710 = vpack.c.b16 %v2134, %v2126
    %v2711 = vpack.c.b16 %v2135, %v2127
    %v2712 = vpack.c.b16 %v2136, %v2128
    %v2713 = vpack.c.b16 %v2145, %v2137
    %v2714 = vpack.c.b16 %v2146, %v2138
    %v2715 = vpack.c.b16 %v2147, %v2139
    %v2716 = vpack.c.b16 %v2148, %v2140
    %v2717 = vpack.c.b16 %v2149, %v2141
    %v2718 = vpack.c.b16 %v2150, %v2142
    %v2719 = vpack.c.b16 %v2151, %v2143
    %v2720 = vpack.c.b16 %v2152, %v2144
    %v2721 = vpack.c.b16 %v2161, %v2153
    %v2722 = vpack.c.b16 %v2162, %v2154
    %v2723 = vpack.c.b16 %v2163, %v2155
    %v2724 = vpack.c.b16 %v2164, %v2156
    %v2725 = vpack.c.b16 %v2165, %v2157
    %v2726 = vpack.c.b16 %v2166, %v2158
    %v2727 = vpack.c.b16 %v2167, %v2159
    %v2728 = vpack.c.b16 %v2168, %v2160
    %v2729 = vpack.c.b16 %v2177, %v2169
    %v2730 = vpack.c.b16 %v2178, %v2170
    %v2731 = vpack.c.b16 %v2179, %v2171
    %v2732 = vpack.c.b16 %v2180, %v2172
    %v2733 = vpack.c.b16 %v2181, %v2173
    %v2734 = vpack.c.b16 %v2182, %v2174
    %v2735 = vpack.c.b16 %v2183, %v2175
    %v2736 = vpack.c.b16 %v2184, %v2176
    %v2737 = vpack.c.b16 %v2193, %v2185
    %v2738 = vpack.c.b16 %v2194, %v2186
    %v2739 = vpack.c.b16 %v2195, %v2187
    %v2740 = vpack.c.b16 %v2196, %v2188
    %v2741 = vpack.c.b16 %v2197, %v2189
    %v2742 = vpack.c.b16 %v2198, %v2190
    %v2743 = vpack.c.b16 %v2199, %v2191
    %v2744 = vpack.c.b16 %v2200, %v2192
    %v2745 = vpack.c.b16 %v2209, %v2201
    %v2746 = vpack.c.b16 %v2210, %v2202
    %v2747 = vpack.c.b16 %v2211, %v2203
    %v2748 = vpack.c.b16 %v2212, %v2204
    %v2749 = vpack.c.b16 %v2213, %v2205
    %v2750 = vpack.c.b16 %v2214, %v2206
    %v2751 = vpack.c.b16 %v2215, %v2207
    %v2752 = vpack.c.b16 %v2216, %v2208
    %v2753 = vpack.c.b16 %v2225, %v2217
    %v2754 = vpack.c.b16 %v2226, %v2218
    %v2755 = vpack.c.b16 %v2227, %v2219
    %v2756 = vpack.c.b16 %v2228, %v2220
    %v2757 = vpack.c.b16 %v2229, %v2221
    %v2758 = vpack.c.b16 %v2230, %v2222
    %v2759 = vpack.c.b16 %v2231, %v2223
    %v2760 = vpack.c.b16 %v2232, %v2224
    %v2761 = vpack.c.b16 %v2241, %v2233
    %v2762 = vpack.c.b16 %v2242, %v2234
    %v2763 = vpack.c.b16 %v2243, %v2235
    %v2764 = vpack.c.b16 %v2244, %v2236
    %v2765 = vpack.c.b16 %v2245, %v2237
    %v2766 = vpack.c.b16 %v2246, %v2238
    %v2767 = vpack.c.b16 %v2247, %v2239
    %v2768 = vpack.c.b16 %v2248, %v2240
    %v2769 = vpack.c.b16 %v2257, %v2249
    %v2770 = vpack.c.b16 %v2258, %v2250
    %v2771 = vpack.c.b16 %v2259, %v2251
    %v2772 = vpack.c.b16 %v2260, %v2252
    %v2773 = vpack.c.b16 %v2261, %v2253
    %v2774 = vpack.c.b16 %v2262, %v2254
    %v2775 = vpack.c.b16 %v2263, %v2255
    %v2776 = vpack.c.b16 %v2264, %v2256
    %3289 = vmatpush.bf16.msra.mxu0 %v2321
    %3290 = vmatpush.bf16.msra.mxu0 %v2313
    %3291 = vmatpush.bf16.msra.mxu0 %v2305
    %3292 = vmatpush.bf16.msra.mxu0 %v2297
    %3293 = vmatpush.bf16.msra.mxu0 %v2289
    %3294 = vmatpush.bf16.msra.mxu0 %v2281
    %3295 = vmatpush.bf16.msra.mxu0 %v2273
    %3296 = vmatpush.bf16.msra.mxu0 %v2265
    %3297 = vmatmul.bf16.gmra.mxu0 %v713
    %v3298 = vpop.f32.mrf.mxu0
    %v3299 = vadd.f32 %v673, %v3298
    %v3300 = vpop.f32.mrf.mxu0
    %v3301 = vadd.f32 %v673, %v3300
    %3302 = vdwg.mxu0
    %3303 = vmatpush.bf16.msra.mxu0 %v2385
    %3304 = vmatpush.bf16.msra.mxu0 %v2377
    %3305 = vmatpush.bf16.msra.mxu0 %v2369
    %3306 = vmatpush.bf16.msra.mxu0 %v2361
    %3307 = vmatpush.bf16.msra.mxu0 %v2353
    %3308 = vmatpush.bf16.msra.mxu0 %v2345
    %3309 = vmatpush.bf16.msra.mxu0 %v2337
    %3310 = vmatpush.bf16.msra.mxu0 %v2329
    %3311 = vmatmul.bf16.gmra.mxu0 %v714
    %v3312 = vpop.f32.mrf.mxu0
    %v3313 = vadd.f32 %v3299, %v3312
    %v3314 = vpop.f32.mrf.mxu0
    %v3315 = vadd.f32 %v3301, %v3314
    %3316 = vdwg.mxu0
    %3317 = vmatpush.bf16.msra.mxu0 %v2449
    %3318 = vmatpush.bf16.msra.mxu0 %v2441
    %3319 = vmatpush.bf16.msra.mxu0 %v2433
    %3320 = vmatpush.bf16.msra.mxu0 %v2425
    %3321 = vmatpush.bf16.msra.mxu0 %v2417
    %3322 = vmatpush.bf16.msra.mxu0 %v2409
    %3323 = vmatpush.bf16.msra.mxu0 %v2401
    %3324 = vmatpush.bf16.msra.mxu0 %v2393
    %3325 = vmatmul.bf16.gmra.mxu0 %v715
    %v3326 = vpop.f32.mrf.mxu0
    %v3327 = vadd.f32 %v3313, %v3326
    %v3328 = vpop.f32.mrf.mxu0
    %v3329 = vadd.f32 %v3315, %v3328
    %3330 = vdwg.mxu0
    %3331 = vmatpush.bf16.msra.mxu0 %v2513
    %3332 = vmatpush.bf16.msra.mxu0 %v2505
    %3333 = vmatpush.bf16.msra.mxu0 %v2497
    %3334 = vmatpush.bf16.msra.mxu0 %v2489
    %3335 = vmatpush.bf16.msra.mxu0 %v2481
    %3336 = vmatpush.bf16.msra.mxu0 %v2473
    %3337 = vmatpush.bf16.msra.mxu0 %v2465
    %3338 = vmatpush.bf16.msra.mxu0 %v2457
    %3339 = vmatmul.bf16.gmra.mxu0 %v716
    %v3340 = vpop.f32.mrf.mxu0
    %v3341 = vadd.f32 %v3327, %v3340
    %v3342 = vpop.f32.mrf.mxu0
    %v3343 = vadd.f32 %v3329, %v3342
    %3344 = vdwg.mxu0
    %3345 = vmatpush.bf16.msra.mxu0 %v2577
    %3346 = vmatpush.bf16.msra.mxu0 %v2569
    %3347 = vmatpush.bf16.msra.mxu0 %v2561
    %3348 = vmatpush.bf16.msra.mxu0 %v2553
    %3349 = vmatpush.bf16.msra.mxu0 %v2545
    %3350 = vmatpush.bf16.msra.mxu0 %v2537
    %3351 = vmatpush.bf16.msra.mxu0 %v2529
    %3352 = vmatpush.bf16.msra.mxu0 %v2521
    %3353 = vmatmul.bf16.gmra.mxu0 %v717
    %v3354 = vpop.f32.mrf.mxu0
    %v3355 = vadd.f32 %v3341, %v3354
    %v3356 = vpop.f32.mrf.mxu0
    %v3357 = vadd.f32 %v3343, %v3356
    %3358 = vdwg.mxu0
    %3359 = vmatpush.bf16.msra.mxu0 %v2641
    %3360 = vmatpush.bf16.msra.mxu0 %v2633
    %3361 = vmatpush.bf16.msra.mxu0 %v2625
    %3362 = vmatpush.bf16.msra.mxu0 %v2617
    %3363 = vmatpush.bf16.msra.mxu0 %v2609
    %3364 = vmatpush.bf16.msra.mxu0 %v2601
    %3365 = vmatpush.bf16.msra.mxu0 %v2593
    %3366 = vmatpush.bf16.msra.mxu0 %v2585
    %3367 = vmatmul.bf16.gmra.mxu0 %v718
    %v3368 = vpop.f32.mrf.mxu0
    %v3369 = vadd.f32 %v3355, %v3368
    %v3370 = vpop.f32.mrf.mxu0
    %v3371 = vadd.f32 %v3357, %v3370
    %3372 = vdwg.mxu0
    %3373 = vmatpush.bf16.msra.mxu0 %v2705
    %3374 = vmatpush.bf16.msra.mxu0 %v2697
    %3375 = vmatpush.bf16.msra.mxu0 %v2689
    %3376 = vmatpush.bf16.msra.mxu0 %v2681
    %3377 = vmatpush.bf16.msra.mxu0 %v2673
    %3378 = vmatpush.bf16.msra.mxu0 %v2665
    %3379 = vmatpush.bf16.msra.mxu0 %v2657
    %3380 = vmatpush.bf16.msra.mxu0 %v2649
    %3381 = vmatmul.bf16.gmra.mxu0 %v719
    %v3382 = vpop.f32.mrf.mxu0
    %v3383 = vadd.f32 %v3369, %v3382
    %v3384 = vpop.f32.mrf.mxu0
    %v3385 = vadd.f32 %v3371, %v3384
    %3386 = vdwg.mxu0
    %3387 = vmatpush.bf16.msra.mxu0 %v2769
    %3388 = vmatpush.bf16.msra.mxu0 %v2761
    %3389 = vmatpush.bf16.msra.mxu0 %v2753
    %3390 = vmatpush.bf16.msra.mxu0 %v2745
    %3391 = vmatpush.bf16.msra.mxu0 %v2737
    %3392 = vmatpush.bf16.msra.mxu0 %v2729
    %3393 = vmatpush.bf16.msra.mxu0 %v2721
    %3394 = vmatpush.bf16.msra.mxu0 %v2713
    %3395 = vmatmul.bf16.gmra.mxu0 %v720
    %v3396 = vpop.f32.mrf.mxu0
    %v3397 = vadd.f32 %v3383, %v3396
    %v3398 = vpop.f32.mrf.mxu0
    %v3399 = vadd.f32 %v3385, %v3398
    %3400 = vdwg.mxu0
    %3401 = vmatpush.bf16.msra.mxu0 %v2322
    %3402 = vmatpush.bf16.msra.mxu0 %v2314
    %3403 = vmatpush.bf16.msra.mxu0 %v2306
    %3404 = vmatpush.bf16.msra.mxu0 %v2298
    %3405 = vmatpush.bf16.msra.mxu0 %v2290
    %3406 = vmatpush.bf16.msra.mxu0 %v2282
    %3407 = vmatpush.bf16.msra.mxu0 %v2274
    %3408 = vmatpush.bf16.msra.mxu0 %v2266
    %3409 = vmatmul.bf16.gmra.mxu0 %v713
    %v3410 = vpop.f32.mrf.mxu0
    %v3411 = vadd.f32 %v674, %v3410
    %v3412 = vpop.f32.mrf.mxu0
    %v3413 = vadd.f32 %v674, %v3412
    %3414 = vdwg.mxu0
    %3415 = vmatpush.bf16.msra.mxu0 %v2386
    %3416 = vmatpush.bf16.msra.mxu0 %v2378
    %3417 = vmatpush.bf16.msra.mxu0 %v2370
    %3418 = vmatpush.bf16.msra.mxu0 %v2362
    %3419 = vmatpush.bf16.msra.mxu0 %v2354
    %3420 = vmatpush.bf16.msra.mxu0 %v2346
    %3421 = vmatpush.bf16.msra.mxu0 %v2338
    %3422 = vmatpush.bf16.msra.mxu0 %v2330
    %3423 = vmatmul.bf16.gmra.mxu0 %v714
    %v3424 = vpop.f32.mrf.mxu0
    %v3425 = vadd.f32 %v3411, %v3424
    %v3426 = vpop.f32.mrf.mxu0
    %v3427 = vadd.f32 %v3413, %v3426
    %3428 = vdwg.mxu0
    %3429 = vmatpush.bf16.msra.mxu0 %v2450
    %3430 = vmatpush.bf16.msra.mxu0 %v2442
    %3431 = vmatpush.bf16.msra.mxu0 %v2434
    %3432 = vmatpush.bf16.msra.mxu0 %v2426
    %3433 = vmatpush.bf16.msra.mxu0 %v2418
    %3434 = vmatpush.bf16.msra.mxu0 %v2410
    %3435 = vmatpush.bf16.msra.mxu0 %v2402
    %3436 = vmatpush.bf16.msra.mxu0 %v2394
    %3437 = vmatmul.bf16.gmra.mxu0 %v715
    %v3438 = vpop.f32.mrf.mxu0
    %v3439 = vadd.f32 %v3425, %v3438
    %v3440 = vpop.f32.mrf.mxu0
    %v3441 = vadd.f32 %v3427, %v3440
    %3442 = vdwg.mxu0
    %3443 = vmatpush.bf16.msra.mxu0 %v2514
    %3444 = vmatpush.bf16.msra.mxu0 %v2506
    %3445 = vmatpush.bf16.msra.mxu0 %v2498
    %3446 = vmatpush.bf16.msra.mxu0 %v2490
    %3447 = vmatpush.bf16.msra.mxu0 %v2482
    %3448 = vmatpush.bf16.msra.mxu0 %v2474
    %3449 = vmatpush.bf16.msra.mxu0 %v2466
    %3450 = vmatpush.bf16.msra.mxu0 %v2458
    %3451 = vmatmul.bf16.gmra.mxu0 %v716
    %v3452 = vpop.f32.mrf.mxu0
    %v3453 = vadd.f32 %v3439, %v3452
    %v3454 = vpop.f32.mrf.mxu0
    %v3455 = vadd.f32 %v3441, %v3454
    %3456 = vdwg.mxu0
    %3457 = vmatpush.bf16.msra.mxu0 %v2578
    %3458 = vmatpush.bf16.msra.mxu0 %v2570
    %3459 = vmatpush.bf16.msra.mxu0 %v2562
    %3460 = vmatpush.bf16.msra.mxu0 %v2554
    %3461 = vmatpush.bf16.msra.mxu0 %v2546
    %3462 = vmatpush.bf16.msra.mxu0 %v2538
    %3463 = vmatpush.bf16.msra.mxu0 %v2530
    %3464 = vmatpush.bf16.msra.mxu0 %v2522
    %3465 = vmatmul.bf16.gmra.mxu0 %v717
    %v3466 = vpop.f32.mrf.mxu0
    %v3467 = vadd.f32 %v3453, %v3466
    %v3468 = vpop.f32.mrf.mxu0
    %v3469 = vadd.f32 %v3455, %v3468
    %3470 = vdwg.mxu0
    %3471 = vmatpush.bf16.msra.mxu0 %v2642
    %3472 = vmatpush.bf16.msra.mxu0 %v2634
    %3473 = vmatpush.bf16.msra.mxu0 %v2626
    %3474 = vmatpush.bf16.msra.mxu0 %v2618
    %3475 = vmatpush.bf16.msra.mxu0 %v2610
    %3476 = vmatpush.bf16.msra.mxu0 %v2602
    %3477 = vmatpush.bf16.msra.mxu0 %v2594
    %3478 = vmatpush.bf16.msra.mxu0 %v2586
    %3479 = vmatmul.bf16.gmra.mxu0 %v718
    %v3480 = vpop.f32.mrf.mxu0
    %v3481 = vadd.f32 %v3467, %v3480
    %v3482 = vpop.f32.mrf.mxu0
    %v3483 = vadd.f32 %v3469, %v3482
    %3484 = vdwg.mxu0
    %3485 = vmatpush.bf16.msra.mxu0 %v2706
    %3486 = vmatpush.bf16.msra.mxu0 %v2698
    %3487 = vmatpush.bf16.msra.mxu0 %v2690
    %3488 = vmatpush.bf16.msra.mxu0 %v2682
    %3489 = vmatpush.bf16.msra.mxu0 %v2674
    %3490 = vmatpush.bf16.msra.mxu0 %v2666
    %3491 = vmatpush.bf16.msra.mxu0 %v2658
    %3492 = vmatpush.bf16.msra.mxu0 %v2650
    %3493 = vmatmul.bf16.gmra.mxu0 %v719
    %v3494 = vpop.f32.mrf.mxu0
    %v3495 = vadd.f32 %v3481, %v3494
    %v3496 = vpop.f32.mrf.mxu0
    %v3497 = vadd.f32 %v3483, %v3496
    %3498 = vdwg.mxu0
    %3499 = vmatpush.bf16.msra.mxu0 %v2770
    %3500 = vmatpush.bf16.msra.mxu0 %v2762
    %3501 = vmatpush.bf16.msra.mxu0 %v2754
    %3502 = vmatpush.bf16.msra.mxu0 %v2746
    %3503 = vmatpush.bf16.msra.mxu0 %v2738
    %3504 = vmatpush.bf16.msra.mxu0 %v2730
    %3505 = vmatpush.bf16.msra.mxu0 %v2722
    %3506 = vmatpush.bf16.msra.mxu0 %v2714
    %3507 = vmatmul.bf16.gmra.mxu0 %v720
    %v3508 = vpop.f32.mrf.mxu0
    %v3509 = vadd.f32 %v3495, %v3508
    %v3510 = vpop.f32.mrf.mxu0
    %v3511 = vadd.f32 %v3497, %v3510
    %3512 = vdwg.mxu0
    %3513 = vmatpush.bf16.msra.mxu0 %v2323
    %3514 = vmatpush.bf16.msra.mxu0 %v2315
    %3515 = vmatpush.bf16.msra.mxu0 %v2307
    %3516 = vmatpush.bf16.msra.mxu0 %v2299
    %3517 = vmatpush.bf16.msra.mxu0 %v2291
    %3518 = vmatpush.bf16.msra.mxu0 %v2283
    %3519 = vmatpush.bf16.msra.mxu0 %v2275
    %3520 = vmatpush.bf16.msra.mxu0 %v2267
    %3521 = vmatmul.bf16.gmra.mxu0 %v713
    %v3522 = vpop.f32.mrf.mxu0
    %v3523 = vadd.f32 %v675, %v3522
    %v3524 = vpop.f32.mrf.mxu0
    %v3525 = vadd.f32 %v675, %v3524
    %3526 = vdwg.mxu0
    %3527 = vmatpush.bf16.msra.mxu0 %v2387
    %3528 = vmatpush.bf16.msra.mxu0 %v2379
    %3529 = vmatpush.bf16.msra.mxu0 %v2371
    %3530 = vmatpush.bf16.msra.mxu0 %v2363
    %3531 = vmatpush.bf16.msra.mxu0 %v2355
    %3532 = vmatpush.bf16.msra.mxu0 %v2347
    %3533 = vmatpush.bf16.msra.mxu0 %v2339
    %3534 = vmatpush.bf16.msra.mxu0 %v2331
    %3535 = vmatmul.bf16.gmra.mxu0 %v714
    %v3536 = vpop.f32.mrf.mxu0
    %v3537 = vadd.f32 %v3523, %v3536
    %v3538 = vpop.f32.mrf.mxu0
    %v3539 = vadd.f32 %v3525, %v3538
    %3540 = vdwg.mxu0
    %3541 = vmatpush.bf16.msra.mxu0 %v2451
    %3542 = vmatpush.bf16.msra.mxu0 %v2443
    %3543 = vmatpush.bf16.msra.mxu0 %v2435
    %3544 = vmatpush.bf16.msra.mxu0 %v2427
    %3545 = vmatpush.bf16.msra.mxu0 %v2419
    %3546 = vmatpush.bf16.msra.mxu0 %v2411
    %3547 = vmatpush.bf16.msra.mxu0 %v2403
    %3548 = vmatpush.bf16.msra.mxu0 %v2395
    %3549 = vmatmul.bf16.gmra.mxu0 %v715
    %v3550 = vpop.f32.mrf.mxu0
    %v3551 = vadd.f32 %v3537, %v3550
    %v3552 = vpop.f32.mrf.mxu0
    %v3553 = vadd.f32 %v3539, %v3552
    %3554 = vdwg.mxu0
    %3555 = vmatpush.bf16.msra.mxu0 %v2515
    %3556 = vmatpush.bf16.msra.mxu0 %v2507
    %3557 = vmatpush.bf16.msra.mxu0 %v2499
    %3558 = vmatpush.bf16.msra.mxu0 %v2491
    %3559 = vmatpush.bf16.msra.mxu0 %v2483
    %3560 = vmatpush.bf16.msra.mxu0 %v2475
    %3561 = vmatpush.bf16.msra.mxu0 %v2467
    %3562 = vmatpush.bf16.msra.mxu0 %v2459
    %3563 = vmatmul.bf16.gmra.mxu0 %v716
    %v3564 = vpop.f32.mrf.mxu0
    %v3565 = vadd.f32 %v3551, %v3564
    %v3566 = vpop.f32.mrf.mxu0
    %v3567 = vadd.f32 %v3553, %v3566
    %3568 = vdwg.mxu0
    %3569 = vmatpush.bf16.msra.mxu0 %v2579
    %3570 = vmatpush.bf16.msra.mxu0 %v2571
    %3571 = vmatpush.bf16.msra.mxu0 %v2563
    %3572 = vmatpush.bf16.msra.mxu0 %v2555
    %3573 = vmatpush.bf16.msra.mxu0 %v2547
    %3574 = vmatpush.bf16.msra.mxu0 %v2539
    %3575 = vmatpush.bf16.msra.mxu0 %v2531
    %3576 = vmatpush.bf16.msra.mxu0 %v2523
    %3577 = vmatmul.bf16.gmra.mxu0 %v717
    %v3578 = vpop.f32.mrf.mxu0
    %v3579 = vadd.f32 %v3565, %v3578
    %v3580 = vpop.f32.mrf.mxu0
    %v3581 = vadd.f32 %v3567, %v3580
    %3582 = vdwg.mxu0
    %3583 = vmatpush.bf16.msra.mxu0 %v2643
    %3584 = vmatpush.bf16.msra.mxu0 %v2635
    %3585 = vmatpush.bf16.msra.mxu0 %v2627
    %3586 = vmatpush.bf16.msra.mxu0 %v2619
    %3587 = vmatpush.bf16.msra.mxu0 %v2611
    %3588 = vmatpush.bf16.msra.mxu0 %v2603
    %3589 = vmatpush.bf16.msra.mxu0 %v2595
    %3590 = vmatpush.bf16.msra.mxu0 %v2587
    %3591 = vmatmul.bf16.gmra.mxu0 %v718
    %v3592 = vpop.f32.mrf.mxu0
    %v3593 = vadd.f32 %v3579, %v3592
    %v3594 = vpop.f32.mrf.mxu0
    %v3595 = vadd.f32 %v3581, %v3594
    %3596 = vdwg.mxu0
    %3597 = vmatpush.bf16.msra.mxu0 %v2707
    %3598 = vmatpush.bf16.msra.mxu0 %v2699
    %3599 = vmatpush.bf16.msra.mxu0 %v2691
    %3600 = vmatpush.bf16.msra.mxu0 %v2683
    %3601 = vmatpush.bf16.msra.mxu0 %v2675
    %3602 = vmatpush.bf16.msra.mxu0 %v2667
    %3603 = vmatpush.bf16.msra.mxu0 %v2659
    %3604 = vmatpush.bf16.msra.mxu0 %v2651
    %3605 = vmatmul.bf16.gmra.mxu0 %v719
    %v3606 = vpop.f32.mrf.mxu0
    %v3607 = vadd.f32 %v3593, %v3606
    %v3608 = vpop.f32.mrf.mxu0
    %v3609 = vadd.f32 %v3595, %v3608
    %3610 = vdwg.mxu0
    %3611 = vmatpush.bf16.msra.mxu0 %v2771
    %3612 = vmatpush.bf16.msra.mxu0 %v2763
    %3613 = vmatpush.bf16.msra.mxu0 %v2755
    %3614 = vmatpush.bf16.msra.mxu0 %v2747
    %3615 = vmatpush.bf16.msra.mxu0 %v2739
    %3616 = vmatpush.bf16.msra.mxu0 %v2731
    %3617 = vmatpush.bf16.msra.mxu0 %v2723
    %3618 = vmatpush.bf16.msra.mxu0 %v2715
    %3619 = vmatmul.bf16.gmra.mxu0 %v720
    %v3620 = vpop.f32.mrf.mxu0
    %v3621 = vadd.f32 %v3607, %v3620
    %v3622 = vpop.f32.mrf.mxu0
    %v3623 = vadd.f32 %v3609, %v3622
    %3624 = vdwg.mxu0
    %3625 = vmatpush.bf16.msra.mxu0 %v2324
    %3626 = vmatpush.bf16.msra.mxu0 %v2316
    %3627 = vmatpush.bf16.msra.mxu0 %v2308
    %3628 = vmatpush.bf16.msra.mxu0 %v2300
    %3629 = vmatpush.bf16.msra.mxu0 %v2292
    %3630 = vmatpush.bf16.msra.mxu0 %v2284
    %3631 = vmatpush.bf16.msra.mxu0 %v2276
    %3632 = vmatpush.bf16.msra.mxu0 %v2268
    %3633 = vmatmul.bf16.gmra.mxu0 %v713
    %v3634 = vpop.f32.mrf.mxu0
    %v3635 = vadd.f32 %v676, %v3634
    %v3636 = vpop.f32.mrf.mxu0
    %v3637 = vadd.f32 %v676, %v3636
    %3638 = vdwg.mxu0
    %3639 = vmatpush.bf16.msra.mxu0 %v2388
    %3640 = vmatpush.bf16.msra.mxu0 %v2380
    %3641 = vmatpush.bf16.msra.mxu0 %v2372
    %3642 = vmatpush.bf16.msra.mxu0 %v2364
    %3643 = vmatpush.bf16.msra.mxu0 %v2356
    %3644 = vmatpush.bf16.msra.mxu0 %v2348
    %3645 = vmatpush.bf16.msra.mxu0 %v2340
    %3646 = vmatpush.bf16.msra.mxu0 %v2332
    %3647 = vmatmul.bf16.gmra.mxu0 %v714
    %v3648 = vpop.f32.mrf.mxu0
    %v3649 = vadd.f32 %v3635, %v3648
    %v3650 = vpop.f32.mrf.mxu0
    %v3651 = vadd.f32 %v3637, %v3650
    %3652 = vdwg.mxu0
    %3653 = vmatpush.bf16.msra.mxu0 %v2452
    %3654 = vmatpush.bf16.msra.mxu0 %v2444
    %3655 = vmatpush.bf16.msra.mxu0 %v2436
    %3656 = vmatpush.bf16.msra.mxu0 %v2428
    %3657 = vmatpush.bf16.msra.mxu0 %v2420
    %3658 = vmatpush.bf16.msra.mxu0 %v2412
    %3659 = vmatpush.bf16.msra.mxu0 %v2404
    %3660 = vmatpush.bf16.msra.mxu0 %v2396
    %3661 = vmatmul.bf16.gmra.mxu0 %v715
    %v3662 = vpop.f32.mrf.mxu0
    %v3663 = vadd.f32 %v3649, %v3662
    %v3664 = vpop.f32.mrf.mxu0
    %v3665 = vadd.f32 %v3651, %v3664
    %3666 = vdwg.mxu0
    %3667 = vmatpush.bf16.msra.mxu0 %v2516
    %3668 = vmatpush.bf16.msra.mxu0 %v2508
    %3669 = vmatpush.bf16.msra.mxu0 %v2500
    %3670 = vmatpush.bf16.msra.mxu0 %v2492
    %3671 = vmatpush.bf16.msra.mxu0 %v2484
    %3672 = vmatpush.bf16.msra.mxu0 %v2476
    %3673 = vmatpush.bf16.msra.mxu0 %v2468
    %3674 = vmatpush.bf16.msra.mxu0 %v2460
    %3675 = vmatmul.bf16.gmra.mxu0 %v716
    %v3676 = vpop.f32.mrf.mxu0
    %v3677 = vadd.f32 %v3663, %v3676
    %v3678 = vpop.f32.mrf.mxu0
    %v3679 = vadd.f32 %v3665, %v3678
    %3680 = vdwg.mxu0
    %3681 = vmatpush.bf16.msra.mxu0 %v2580
    %3682 = vmatpush.bf16.msra.mxu0 %v2572
    %3683 = vmatpush.bf16.msra.mxu0 %v2564
    %3684 = vmatpush.bf16.msra.mxu0 %v2556
    %3685 = vmatpush.bf16.msra.mxu0 %v2548
    %3686 = vmatpush.bf16.msra.mxu0 %v2540
    %3687 = vmatpush.bf16.msra.mxu0 %v2532
    %3688 = vmatpush.bf16.msra.mxu0 %v2524
    %3689 = vmatmul.bf16.gmra.mxu0 %v717
    %v3690 = vpop.f32.mrf.mxu0
    %v3691 = vadd.f32 %v3677, %v3690
    %v3692 = vpop.f32.mrf.mxu0
    %v3693 = vadd.f32 %v3679, %v3692
    %3694 = vdwg.mxu0
    %3695 = vmatpush.bf16.msra.mxu0 %v2644
    %3696 = vmatpush.bf16.msra.mxu0 %v2636
    %3697 = vmatpush.bf16.msra.mxu0 %v2628
    %3698 = vmatpush.bf16.msra.mxu0 %v2620
    %3699 = vmatpush.bf16.msra.mxu0 %v2612
    %3700 = vmatpush.bf16.msra.mxu0 %v2604
    %3701 = vmatpush.bf16.msra.mxu0 %v2596
    %3702 = vmatpush.bf16.msra.mxu0 %v2588
    %3703 = vmatmul.bf16.gmra.mxu0 %v718
    %v3704 = vpop.f32.mrf.mxu0
    %v3705 = vadd.f32 %v3691, %v3704
    %v3706 = vpop.f32.mrf.mxu0
    %v3707 = vadd.f32 %v3693, %v3706
    %3708 = vdwg.mxu0
    %3709 = vmatpush.bf16.msra.mxu0 %v2708
    %3710 = vmatpush.bf16.msra.mxu0 %v2700
    %3711 = vmatpush.bf16.msra.mxu0 %v2692
    %3712 = vmatpush.bf16.msra.mxu0 %v2684
    %3713 = vmatpush.bf16.msra.mxu0 %v2676
    %3714 = vmatpush.bf16.msra.mxu0 %v2668
    %3715 = vmatpush.bf16.msra.mxu0 %v2660
    %3716 = vmatpush.bf16.msra.mxu0 %v2652
    %3717 = vmatmul.bf16.gmra.mxu0 %v719
    %v3718 = vpop.f32.mrf.mxu0
    %v3719 = vadd.f32 %v3705, %v3718
    %v3720 = vpop.f32.mrf.mxu0
    %v3721 = vadd.f32 %v3707, %v3720
    %3722 = vdwg.mxu0
    %3723 = vmatpush.bf16.msra.mxu0 %v2772
    %3724 = vmatpush.bf16.msra.mxu0 %v2764
    %3725 = vmatpush.bf16.msra.mxu0 %v2756
    %3726 = vmatpush.bf16.msra.mxu0 %v2748
    %3727 = vmatpush.bf16.msra.mxu0 %v2740
    %3728 = vmatpush.bf16.msra.mxu0 %v2732
    %3729 = vmatpush.bf16.msra.mxu0 %v2724
    %3730 = vmatpush.bf16.msra.mxu0 %v2716
    %3731 = vmatmul.bf16.gmra.mxu0 %v720
    %v3732 = vpop.f32.mrf.mxu0
    %v3733 = vadd.f32 %v3719, %v3732
    %v3734 = vpop.f32.mrf.mxu0
    %v3735 = vadd.f32 %v3721, %v3734
    %3736 = vdwg.mxu0
    %3737 = vmatpush.bf16.msra.mxu0 %v2325
    %3738 = vmatpush.bf16.msra.mxu0 %v2317
    %3739 = vmatpush.bf16.msra.mxu0 %v2309
    %3740 = vmatpush.bf16.msra.mxu0 %v2301
    %3741 = vmatpush.bf16.msra.mxu0 %v2293
    %3742 = vmatpush.bf16.msra.mxu0 %v2285
    %3743 = vmatpush.bf16.msra.mxu0 %v2277
    %3744 = vmatpush.bf16.msra.mxu0 %v2269
    %3745 = vmatmul.bf16.gmra.mxu0 %v713
    %v3746 = vpop.f32.mrf.mxu0
    %v3747 = vadd.f32 %v677, %v3746
    %v3748 = vpop.f32.mrf.mxu0
    %v3749 = vadd.f32 %v677, %v3748
    %3750 = vdwg.mxu0
    %3751 = vmatpush.bf16.msra.mxu0 %v2389
    %3752 = vmatpush.bf16.msra.mxu0 %v2381
    %3753 = vmatpush.bf16.msra.mxu0 %v2373
    %3754 = vmatpush.bf16.msra.mxu0 %v2365
    %3755 = vmatpush.bf16.msra.mxu0 %v2357
    %3756 = vmatpush.bf16.msra.mxu0 %v2349
    %3757 = vmatpush.bf16.msra.mxu0 %v2341
    %3758 = vmatpush.bf16.msra.mxu0 %v2333
    %3759 = vmatmul.bf16.gmra.mxu0 %v714
    %v3760 = vpop.f32.mrf.mxu0
    %v3761 = vadd.f32 %v3747, %v3760
    %v3762 = vpop.f32.mrf.mxu0
    %v3763 = vadd.f32 %v3749, %v3762
    %3764 = vdwg.mxu0
    %3765 = vmatpush.bf16.msra.mxu0 %v2453
    %3766 = vmatpush.bf16.msra.mxu0 %v2445
    %3767 = vmatpush.bf16.msra.mxu0 %v2437
    %3768 = vmatpush.bf16.msra.mxu0 %v2429
    %3769 = vmatpush.bf16.msra.mxu0 %v2421
    %3770 = vmatpush.bf16.msra.mxu0 %v2413
    %3771 = vmatpush.bf16.msra.mxu0 %v2405
    %3772 = vmatpush.bf16.msra.mxu0 %v2397
    %3773 = vmatmul.bf16.gmra.mxu0 %v715
    %v3774 = vpop.f32.mrf.mxu0
    %v3775 = vadd.f32 %v3761, %v3774
    %v3776 = vpop.f32.mrf.mxu0
    %v3777 = vadd.f32 %v3763, %v3776
    %3778 = vdwg.mxu0
    %3779 = vmatpush.bf16.msra.mxu0 %v2517
    %3780 = vmatpush.bf16.msra.mxu0 %v2509
    %3781 = vmatpush.bf16.msra.mxu0 %v2501
    %3782 = vmatpush.bf16.msra.mxu0 %v2493
    %3783 = vmatpush.bf16.msra.mxu0 %v2485
    %3784 = vmatpush.bf16.msra.mxu0 %v2477
    %3785 = vmatpush.bf16.msra.mxu0 %v2469
    %3786 = vmatpush.bf16.msra.mxu0 %v2461
    %3787 = vmatmul.bf16.gmra.mxu0 %v716
    %v3788 = vpop.f32.mrf.mxu0
    %v3789 = vadd.f32 %v3775, %v3788
    %v3790 = vpop.f32.mrf.mxu0
    %v3791 = vadd.f32 %v3777, %v3790
    %3792 = vdwg.mxu0
    %3793 = vmatpush.bf16.msra.mxu0 %v2581
    %3794 = vmatpush.bf16.msra.mxu0 %v2573
    %3795 = vmatpush.bf16.msra.mxu0 %v2565
    %3796 = vmatpush.bf16.msra.mxu0 %v2557
    %3797 = vmatpush.bf16.msra.mxu0 %v2549
    %3798 = vmatpush.bf16.msra.mxu0 %v2541
    %3799 = vmatpush.bf16.msra.mxu0 %v2533
    %3800 = vmatpush.bf16.msra.mxu0 %v2525
    %3801 = vmatmul.bf16.gmra.mxu0 %v717
    %v3802 = vpop.f32.mrf.mxu0
    %v3803 = vadd.f32 %v3789, %v3802
    %v3804 = vpop.f32.mrf.mxu0
    %v3805 = vadd.f32 %v3791, %v3804
    %3806 = vdwg.mxu0
    %3807 = vmatpush.bf16.msra.mxu0 %v2645
    %3808 = vmatpush.bf16.msra.mxu0 %v2637
    %3809 = vmatpush.bf16.msra.mxu0 %v2629
    %3810 = vmatpush.bf16.msra.mxu0 %v2621
    %3811 = vmatpush.bf16.msra.mxu0 %v2613
    %3812 = vmatpush.bf16.msra.mxu0 %v2605
    %3813 = vmatpush.bf16.msra.mxu0 %v2597
    %3814 = vmatpush.bf16.msra.mxu0 %v2589
    %3815 = vmatmul.bf16.gmra.mxu0 %v718
    %v3816 = vpop.f32.mrf.mxu0
    %v3817 = vadd.f32 %v3803, %v3816
    %v3818 = vpop.f32.mrf.mxu0
    %v3819 = vadd.f32 %v3805, %v3818
    %3820 = vdwg.mxu0
    %3821 = vmatpush.bf16.msra.mxu0 %v2709
    %3822 = vmatpush.bf16.msra.mxu0 %v2701
    %3823 = vmatpush.bf16.msra.mxu0 %v2693
    %3824 = vmatpush.bf16.msra.mxu0 %v2685
    %3825 = vmatpush.bf16.msra.mxu0 %v2677
    %3826 = vmatpush.bf16.msra.mxu0 %v2669
    %3827 = vmatpush.bf16.msra.mxu0 %v2661
    %3828 = vmatpush.bf16.msra.mxu0 %v2653
    %3829 = vmatmul.bf16.gmra.mxu0 %v719
    %v3830 = vpop.f32.mrf.mxu0
    %v3831 = vadd.f32 %v3817, %v3830
    %v3832 = vpop.f32.mrf.mxu0
    %v3833 = vadd.f32 %v3819, %v3832
    %3834 = vdwg.mxu0
    %3835 = vmatpush.bf16.msra.mxu0 %v2773
    %3836 = vmatpush.bf16.msra.mxu0 %v2765
    %3837 = vmatpush.bf16.msra.mxu0 %v2757
    %3838 = vmatpush.bf16.msra.mxu0 %v2749
    %3839 = vmatpush.bf16.msra.mxu0 %v2741
    %3840 = vmatpush.bf16.msra.mxu0 %v2733
    %3841 = vmatpush.bf16.msra.mxu0 %v2725
    %3842 = vmatpush.bf16.msra.mxu0 %v2717
    %3843 = vmatmul.bf16.gmra.mxu0 %v720
    %v3844 = vpop.f32.mrf.mxu0
    %v3845 = vadd.f32 %v3831, %v3844
    %v3846 = vpop.f32.mrf.mxu0
    %v3847 = vadd.f32 %v3833, %v3846
    %3848 = vdwg.mxu0
    %3849 = vmatpush.bf16.msra.mxu0 %v2326
    %3850 = vmatpush.bf16.msra.mxu0 %v2318
    %3851 = vmatpush.bf16.msra.mxu0 %v2310
    %3852 = vmatpush.bf16.msra.mxu0 %v2302
    %3853 = vmatpush.bf16.msra.mxu0 %v2294
    %3854 = vmatpush.bf16.msra.mxu0 %v2286
    %3855 = vmatpush.bf16.msra.mxu0 %v2278
    %3856 = vmatpush.bf16.msra.mxu0 %v2270
    %3857 = vmatmul.bf16.gmra.mxu0 %v713
    %v3858 = vpop.f32.mrf.mxu0
    %v3859 = vadd.f32 %v678, %v3858
    %v3860 = vpop.f32.mrf.mxu0
    %v3861 = vadd.f32 %v678, %v3860
    %3862 = vdwg.mxu0
    %3863 = vmatpush.bf16.msra.mxu0 %v2390
    %3864 = vmatpush.bf16.msra.mxu0 %v2382
    %3865 = vmatpush.bf16.msra.mxu0 %v2374
    %3866 = vmatpush.bf16.msra.mxu0 %v2366
    %3867 = vmatpush.bf16.msra.mxu0 %v2358
    %3868 = vmatpush.bf16.msra.mxu0 %v2350
    %3869 = vmatpush.bf16.msra.mxu0 %v2342
    %3870 = vmatpush.bf16.msra.mxu0 %v2334
    %3871 = vmatmul.bf16.gmra.mxu0 %v714
    %v3872 = vpop.f32.mrf.mxu0
    %v3873 = vadd.f32 %v3859, %v3872
    %v3874 = vpop.f32.mrf.mxu0
    %v3875 = vadd.f32 %v3861, %v3874
    %3876 = vdwg.mxu0
    %3877 = vmatpush.bf16.msra.mxu0 %v2454
    %3878 = vmatpush.bf16.msra.mxu0 %v2446
    %3879 = vmatpush.bf16.msra.mxu0 %v2438
    %3880 = vmatpush.bf16.msra.mxu0 %v2430
    %3881 = vmatpush.bf16.msra.mxu0 %v2422
    %3882 = vmatpush.bf16.msra.mxu0 %v2414
    %3883 = vmatpush.bf16.msra.mxu0 %v2406
    %3884 = vmatpush.bf16.msra.mxu0 %v2398
    %3885 = vmatmul.bf16.gmra.mxu0 %v715
    %v3886 = vpop.f32.mrf.mxu0
    %v3887 = vadd.f32 %v3873, %v3886
    %v3888 = vpop.f32.mrf.mxu0
    %v3889 = vadd.f32 %v3875, %v3888
    %3890 = vdwg.mxu0
    %3891 = vmatpush.bf16.msra.mxu0 %v2518
    %3892 = vmatpush.bf16.msra.mxu0 %v2510
    %3893 = vmatpush.bf16.msra.mxu0 %v2502
    %3894 = vmatpush.bf16.msra.mxu0 %v2494
    %3895 = vmatpush.bf16.msra.mxu0 %v2486
    %3896 = vmatpush.bf16.msra.mxu0 %v2478
    %3897 = vmatpush.bf16.msra.mxu0 %v2470
    %3898 = vmatpush.bf16.msra.mxu0 %v2462
    %3899 = vmatmul.bf16.gmra.mxu0 %v716
    %v3900 = vpop.f32.mrf.mxu0
    %v3901 = vadd.f32 %v3887, %v3900
    %v3902 = vpop.f32.mrf.mxu0
    %v3903 = vadd.f32 %v3889, %v3902
    %3904 = vdwg.mxu0
    %3905 = vmatpush.bf16.msra.mxu0 %v2582
    %3906 = vmatpush.bf16.msra.mxu0 %v2574
    %3907 = vmatpush.bf16.msra.mxu0 %v2566
    %3908 = vmatpush.bf16.msra.mxu0 %v2558
    %3909 = vmatpush.bf16.msra.mxu0 %v2550
    %3910 = vmatpush.bf16.msra.mxu0 %v2542
    %3911 = vmatpush.bf16.msra.mxu0 %v2534
    %3912 = vmatpush.bf16.msra.mxu0 %v2526
    %3913 = vmatmul.bf16.gmra.mxu0 %v717
    %v3914 = vpop.f32.mrf.mxu0
    %v3915 = vadd.f32 %v3901, %v3914
    %v3916 = vpop.f32.mrf.mxu0
    %v3917 = vadd.f32 %v3903, %v3916
    %3918 = vdwg.mxu0
    %3919 = vmatpush.bf16.msra.mxu0 %v2646
    %3920 = vmatpush.bf16.msra.mxu0 %v2638
    %3921 = vmatpush.bf16.msra.mxu0 %v2630
    %3922 = vmatpush.bf16.msra.mxu0 %v2622
    %3923 = vmatpush.bf16.msra.mxu0 %v2614
    %3924 = vmatpush.bf16.msra.mxu0 %v2606
    %3925 = vmatpush.bf16.msra.mxu0 %v2598
    %3926 = vmatpush.bf16.msra.mxu0 %v2590
    %3927 = vmatmul.bf16.gmra.mxu0 %v718
    %v3928 = vpop.f32.mrf.mxu0
    %v3929 = vadd.f32 %v3915, %v3928
    %v3930 = vpop.f32.mrf.mxu0
    %v3931 = vadd.f32 %v3917, %v3930
    %3932 = vdwg.mxu0
    %3933 = vmatpush.bf16.msra.mxu0 %v2710
    %3934 = vmatpush.bf16.msra.mxu0 %v2702
    %3935 = vmatpush.bf16.msra.mxu0 %v2694
    %3936 = vmatpush.bf16.msra.mxu0 %v2686
    %3937 = vmatpush.bf16.msra.mxu0 %v2678
    %3938 = vmatpush.bf16.msra.mxu0 %v2670
    %3939 = vmatpush.bf16.msra.mxu0 %v2662
    %3940 = vmatpush.bf16.msra.mxu0 %v2654
    %3941 = vmatmul.bf16.gmra.mxu0 %v719
    %v3942 = vpop.f32.mrf.mxu0
    %v3943 = vadd.f32 %v3929, %v3942
    %v3944 = vpop.f32.mrf.mxu0
    %v3945 = vadd.f32 %v3931, %v3944
    %3946 = vdwg.mxu0
    %3947 = vmatpush.bf16.msra.mxu0 %v2774
    %3948 = vmatpush.bf16.msra.mxu0 %v2766
    %3949 = vmatpush.bf16.msra.mxu0 %v2758
    %3950 = vmatpush.bf16.msra.mxu0 %v2750
    %3951 = vmatpush.bf16.msra.mxu0 %v2742
    %3952 = vmatpush.bf16.msra.mxu0 %v2734
    %3953 = vmatpush.bf16.msra.mxu0 %v2726
    %3954 = vmatpush.bf16.msra.mxu0 %v2718
    %3955 = vmatmul.bf16.gmra.mxu0 %v720
    %v3956 = vpop.f32.mrf.mxu0
    %v3957 = vadd.f32 %v3943, %v3956
    %v3958 = vpop.f32.mrf.mxu0
    %v3959 = vadd.f32 %v3945, %v3958
    %3960 = vdwg.mxu0
    %3961 = vmatpush.bf16.msra.mxu0 %v2327
    %3962 = vmatpush.bf16.msra.mxu0 %v2319
    %3963 = vmatpush.bf16.msra.mxu0 %v2311
    %3964 = vmatpush.bf16.msra.mxu0 %v2303
    %3965 = vmatpush.bf16.msra.mxu0 %v2295
    %3966 = vmatpush.bf16.msra.mxu0 %v2287
    %3967 = vmatpush.bf16.msra.mxu0 %v2279
    %3968 = vmatpush.bf16.msra.mxu0 %v2271
    %3969 = vmatmul.bf16.gmra.mxu0 %v713
    %v3970 = vpop.f32.mrf.mxu0
    %v3971 = vadd.f32 %v679, %v3970
    %v3972 = vpop.f32.mrf.mxu0
    %v3973 = vadd.f32 %v679, %v3972
    %3974 = vdwg.mxu0
    %3975 = vmatpush.bf16.msra.mxu0 %v2391
    %3976 = vmatpush.bf16.msra.mxu0 %v2383
    %3977 = vmatpush.bf16.msra.mxu0 %v2375
    %3978 = vmatpush.bf16.msra.mxu0 %v2367
    %3979 = vmatpush.bf16.msra.mxu0 %v2359
    %3980 = vmatpush.bf16.msra.mxu0 %v2351
    %3981 = vmatpush.bf16.msra.mxu0 %v2343
    %3982 = vmatpush.bf16.msra.mxu0 %v2335
    %3983 = vmatmul.bf16.gmra.mxu0 %v714
    %v3984 = vpop.f32.mrf.mxu0
    %v3985 = vadd.f32 %v3971, %v3984
    %v3986 = vpop.f32.mrf.mxu0
    %v3987 = vadd.f32 %v3973, %v3986
    %3988 = vdwg.mxu0
    %3989 = vmatpush.bf16.msra.mxu0 %v2455
    %3990 = vmatpush.bf16.msra.mxu0 %v2447
    %3991 = vmatpush.bf16.msra.mxu0 %v2439
    %3992 = vmatpush.bf16.msra.mxu0 %v2431
    %3993 = vmatpush.bf16.msra.mxu0 %v2423
    %3994 = vmatpush.bf16.msra.mxu0 %v2415
    %3995 = vmatpush.bf16.msra.mxu0 %v2407
    %3996 = vmatpush.bf16.msra.mxu0 %v2399
    %3997 = vmatmul.bf16.gmra.mxu0 %v715
    %v3998 = vpop.f32.mrf.mxu0
    %v3999 = vadd.f32 %v3985, %v3998
    %v4000 = vpop.f32.mrf.mxu0
    %v4001 = vadd.f32 %v3987, %v4000
    %4002 = vdwg.mxu0
    %4003 = vmatpush.bf16.msra.mxu0 %v2519
    %4004 = vmatpush.bf16.msra.mxu0 %v2511
    %4005 = vmatpush.bf16.msra.mxu0 %v2503
    %4006 = vmatpush.bf16.msra.mxu0 %v2495
    %4007 = vmatpush.bf16.msra.mxu0 %v2487
    %4008 = vmatpush.bf16.msra.mxu0 %v2479
    %4009 = vmatpush.bf16.msra.mxu0 %v2471
    %4010 = vmatpush.bf16.msra.mxu0 %v2463
    %4011 = vmatmul.bf16.gmra.mxu0 %v716
    %v4012 = vpop.f32.mrf.mxu0
    %v4013 = vadd.f32 %v3999, %v4012
    %v4014 = vpop.f32.mrf.mxu0
    %v4015 = vadd.f32 %v4001, %v4014
    %4016 = vdwg.mxu0
    %4017 = vmatpush.bf16.msra.mxu0 %v2583
    %4018 = vmatpush.bf16.msra.mxu0 %v2575
    %4019 = vmatpush.bf16.msra.mxu0 %v2567
    %4020 = vmatpush.bf16.msra.mxu0 %v2559
    %4021 = vmatpush.bf16.msra.mxu0 %v2551
    %4022 = vmatpush.bf16.msra.mxu0 %v2543
    %4023 = vmatpush.bf16.msra.mxu0 %v2535
    %4024 = vmatpush.bf16.msra.mxu0 %v2527
    %4025 = vmatmul.bf16.gmra.mxu0 %v717
    %v4026 = vpop.f32.mrf.mxu0
    %v4027 = vadd.f32 %v4013, %v4026
    %v4028 = vpop.f32.mrf.mxu0
    %v4029 = vadd.f32 %v4015, %v4028
    %4030 = vdwg.mxu0
    %4031 = vmatpush.bf16.msra.mxu0 %v2647
    %4032 = vmatpush.bf16.msra.mxu0 %v2639
    %4033 = vmatpush.bf16.msra.mxu0 %v2631
    %4034 = vmatpush.bf16.msra.mxu0 %v2623
    %4035 = vmatpush.bf16.msra.mxu0 %v2615
    %4036 = vmatpush.bf16.msra.mxu0 %v2607
    %4037 = vmatpush.bf16.msra.mxu0 %v2599
    %4038 = vmatpush.bf16.msra.mxu0 %v2591
    %4039 = vmatmul.bf16.gmra.mxu0 %v718
    %v4040 = vpop.f32.mrf.mxu0
    %v4041 = vadd.f32 %v4027, %v4040
    %v4042 = vpop.f32.mrf.mxu0
    %v4043 = vadd.f32 %v4029, %v4042
    %4044 = vdwg.mxu0
    %4045 = vmatpush.bf16.msra.mxu0 %v2711
    %4046 = vmatpush.bf16.msra.mxu0 %v2703
    %4047 = vmatpush.bf16.msra.mxu0 %v2695
    %4048 = vmatpush.bf16.msra.mxu0 %v2687
    %4049 = vmatpush.bf16.msra.mxu0 %v2679
    %4050 = vmatpush.bf16.msra.mxu0 %v2671
    %4051 = vmatpush.bf16.msra.mxu0 %v2663
    %4052 = vmatpush.bf16.msra.mxu0 %v2655
    %4053 = vmatmul.bf16.gmra.mxu0 %v719
    %v4054 = vpop.f32.mrf.mxu0
    %v4055 = vadd.f32 %v4041, %v4054
    %v4056 = vpop.f32.mrf.mxu0
    %v4057 = vadd.f32 %v4043, %v4056
    %4058 = vdwg.mxu0
    %4059 = vmatpush.bf16.msra.mxu0 %v2775
    %4060 = vmatpush.bf16.msra.mxu0 %v2767
    %4061 = vmatpush.bf16.msra.mxu0 %v2759
    %4062 = vmatpush.bf16.msra.mxu0 %v2751
    %4063 = vmatpush.bf16.msra.mxu0 %v2743
    %4064 = vmatpush.bf16.msra.mxu0 %v2735
    %4065 = vmatpush.bf16.msra.mxu0 %v2727
    %4066 = vmatpush.bf16.msra.mxu0 %v2719
    %4067 = vmatmul.bf16.gmra.mxu0 %v720
    %v4068 = vpop.f32.mrf.mxu0
    %v4069 = vadd.f32 %v4055, %v4068
    %v4070 = vpop.f32.mrf.mxu0
    %v4071 = vadd.f32 %v4057, %v4070
    %4072 = vdwg.mxu0
    %4073 = vmatpush.bf16.msra.mxu0 %v2328
    %4074 = vmatpush.bf16.msra.mxu0 %v2320
    %4075 = vmatpush.bf16.msra.mxu0 %v2312
    %4076 = vmatpush.bf16.msra.mxu0 %v2304
    %4077 = vmatpush.bf16.msra.mxu0 %v2296
    %4078 = vmatpush.bf16.msra.mxu0 %v2288
    %4079 = vmatpush.bf16.msra.mxu0 %v2280
    %4080 = vmatpush.bf16.msra.mxu0 %v2272
    %4081 = vmatmul.bf16.gmra.mxu0 %v713
    %v4082 = vpop.f32.mrf.mxu0
    %v4083 = vadd.f32 %v680, %v4082
    %v4084 = vpop.f32.mrf.mxu0
    %v4085 = vadd.f32 %v680, %v4084
    %4086 = vdwg.mxu0
    %4087 = vmatpush.bf16.msra.mxu0 %v2392
    %4088 = vmatpush.bf16.msra.mxu0 %v2384
    %4089 = vmatpush.bf16.msra.mxu0 %v2376
    %4090 = vmatpush.bf16.msra.mxu0 %v2368
    %4091 = vmatpush.bf16.msra.mxu0 %v2360
    %4092 = vmatpush.bf16.msra.mxu0 %v2352
    %4093 = vmatpush.bf16.msra.mxu0 %v2344
    %4094 = vmatpush.bf16.msra.mxu0 %v2336
    %4095 = vmatmul.bf16.gmra.mxu0 %v714
    %v4096 = vpop.f32.mrf.mxu0
    %v4097 = vadd.f32 %v4083, %v4096
    %v4098 = vpop.f32.mrf.mxu0
    %v4099 = vadd.f32 %v4085, %v4098
    %4100 = vdwg.mxu0
    %4101 = vmatpush.bf16.msra.mxu0 %v2456
    %4102 = vmatpush.bf16.msra.mxu0 %v2448
    %4103 = vmatpush.bf16.msra.mxu0 %v2440
    %4104 = vmatpush.bf16.msra.mxu0 %v2432
    %4105 = vmatpush.bf16.msra.mxu0 %v2424
    %4106 = vmatpush.bf16.msra.mxu0 %v2416
    %4107 = vmatpush.bf16.msra.mxu0 %v2408
    %4108 = vmatpush.bf16.msra.mxu0 %v2400
    %4109 = vmatmul.bf16.gmra.mxu0 %v715
    %v4110 = vpop.f32.mrf.mxu0
    %v4111 = vadd.f32 %v4097, %v4110
    %v4112 = vpop.f32.mrf.mxu0
    %v4113 = vadd.f32 %v4099, %v4112
    %4114 = vdwg.mxu0
    %4115 = vmatpush.bf16.msra.mxu0 %v2520
    %4116 = vmatpush.bf16.msra.mxu0 %v2512
    %4117 = vmatpush.bf16.msra.mxu0 %v2504
    %4118 = vmatpush.bf16.msra.mxu0 %v2496
    %4119 = vmatpush.bf16.msra.mxu0 %v2488
    %4120 = vmatpush.bf16.msra.mxu0 %v2480
    %4121 = vmatpush.bf16.msra.mxu0 %v2472
    %4122 = vmatpush.bf16.msra.mxu0 %v2464
    %4123 = vmatmul.bf16.gmra.mxu0 %v716
    %v4124 = vpop.f32.mrf.mxu0
    %v4125 = vadd.f32 %v4111, %v4124
    %v4126 = vpop.f32.mrf.mxu0
    %v4127 = vadd.f32 %v4113, %v4126
    %4128 = vdwg.mxu0
    %4129 = vmatpush.bf16.msra.mxu0 %v2584
    %4130 = vmatpush.bf16.msra.mxu0 %v2576
    %4131 = vmatpush.bf16.msra.mxu0 %v2568
    %4132 = vmatpush.bf16.msra.mxu0 %v2560
    %4133 = vmatpush.bf16.msra.mxu0 %v2552
    %4134 = vmatpush.bf16.msra.mxu0 %v2544
    %4135 = vmatpush.bf16.msra.mxu0 %v2536
    %4136 = vmatpush.bf16.msra.mxu0 %v2528
    %4137 = vmatmul.bf16.gmra.mxu0 %v717
    %v4138 = vpop.f32.mrf.mxu0
    %v4139 = vadd.f32 %v4125, %v4138
    %v4140 = vpop.f32.mrf.mxu0
    %v4141 = vadd.f32 %v4127, %v4140
    %4142 = vdwg.mxu0
    %4143 = vmatpush.bf16.msra.mxu0 %v2648
    %4144 = vmatpush.bf16.msra.mxu0 %v2640
    %4145 = vmatpush.bf16.msra.mxu0 %v2632
    %4146 = vmatpush.bf16.msra.mxu0 %v2624
    %4147 = vmatpush.bf16.msra.mxu0 %v2616
    %4148 = vmatpush.bf16.msra.mxu0 %v2608
    %4149 = vmatpush.bf16.msra.mxu0 %v2600
    %4150 = vmatpush.bf16.msra.mxu0 %v2592
    %4151 = vmatmul.bf16.gmra.mxu0 %v718
    %v4152 = vpop.f32.mrf.mxu0
    %v4153 = vadd.f32 %v4139, %v4152
    %v4154 = vpop.f32.mrf.mxu0
    %v4155 = vadd.f32 %v4141, %v4154
    %4156 = vdwg.mxu0
    %4157 = vmatpush.bf16.msra.mxu0 %v2712
    %4158 = vmatpush.bf16.msra.mxu0 %v2704
    %4159 = vmatpush.bf16.msra.mxu0 %v2696
    %4160 = vmatpush.bf16.msra.mxu0 %v2688
    %4161 = vmatpush.bf16.msra.mxu0 %v2680
    %4162 = vmatpush.bf16.msra.mxu0 %v2672
    %4163 = vmatpush.bf16.msra.mxu0 %v2664
    %4164 = vmatpush.bf16.msra.mxu0 %v2656
    %4165 = vmatmul.bf16.gmra.mxu0 %v719
    %v4166 = vpop.f32.mrf.mxu0
    %v4167 = vadd.f32 %v4153, %v4166
    %v4168 = vpop.f32.mrf.mxu0
    %v4169 = vadd.f32 %v4155, %v4168
    %4170 = vdwg.mxu0
    %4171 = vmatpush.bf16.msra.mxu0 %v2776
    %4172 = vmatpush.bf16.msra.mxu0 %v2768
    %4173 = vmatpush.bf16.msra.mxu0 %v2760
    %4174 = vmatpush.bf16.msra.mxu0 %v2752
    %4175 = vmatpush.bf16.msra.mxu0 %v2744
    %4176 = vmatpush.bf16.msra.mxu0 %v2736
    %4177 = vmatpush.bf16.msra.mxu0 %v2728
    %4178 = vmatpush.bf16.msra.mxu0 %v2720
    %4179 = vmatmul.bf16.gmra.mxu0 %v720
    %v4180 = vpop.f32.mrf.mxu0
    %v4181 = vadd.f32 %v4167, %v4180
    %v4182 = vpop.f32.mrf.mxu0
    %v4183 = vadd.f32 %v4169, %v4182
    %4184 = vdwg.mxu0
    %v4185 = vmax.f32 %v3397, 0.0
    %v4186 = vmax.f32 %v3509, 0.0
    %v4187 = vmax.f32 %v3621, 0.0
    %v4188 = vmax.f32 %v3733, 0.0
    %v4189 = vmax.f32 %v3845, 0.0
    %v4190 = vmax.f32 %v3957, 0.0
    %v4191 = vmax.f32 %v4069, 0.0
    %v4192 = vmax.f32 %v4181, 0.0
    %v4193 = vmax.f32 %v3399, 0.0
    %v4194 = vmax.f32 %v3511, 0.0
    %v4195 = vmax.f32 %v3623, 0.0
    %v4196 = vmax.f32 %v3735, 0.0
    %v4197 = vmax.f32 %v3847, 0.0
    %v4198 = vmax.f32 %v3959, 0.0
    %v4199 = vmax.f32 %v4071, 0.0
    %v4200 = vmax.f32 %v4183, 0.0
    %v4201 = vpack.c.bf16 %v4193, %v4185
    %v4202 = vpack.c.bf16 %v4194, %v4186
    %v4203 = vpack.c.bf16 %v4195, %v4187
    %v4204 = vpack.c.bf16 %v4196, %v4188
    %v4205 = vpack.c.bf16 %v4197, %v4189
    %v4206 = vpack.c.bf16 %v4198, %v4190
    %v4207 = vpack.c.bf16 %v4199, %v4191
    %v4208 = vpack.c.bf16 %v4200, %v4192
    %v4209 = vld [vmem:[#allocation8] sm:$0xff]
    %v4210 = vld [vmem:[#allocation8 + $0x8] sm:$0xff]
    %v4211 = vld [vmem:[#allocation8 + $0x10] sm:$0xff]
    %v4212 = vld [vmem:[#allocation8 + $0x18] sm:$0xff]
    %v4213 = vld [vmem:[#allocation8 + $0x20] sm:$0xff]
    %v4214 = vld [vmem:[#allocation8 + $0x28] sm:$0xff]
    %v4215 = vld [vmem:[#allocation8 + $0x30] sm:$0xff]
    %v4216 = vld [vmem:[#allocation8 + $0x38] sm:$0xff]
    %v4217 = vld [vmem:[#allocation8 + $0x40] sm:$0xff]
    %v4218 = vld [vmem:[#allocation8 + $0x48] sm:$0xff]
    %v4219 = vld [vmem:[#allocation8 + $0x50] sm:$0xff]
    %v4220 = vld [vmem:[#allocation8 + $0x58] sm:$0xff]
    %v4221 = vld [vmem:[#allocation8 + $0x60] sm:$0xff]
    %v4222 = vld [vmem:[#allocation8 + $0x68] sm:$0xff]
    %v4223 = vld [vmem:[#allocation8 + $0x70] sm:$0xff]
    %v4224 = vld [vmem:[#allocation8 + $0x78] sm:$0xff]
    %v4225 = vld [vmem:[#allocation8 + $0x80] sm:$0xff]
    %v4226 = vld [vmem:[#allocation8 + $0x88] sm:$0xff]
    %v4227 = vld [vmem:[#allocation8 + $0x90] sm:$0xff]
    %v4228 = vld [vmem:[#allocation8 + $0x98] sm:$0xff]
    %v4229 = vld [vmem:[#allocation8 + $0xa0] sm:$0xff]
    %v4230 = vld [vmem:[#allocation8 + $0xa8] sm:$0xff]
    %v4231 = vld [vmem:[#allocation8 + $0xb0] sm:$0xff]
    %v4232 = vld [vmem:[#allocation8 + $0xb8] sm:$0xff]
    %v4233 = vld [vmem:[#allocation8 + $0xc0] sm:$0xff]
    %v4234 = vld [vmem:[#allocation8 + $0xc8] sm:$0xff]
    %v4235 = vld [vmem:[#allocation8 + $0xd0] sm:$0xff]
    %v4236 = vld [vmem:[#allocation8 + $0xd8] sm:$0xff]
    %v4237 = vld [vmem:[#allocation8 + $0xe0] sm:$0xff]
    %v4238 = vld [vmem:[#allocation8 + $0xe8] sm:$0xff]
    %v4239 = vld [vmem:[#allocation8 + $0xf0] sm:$0xff]
    %v4240 = vld [vmem:[#allocation8 + $0xf8] sm:$0xff]
    %v4241 = vld [vmem:[#allocation8 + $0x100] sm:$0xff]
    %v4242 = vld [vmem:[#allocation8 + $0x108] sm:$0xff]
    %v4243 = vld [vmem:[#allocation8 + $0x110] sm:$0xff]
    %v4244 = vld [vmem:[#allocation8 + $0x118] sm:$0xff]
    %v4245 = vld [vmem:[#allocation8 + $0x120] sm:$0xff]
    %v4246 = vld [vmem:[#allocation8 + $0x128] sm:$0xff]
    %v4247 = vld [vmem:[#allocation8 + $0x130] sm:$0xff]
    %v4248 = vld [vmem:[#allocation8 + $0x138] sm:$0xff]
    %v4249 = vld [vmem:[#allocation8 + $0x140] sm:$0xff]
    %v4250 = vld [vmem:[#allocation8 + $0x148] sm:$0xff]
    %v4251 = vld [vmem:[#allocation8 + $0x150] sm:$0xff]
    %v4252 = vld [vmem:[#allocation8 + $0x158] sm:$0xff]
    %v4253 = vld [vmem:[#allocation8 + $0x160] sm:$0xff]
    %v4254 = vld [vmem:[#allocation8 + $0x168] sm:$0xff]
    %v4255 = vld [vmem:[#allocation8 + $0x170] sm:$0xff]
    %v4256 = vld [vmem:[#allocation8 + $0x178] sm:$0xff]
    %v4257 = vld [vmem:[#allocation8 + $0x180] sm:$0xff]
    %v4258 = vld [vmem:[#allocation8 + $0x188] sm:$0xff]
    %v4259 = vld [vmem:[#allocation8 + $0x190] sm:$0xff]
    %v4260 = vld [vmem:[#allocation8 + $0x198] sm:$0xff]
    %v4261 = vld [vmem:[#allocation8 + $0x1a0] sm:$0xff]
    %v4262 = vld [vmem:[#allocation8 + $0x1a8] sm:$0xff]
    %v4263 = vld [vmem:[#allocation8 + $0x1b0] sm:$0xff]
    %v4264 = vld [vmem:[#allocation8 + $0x1b8] sm:$0xff]
    %v4265 = vld [vmem:[#allocation8 + $0x1c0] sm:$0xff]
    %v4266 = vld [vmem:[#allocation8 + $0x1c8] sm:$0xff]
    %v4267 = vld [vmem:[#allocation8 + $0x1d0] sm:$0xff]
    %v4268 = vld [vmem:[#allocation8 + $0x1d8] sm:$0xff]
    %v4269 = vld [vmem:[#allocation8 + $0x1e0] sm:$0xff]
    %v4270 = vld [vmem:[#allocation8 + $0x1e8] sm:$0xff]
    %v4271 = vld [vmem:[#allocation8 + $0x1f0] sm:$0xff]
    %v4272 = vld [vmem:[#allocation8 + $0x1f8] sm:$0xff]
    %v4273 = vld [vmem:[#allocation8 + $0x200] sm:$0xff]
    %v4274 = vld [vmem:[#allocation8 + $0x208] sm:$0xff]
    %v4275 = vld [vmem:[#allocation8 + $0x210] sm:$0xff]
    %v4276 = vld [vmem:[#allocation8 + $0x218] sm:$0xff]
    %v4277 = vld [vmem:[#allocation8 + $0x220] sm:$0xff]
    %v4278 = vld [vmem:[#allocation8 + $0x228] sm:$0xff]
    %v4279 = vld [vmem:[#allocation8 + $0x230] sm:$0xff]
    %v4280 = vld [vmem:[#allocation8 + $0x238] sm:$0xff]
    %v4281 = vld [vmem:[#allocation8 + $0x240] sm:$0xff]
    %v4282 = vld [vmem:[#allocation8 + $0x248] sm:$0xff]
    %v4283 = vld [vmem:[#allocation8 + $0x250] sm:$0xff]
    %v4284 = vld [vmem:[#allocation8 + $0x258] sm:$0xff]
    %v4285 = vld [vmem:[#allocation8 + $0x260] sm:$0xff]
    %v4286 = vld [vmem:[#allocation8 + $0x268] sm:$0xff]
    %v4287 = vld [vmem:[#allocation8 + $0x270] sm:$0xff]
    %v4288 = vld [vmem:[#allocation8 + $0x278] sm:$0xff]
    %v4289 = vld [vmem:[#allocation8 + $0x280] sm:$0xff]
    %v4290 = vld [vmem:[#allocation8 + $0x288] sm:$0xff]
    %v4291 = vld [vmem:[#allocation8 + $0x290] sm:$0xff]
    %v4292 = vld [vmem:[#allocation8 + $0x298] sm:$0xff]
    %v4293 = vld [vmem:[#allocation8 + $0x2a0] sm:$0xff]
    %v4294 = vld [vmem:[#allocation8 + $0x2a8] sm:$0xff]
    %v4295 = vld [vmem:[#allocation8 + $0x2b0] sm:$0xff]
    %v4296 = vld [vmem:[#allocation8 + $0x2b8] sm:$0xff]
    %v4297 = vld [vmem:[#allocation8 + $0x2c0] sm:$0xff]
    %v4298 = vld [vmem:[#allocation8 + $0x2c8] sm:$0xff]
    %v4299 = vld [vmem:[#allocation8 + $0x2d0] sm:$0xff]
    %v4300 = vld [vmem:[#allocation8 + $0x2d8] sm:$0xff]
    %v4301 = vld [vmem:[#allocation8 + $0x2e0] sm:$0xff]
    %v4302 = vld [vmem:[#allocation8 + $0x2e8] sm:$0xff]
    %v4303 = vld [vmem:[#allocation8 + $0x2f0] sm:$0xff]
    %v4304 = vld [vmem:[#allocation8 + $0x2f8] sm:$0xff]
    %v4305 = vld [vmem:[#allocation8 + $0x300] sm:$0xff]
    %v4306 = vld [vmem:[#allocation8 + $0x308] sm:$0xff]
    %v4307 = vld [vmem:[#allocation8 + $0x310] sm:$0xff]
    %v4308 = vld [vmem:[#allocation8 + $0x318] sm:$0xff]
    %v4309 = vld [vmem:[#allocation8 + $0x320] sm:$0xff]
    %v4310 = vld [vmem:[#allocation8 + $0x328] sm:$0xff]
    %v4311 = vld [vmem:[#allocation8 + $0x330] sm:$0xff]
    %v4312 = vld [vmem:[#allocation8 + $0x338] sm:$0xff]
    %v4313 = vld [vmem:[#allocation8 + $0x340] sm:$0xff]
    %v4314 = vld [vmem:[#allocation8 + $0x348] sm:$0xff]
    %v4315 = vld [vmem:[#allocation8 + $0x350] sm:$0xff]
    %v4316 = vld [vmem:[#allocation8 + $0x358] sm:$0xff]
    %v4317 = vld [vmem:[#allocation8 + $0x360] sm:$0xff]
    %v4318 = vld [vmem:[#allocation8 + $0x368] sm:$0xff]
    %v4319 = vld [vmem:[#allocation8 + $0x370] sm:$0xff]
    %v4320 = vld [vmem:[#allocation8 + $0x378] sm:$0xff]
    %v4321 = vld [vmem:[#allocation8 + $0x380] sm:$0xff]
    %v4322 = vld [vmem:[#allocation8 + $0x388] sm:$0xff]
    %v4323 = vld [vmem:[#allocation8 + $0x390] sm:$0xff]
    %v4324 = vld [vmem:[#allocation8 + $0x398] sm:$0xff]
    %v4325 = vld [vmem:[#allocation8 + $0x3a0] sm:$0xff]
    %v4326 = vld [vmem:[#allocation8 + $0x3a8] sm:$0xff]
    %v4327 = vld [vmem:[#allocation8 + $0x3b0] sm:$0xff]
    %v4328 = vld [vmem:[#allocation8 + $0x3b8] sm:$0xff]
    %v4329 = vld [vmem:[#allocation8 + $0x3c0] sm:$0xff]
    %v4330 = vld [vmem:[#allocation8 + $0x3c8] sm:$0xff]
    %v4331 = vld [vmem:[#allocation8 + $0x3d0] sm:$0xff]
    %v4332 = vld [vmem:[#allocation8 + $0x3d8] sm:$0xff]
    %v4333 = vld [vmem:[#allocation8 + $0x3e0] sm:$0xff]
    %v4334 = vld [vmem:[#allocation8 + $0x3e8] sm:$0xff]
    %v4335 = vld [vmem:[#allocation8 + $0x3f0] sm:$0xff]
    %v4336 = vld [vmem:[#allocation8 + $0x3f8] sm:$0xff]
    %v4337 = vld [vmem:[#allocation10] sm:$0x3]
    %v4339 = vperm.slane %v4337, 0
    %v4340 = vperm.slane %v4337, 1
    %v4471 = vunpack.c.l.b16 %v4209
    %v4472 = vunpack.c.h.b16 %v4209
    %v4473 = vunpack.c.l.b16 %v4210
    %v4474 = vunpack.c.h.b16 %v4210
    %v4475 = vunpack.c.l.b16 %v4211
    %v4476 = vunpack.c.h.b16 %v4211
    %v4477 = vunpack.c.l.b16 %v4212
    %v4478 = vunpack.c.h.b16 %v4212
    %v4479 = vunpack.c.l.b16 %v4213
    %v4480 = vunpack.c.h.b16 %v4213
    %v4481 = vunpack.c.l.b16 %v4214
    %v4482 = vunpack.c.h.b16 %v4214
    %v4483 = vunpack.c.l.b16 %v4215
    %v4484 = vunpack.c.h.b16 %v4215
    %v4485 = vunpack.c.l.b16 %v4216
    %v4486 = vunpack.c.h.b16 %v4216
    %v4487 = vunpack.c.l.b16 %v4217
    %v4488 = vunpack.c.h.b16 %v4217
    %v4489 = vunpack.c.l.b16 %v4218
    %v4490 = vunpack.c.h.b16 %v4218
    %v4491 = vunpack.c.l.b16 %v4219
    %v4492 = vunpack.c.h.b16 %v4219
    %v4493 = vunpack.c.l.b16 %v4220
    %v4494 = vunpack.c.h.b16 %v4220
    %v4495 = vunpack.c.l.b16 %v4221
    %v4496 = vunpack.c.h.b16 %v4221
    %v4497 = vunpack.c.l.b16 %v4222
    %v4498 = vunpack.c.h.b16 %v4222
    %v4499 = vunpack.c.l.b16 %v4223
    %v4500 = vunpack.c.h.b16 %v4223
    %v4501 = vunpack.c.l.b16 %v4224
    %v4502 = vunpack.c.h.b16 %v4224
    %v4503 = vunpack.c.l.b16 %v4225
    %v4504 = vunpack.c.h.b16 %v4225
    %v4505 = vunpack.c.l.b16 %v4226
    %v4506 = vunpack.c.h.b16 %v4226
    %v4507 = vunpack.c.l.b16 %v4227
    %v4508 = vunpack.c.h.b16 %v4227
    %v4509 = vunpack.c.l.b16 %v4228
    %v4510 = vunpack.c.h.b16 %v4228
    %v4511 = vunpack.c.l.b16 %v4229
    %v4512 = vunpack.c.h.b16 %v4229
    %v4513 = vunpack.c.l.b16 %v4230
    %v4514 = vunpack.c.h.b16 %v4230
    %v4515 = vunpack.c.l.b16 %v4231
    %v4516 = vunpack.c.h.b16 %v4231
    %v4517 = vunpack.c.l.b16 %v4232
    %v4518 = vunpack.c.h.b16 %v4232
    %v4519 = vunpack.c.l.b16 %v4233
    %v4520 = vunpack.c.h.b16 %v4233
    %v4521 = vunpack.c.l.b16 %v4234
    %v4522 = vunpack.c.h.b16 %v4234
    %v4523 = vunpack.c.l.b16 %v4235
    %v4524 = vunpack.c.h.b16 %v4235
    %v4525 = vunpack.c.l.b16 %v4236
    %v4526 = vunpack.c.h.b16 %v4236
    %v4527 = vunpack.c.l.b16 %v4237
    %v4528 = vunpack.c.h.b16 %v4237
    %v4529 = vunpack.c.l.b16 %v4238
    %v4530 = vunpack.c.h.b16 %v4238
    %v4531 = vunpack.c.l.b16 %v4239
    %v4532 = vunpack.c.h.b16 %v4239
    %v4533 = vunpack.c.l.b16 %v4240
    %v4534 = vunpack.c.h.b16 %v4240
    %v4535 = vunpack.c.l.b16 %v4241
    %v4536 = vunpack.c.h.b16 %v4241
    %v4537 = vunpack.c.l.b16 %v4242
    %v4538 = vunpack.c.h.b16 %v4242
    %v4539 = vunpack.c.l.b16 %v4243
    %v4540 = vunpack.c.h.b16 %v4243
    %v4541 = vunpack.c.l.b16 %v4244
    %v4542 = vunpack.c.h.b16 %v4244
    %v4543 = vunpack.c.l.b16 %v4245
    %v4544 = vunpack.c.h.b16 %v4245
    %v4545 = vunpack.c.l.b16 %v4246
    %v4546 = vunpack.c.h.b16 %v4246
    %v4547 = vunpack.c.l.b16 %v4247
    %v4548 = vunpack.c.h.b16 %v4247
    %v4549 = vunpack.c.l.b16 %v4248
    %v4550 = vunpack.c.h.b16 %v4248
    %v4551 = vunpack.c.l.b16 %v4249
    %v4552 = vunpack.c.h.b16 %v4249
    %v4553 = vunpack.c.l.b16 %v4250
    %v4554 = vunpack.c.h.b16 %v4250
    %v4555 = vunpack.c.l.b16 %v4251
    %v4556 = vunpack.c.h.b16 %v4251
    %v4557 = vunpack.c.l.b16 %v4252
    %v4558 = vunpack.c.h.b16 %v4252
    %v4559 = vunpack.c.l.b16 %v4253
    %v4560 = vunpack.c.h.b16 %v4253
    %v4561 = vunpack.c.l.b16 %v4254
    %v4562 = vunpack.c.h.b16 %v4254
    %v4563 = vunpack.c.l.b16 %v4255
    %v4564 = vunpack.c.h.b16 %v4255
    %v4565 = vunpack.c.l.b16 %v4256
    %v4566 = vunpack.c.h.b16 %v4256
    %v4567 = vunpack.c.l.b16 %v4257
    %v4568 = vunpack.c.h.b16 %v4257
    %v4569 = vunpack.c.l.b16 %v4258
    %v4570 = vunpack.c.h.b16 %v4258
    %v4571 = vunpack.c.l.b16 %v4259
    %v4572 = vunpack.c.h.b16 %v4259
    %v4573 = vunpack.c.l.b16 %v4260
    %v4574 = vunpack.c.h.b16 %v4260
    %v4575 = vunpack.c.l.b16 %v4261
    %v4576 = vunpack.c.h.b16 %v4261
    %v4577 = vunpack.c.l.b16 %v4262
    %v4578 = vunpack.c.h.b16 %v4262
    %v4579 = vunpack.c.l.b16 %v4263
    %v4580 = vunpack.c.h.b16 %v4263
    %v4581 = vunpack.c.l.b16 %v4264
    %v4582 = vunpack.c.h.b16 %v4264
    %v4583 = vunpack.c.l.b16 %v4265
    %v4584 = vunpack.c.h.b16 %v4265
    %v4585 = vunpack.c.l.b16 %v4266
    %v4586 = vunpack.c.h.b16 %v4266
    %v4587 = vunpack.c.l.b16 %v4267
    %v4588 = vunpack.c.h.b16 %v4267
    %v4589 = vunpack.c.l.b16 %v4268
    %v4590 = vunpack.c.h.b16 %v4268
    %v4591 = vunpack.c.l.b16 %v4269
    %v4592 = vunpack.c.h.b16 %v4269
    %v4593 = vunpack.c.l.b16 %v4270
    %v4594 = vunpack.c.h.b16 %v4270
    %v4595 = vunpack.c.l.b16 %v4271
    %v4596 = vunpack.c.h.b16 %v4271
    %v4597 = vunpack.c.l.b16 %v4272
    %v4598 = vunpack.c.h.b16 %v4272
    %v4599 = vunpack.c.l.b16 %v4273
    %v4600 = vunpack.c.h.b16 %v4273
    %v4601 = vunpack.c.l.b16 %v4274
    %v4602 = vunpack.c.h.b16 %v4274
    %v4603 = vunpack.c.l.b16 %v4275
    %v4604 = vunpack.c.h.b16 %v4275
    %v4605 = vunpack.c.l.b16 %v4276
    %v4606 = vunpack.c.h.b16 %v4276
    %v4607 = vunpack.c.l.b16 %v4277
    %v4608 = vunpack.c.h.b16 %v4277
    %v4609 = vunpack.c.l.b16 %v4278
    %v4610 = vunpack.c.h.b16 %v4278
    %v4611 = vunpack.c.l.b16 %v4279
    %v4612 = vunpack.c.h.b16 %v4279
    %v4613 = vunpack.c.l.b16 %v4280
    %v4614 = vunpack.c.h.b16 %v4280
    %v4615 = vunpack.c.l.b16 %v4281
    %v4616 = vunpack.c.h.b16 %v4281
    %v4617 = vunpack.c.l.b16 %v4282
    %v4618 = vunpack.c.h.b16 %v4282
    %v4619 = vunpack.c.l.b16 %v4283
    %v4620 = vunpack.c.h.b16 %v4283
    %v4621 = vunpack.c.l.b16 %v4284
    %v4622 = vunpack.c.h.b16 %v4284
    %v4623 = vunpack.c.l.b16 %v4285
    %v4624 = vunpack.c.h.b16 %v4285
    %v4625 = vunpack.c.l.b16 %v4286
    %v4626 = vunpack.c.h.b16 %v4286
    %v4627 = vunpack.c.l.b16 %v4287
    %v4628 = vunpack.c.h.b16 %v4287
    %v4629 = vunpack.c.l.b16 %v4288
    %v4630 = vunpack.c.h.b16 %v4288
    %v4631 = vunpack.c.l.b16 %v4289
    %v4632 = vunpack.c.h.b16 %v4289
    %v4633 = vunpack.c.l.b16 %v4290
    %v4634 = vunpack.c.h.b16 %v4290
    %v4635 = vunpack.c.l.b16 %v4291
    %v4636 = vunpack.c.h.b16 %v4291
    %v4637 = vunpack.c.l.b16 %v4292
    %v4638 = vunpack.c.h.b16 %v4292
    %v4639 = vunpack.c.l.b16 %v4293
    %v4640 = vunpack.c.h.b16 %v4293
    %v4641 = vunpack.c.l.b16 %v4294
    %v4642 = vunpack.c.h.b16 %v4294
    %v4643 = vunpack.c.l.b16 %v4295
    %v4644 = vunpack.c.h.b16 %v4295
    %v4645 = vunpack.c.l.b16 %v4296
    %v4646 = vunpack.c.h.b16 %v4296
    %v4647 = vunpack.c.l.b16 %v4297
    %v4648 = vunpack.c.h.b16 %v4297
    %v4649 = vunpack.c.l.b16 %v4298
    %v4650 = vunpack.c.h.b16 %v4298
    %v4651 = vunpack.c.l.b16 %v4299
    %v4652 = vunpack.c.h.b16 %v4299
    %v4653 = vunpack.c.l.b16 %v4300
    %v4654 = vunpack.c.h.b16 %v4300
    %v4655 = vunpack.c.l.b16 %v4301
    %v4656 = vunpack.c.h.b16 %v4301
    %v4657 = vunpack.c.l.b16 %v4302
    %v4658 = vunpack.c.h.b16 %v4302
    %v4659 = vunpack.c.l.b16 %v4303
    %v4660 = vunpack.c.h.b16 %v4303
    %v4661 = vunpack.c.l.b16 %v4304
    %v4662 = vunpack.c.h.b16 %v4304
    %v4663 = vunpack.c.l.b16 %v4305
    %v4664 = vunpack.c.h.b16 %v4305
    %v4665 = vunpack.c.l.b16 %v4306
    %v4666 = vunpack.c.h.b16 %v4306
    %v4667 = vunpack.c.l.b16 %v4307
    %v4668 = vunpack.c.h.b16 %v4307
    %v4669 = vunpack.c.l.b16 %v4308
    %v4670 = vunpack.c.h.b16 %v4308
    %v4671 = vunpack.c.l.b16 %v4309
    %v4672 = vunpack.c.h.b16 %v4309
    %v4673 = vunpack.c.l.b16 %v4310
    %v4674 = vunpack.c.h.b16 %v4310
    %v4675 = vunpack.c.l.b16 %v4311
    %v4676 = vunpack.c.h.b16 %v4311
    %v4677 = vunpack.c.l.b16 %v4312
    %v4678 = vunpack.c.h.b16 %v4312
    %v4679 = vunpack.c.l.b16 %v4313
    %v4680 = vunpack.c.h.b16 %v4313
    %v4681 = vunpack.c.l.b16 %v4314
    %v4682 = vunpack.c.h.b16 %v4314
    %v4683 = vunpack.c.l.b16 %v4315
    %v4684 = vunpack.c.h.b16 %v4315
    %v4685 = vunpack.c.l.b16 %v4316
    %v4686 = vunpack.c.h.b16 %v4316
    %v4687 = vunpack.c.l.b16 %v4317
    %v4688 = vunpack.c.h.b16 %v4317
    %v4689 = vunpack.c.l.b16 %v4318
    %v4690 = vunpack.c.h.b16 %v4318
    %v4691 = vunpack.c.l.b16 %v4319
    %v4692 = vunpack.c.h.b16 %v4319
    %v4693 = vunpack.c.l.b16 %v4320
    %v4694 = vunpack.c.h.b16 %v4320
    %v4695 = vunpack.c.l.b16 %v4321
    %v4696 = vunpack.c.h.b16 %v4321
    %v4697 = vunpack.c.l.b16 %v4322
    %v4698 = vunpack.c.h.b16 %v4322
    %v4699 = vunpack.c.l.b16 %v4323
    %v4700 = vunpack.c.h.b16 %v4323
    %v4701 = vunpack.c.l.b16 %v4324
    %v4702 = vunpack.c.h.b16 %v4324
    %v4703 = vunpack.c.l.b16 %v4325
    %v4704 = vunpack.c.h.b16 %v4325
    %v4705 = vunpack.c.l.b16 %v4326
    %v4706 = vunpack.c.h.b16 %v4326
    %v4707 = vunpack.c.l.b16 %v4327
    %v4708 = vunpack.c.h.b16 %v4327
    %v4709 = vunpack.c.l.b16 %v4328
    %v4710 = vunpack.c.h.b16 %v4328
    %v4711 = vunpack.c.l.b16 %v4329
    %v4712 = vunpack.c.h.b16 %v4329
    %v4713 = vunpack.c.l.b16 %v4330
    %v4714 = vunpack.c.h.b16 %v4330
    %v4715 = vunpack.c.l.b16 %v4331
    %v4716 = vunpack.c.h.b16 %v4331
    %v4717 = vunpack.c.l.b16 %v4332
    %v4718 = vunpack.c.h.b16 %v4332
    %v4719 = vunpack.c.l.b16 %v4333
    %v4720 = vunpack.c.h.b16 %v4333
    %v4721 = vunpack.c.l.b16 %v4334
    %v4722 = vunpack.c.h.b16 %v4334
    %v4723 = vunpack.c.l.b16 %v4335
    %v4724 = vunpack.c.h.b16 %v4335
    %v4725 = vunpack.c.l.b16 %v4336
    %v4726 = vunpack.c.h.b16 %v4336
    %v4727 = vpack.c.b16 %v4473, %v4471
    %v4728 = vpack.c.b16 %v4474, %v4472
    %v4729 = vpack.c.b16 %v4477, %v4475
    %v4730 = vpack.c.b16 %v4478, %v4476
    %v4731 = vpack.c.b16 %v4481, %v4479
    %v4732 = vpack.c.b16 %v4482, %v4480
    %v4733 = vpack.c.b16 %v4485, %v4483
    %v4734 = vpack.c.b16 %v4486, %v4484
    %v4735 = vpack.c.b16 %v4489, %v4487
    %v4736 = vpack.c.b16 %v4490, %v4488
    %v4737 = vpack.c.b16 %v4493, %v4491
    %v4738 = vpack.c.b16 %v4494, %v4492
    %v4739 = vpack.c.b16 %v4497, %v4495
    %v4740 = vpack.c.b16 %v4498, %v4496
    %v4741 = vpack.c.b16 %v4501, %v4499
    %v4742 = vpack.c.b16 %v4502, %v4500
    %v4743 = vpack.c.b16 %v4505, %v4503
    %v4744 = vpack.c.b16 %v4506, %v4504
    %v4745 = vpack.c.b16 %v4509, %v4507
    %v4746 = vpack.c.b16 %v4510, %v4508
    %v4747 = vpack.c.b16 %v4513, %v4511
    %v4748 = vpack.c.b16 %v4514, %v4512
    %v4749 = vpack.c.b16 %v4517, %v4515
    %v4750 = vpack.c.b16 %v4518, %v4516
    %v4751 = vpack.c.b16 %v4521, %v4519
    %v4752 = vpack.c.b16 %v4522, %v4520
    %v4753 = vpack.c.b16 %v4525, %v4523
    %v4754 = vpack.c.b16 %v4526, %v4524
    %v4755 = vpack.c.b16 %v4529, %v4527
    %v4756 = vpack.c.b16 %v4530, %v4528
    %v4757 = vpack.c.b16 %v4533, %v4531
    %v4758 = vpack.c.b16 %v4534, %v4532
    %v4759 = vpack.c.b16 %v4537, %v4535
    %v4760 = vpack.c.b16 %v4538, %v4536
    %v4761 = vpack.c.b16 %v4541, %v4539
    %v4762 = vpack.c.b16 %v4542, %v4540
    %v4763 = vpack.c.b16 %v4545, %v4543
    %v4764 = vpack.c.b16 %v4546, %v4544
    %v4765 = vpack.c.b16 %v4549, %v4547
    %v4766 = vpack.c.b16 %v4550, %v4548
    %v4767 = vpack.c.b16 %v4553, %v4551
    %v4768 = vpack.c.b16 %v4554, %v4552
    %v4769 = vpack.c.b16 %v4557, %v4555
    %v4770 = vpack.c.b16 %v4558, %v4556
    %v4771 = vpack.c.b16 %v4561, %v4559
    %v4772 = vpack.c.b16 %v4562, %v4560
    %v4773 = vpack.c.b16 %v4565, %v4563
    %v4774 = vpack.c.b16 %v4566, %v4564
    %v4775 = vpack.c.b16 %v4569, %v4567
    %v4776 = vpack.c.b16 %v4570, %v4568
    %v4777 = vpack.c.b16 %v4573, %v4571
    %v4778 = vpack.c.b16 %v4574, %v4572
    %v4779 = vpack.c.b16 %v4577, %v4575
    %v4780 = vpack.c.b16 %v4578, %v4576
    %v4781 = vpack.c.b16 %v4581, %v4579
    %v4782 = vpack.c.b16 %v4582, %v4580
    %v4783 = vpack.c.b16 %v4585, %v4583
    %v4784 = vpack.c.b16 %v4586, %v4584
    %v4785 = vpack.c.b16 %v4589, %v4587
    %v4786 = vpack.c.b16 %v4590, %v4588
    %v4787 = vpack.c.b16 %v4593, %v4591
    %v4788 = vpack.c.b16 %v4594, %v4592
    %v4789 = vpack.c.b16 %v4597, %v4595
    %v4790 = vpack.c.b16 %v4598, %v4596
    %v4791 = vpack.c.b16 %v4601, %v4599
    %v4792 = vpack.c.b16 %v4602, %v4600
    %v4793 = vpack.c.b16 %v4605, %v4603
    %v4794 = vpack.c.b16 %v4606, %v4604
    %v4795 = vpack.c.b16 %v4609, %v4607
    %v4796 = vpack.c.b16 %v4610, %v4608
    %v4797 = vpack.c.b16 %v4613, %v4611
    %v4798 = vpack.c.b16 %v4614, %v4612
    %v4799 = vpack.c.b16 %v4617, %v4615
    %v4800 = vpack.c.b16 %v4618, %v4616
    %v4801 = vpack.c.b16 %v4621, %v4619
    %v4802 = vpack.c.b16 %v4622, %v4620
    %v4803 = vpack.c.b16 %v4625, %v4623
    %v4804 = vpack.c.b16 %v4626, %v4624
    %v4805 = vpack.c.b16 %v4629, %v4627
    %v4806 = vpack.c.b16 %v4630, %v4628
    %v4807 = vpack.c.b16 %v4633, %v4631
    %v4808 = vpack.c.b16 %v4634, %v4632
    %v4809 = vpack.c.b16 %v4637, %v4635
    %v4810 = vpack.c.b16 %v4638, %v4636
    %v4811 = vpack.c.b16 %v4641, %v4639
    %v4812 = vpack.c.b16 %v4642, %v4640
    %v4813 = vpack.c.b16 %v4645, %v4643
    %v4814 = vpack.c.b16 %v4646, %v4644
    %v4815 = vpack.c.b16 %v4649, %v4647
    %v4816 = vpack.c.b16 %v4650, %v4648
    %v4817 = vpack.c.b16 %v4653, %v4651
    %v4818 = vpack.c.b16 %v4654, %v4652
    %v4819 = vpack.c.b16 %v4657, %v4655
    %v4820 = vpack.c.b16 %v4658, %v4656
    %v4821 = vpack.c.b16 %v4661, %v4659
    %v4822 = vpack.c.b16 %v4662, %v4660
    %v4823 = vpack.c.b16 %v4665, %v4663
    %v4824 = vpack.c.b16 %v4666, %v4664
    %v4825 = vpack.c.b16 %v4669, %v4667
    %v4826 = vpack.c.b16 %v4670, %v4668
    %v4827 = vpack.c.b16 %v4673, %v4671
    %v4828 = vpack.c.b16 %v4674, %v4672
    %v4829 = vpack.c.b16 %v4677, %v4675
    %v4830 = vpack.c.b16 %v4678, %v4676
    %v4831 = vpack.c.b16 %v4681, %v4679
    %v4832 = vpack.c.b16 %v4682, %v4680
    %v4833 = vpack.c.b16 %v4685, %v4683
    %v4834 = vpack.c.b16 %v4686, %v4684
    %v4835 = vpack.c.b16 %v4689, %v4687
    %v4836 = vpack.c.b16 %v4690, %v4688
    %v4837 = vpack.c.b16 %v4693, %v4691
    %v4838 = vpack.c.b16 %v4694, %v4692
    %v4839 = vpack.c.b16 %v4697, %v4695
    %v4840 = vpack.c.b16 %v4698, %v4696
    %v4841 = vpack.c.b16 %v4701, %v4699
    %v4842 = vpack.c.b16 %v4702, %v4700
    %v4843 = vpack.c.b16 %v4705, %v4703
    %v4844 = vpack.c.b16 %v4706, %v4704
    %v4845 = vpack.c.b16 %v4709, %v4707
    %v4846 = vpack.c.b16 %v4710, %v4708
    %v4847 = vpack.c.b16 %v4713, %v4711
    %v4848 = vpack.c.b16 %v4714, %v4712
    %v4849 = vpack.c.b16 %v4717, %v4715
    %v4850 = vpack.c.b16 %v4718, %v4716
    %v4851 = vpack.c.b16 %v4721, %v4719
    %v4852 = vpack.c.b16 %v4722, %v4720
    %v4853 = vpack.c.b16 %v4725, %v4723
    %v4854 = vpack.c.b16 %v4726, %v4724
    %4983 = vmatpush.bf16.msra.mxu0 %v4741
    %4984 = vmatpush.bf16.msra.mxu0 %v4739
    %4985 = vmatpush.bf16.msra.mxu0 %v4737
    %4986 = vmatpush.bf16.msra.mxu0 %v4735
    %4987 = vmatpush.bf16.msra.mxu0 %v4733
    %4988 = vmatpush.bf16.msra.mxu0 %v4731
    %4989 = vmatpush.bf16.msra.mxu0 %v4729
    %4990 = vmatpush.bf16.msra.mxu0 %v4727
    %4991 = vmatmul.bf16.gmra.mxu0 %v4201
    %v4992 = vpop.f32.mrf.mxu0
    %v4993 = vadd.f32 %v4339, %v4992
    %v4994 = vpop.f32.mrf.mxu0
    %v4995 = vadd.f32 %v4339, %v4994
    %4996 = vdwg.mxu0
    %4997 = vmatpush.bf16.msra.mxu0 %v4757
    %4998 = vmatpush.bf16.msra.mxu0 %v4755
    %4999 = vmatpush.bf16.msra.mxu0 %v4753
    %5000 = vmatpush.bf16.msra.mxu0 %v4751
    %5001 = vmatpush.bf16.msra.mxu0 %v4749
    %5002 = vmatpush.bf16.msra.mxu0 %v4747
    %5003 = vmatpush.bf16.msra.mxu0 %v4745
    %5004 = vmatpush.bf16.msra.mxu0 %v4743
    %5005 = vmatmul.bf16.gmra.mxu0 %v4202
    %v5006 = vpop.f32.mrf.mxu0
    %v5007 = vadd.f32 %v4993, %v5006
    %v5008 = vpop.f32.mrf.mxu0
    %v5009 = vadd.f32 %v4995, %v5008
    %5010 = vdwg.mxu0
    %5011 = vmatpush.bf16.msra.mxu0 %v4773
    %5012 = vmatpush.bf16.msra.mxu0 %v4771
    %5013 = vmatpush.bf16.msra.mxu0 %v4769
    %5014 = vmatpush.bf16.msra.mxu0 %v4767
    %5015 = vmatpush.bf16.msra.mxu0 %v4765
    %5016 = vmatpush.bf16.msra.mxu0 %v4763
    %5017 = vmatpush.bf16.msra.mxu0 %v4761
    %5018 = vmatpush.bf16.msra.mxu0 %v4759
    %5019 = vmatmul.bf16.gmra.mxu0 %v4203
    %v5020 = vpop.f32.mrf.mxu0
    %v5021 = vadd.f32 %v5007, %v5020
    %v5022 = vpop.f32.mrf.mxu0
    %v5023 = vadd.f32 %v5009, %v5022
    %5024 = vdwg.mxu0
    %5025 = vmatpush.bf16.msra.mxu0 %v4789
    %5026 = vmatpush.bf16.msra.mxu0 %v4787
    %5027 = vmatpush.bf16.msra.mxu0 %v4785
    %5028 = vmatpush.bf16.msra.mxu0 %v4783
    %5029 = vmatpush.bf16.msra.mxu0 %v4781
    %5030 = vmatpush.bf16.msra.mxu0 %v4779
    %5031 = vmatpush.bf16.msra.mxu0 %v4777
    %5032 = vmatpush.bf16.msra.mxu0 %v4775
    %5033 = vmatmul.bf16.gmra.mxu0 %v4204
    %v5034 = vpop.f32.mrf.mxu0
    %v5035 = vadd.f32 %v5021, %v5034
    %v5036 = vpop.f32.mrf.mxu0
    %v5037 = vadd.f32 %v5023, %v5036
    %5038 = vdwg.mxu0
    %5039 = vmatpush.bf16.msra.mxu0 %v4805
    %5040 = vmatpush.bf16.msra.mxu0 %v4803
    %5041 = vmatpush.bf16.msra.mxu0 %v4801
    %5042 = vmatpush.bf16.msra.mxu0 %v4799
    %5043 = vmatpush.bf16.msra.mxu0 %v4797
    %5044 = vmatpush.bf16.msra.mxu0 %v4795
    %5045 = vmatpush.bf16.msra.mxu0 %v4793
    %5046 = vmatpush.bf16.msra.mxu0 %v4791
    %5047 = vmatmul.bf16.gmra.mxu0 %v4205
    %v5048 = vpop.f32.mrf.mxu0
    %v5049 = vadd.f32 %v5035, %v5048
    %v5050 = vpop.f32.mrf.mxu0
    %v5051 = vadd.f32 %v5037, %v5050
    %5052 = vdwg.mxu0
    %5053 = vmatpush.bf16.msra.mxu0 %v4821
    %5054 = vmatpush.bf16.msra.mxu0 %v4819
    %5055 = vmatpush.bf16.msra.mxu0 %v4817
    %5056 = vmatpush.bf16.msra.mxu0 %v4815
    %5057 = vmatpush.bf16.msra.mxu0 %v4813
    %5058 = vmatpush.bf16.msra.mxu0 %v4811
    %5059 = vmatpush.bf16.msra.mxu0 %v4809
    %5060 = vmatpush.bf16.msra.mxu0 %v4807
    %5061 = vmatmul.bf16.gmra.mxu0 %v4206
    %v5062 = vpop.f32.mrf.mxu0
    %v5063 = vadd.f32 %v5049, %v5062
    %v5064 = vpop.f32.mrf.mxu0
    %v5065 = vadd.f32 %v5051, %v5064
    %5066 = vdwg.mxu0
    %5067 = vmatpush.bf16.msra.mxu0 %v4837
    %5068 = vmatpush.bf16.msra.mxu0 %v4835
    %5069 = vmatpush.bf16.msra.mxu0 %v4833
    %5070 = vmatpush.bf16.msra.mxu0 %v4831
    %5071 = vmatpush.bf16.msra.mxu0 %v4829
    %5072 = vmatpush.bf16.msra.mxu0 %v4827
    %5073 = vmatpush.bf16.msra.mxu0 %v4825
    %5074 = vmatpush.bf16.msra.mxu0 %v4823
    %5075 = vmatmul.bf16.gmra.mxu0 %v4207
    %v5076 = vpop.f32.mrf.mxu0
    %v5077 = vadd.f32 %v5063, %v5076
    %v5078 = vpop.f32.mrf.mxu0
    %v5079 = vadd.f32 %v5065, %v5078
    %5080 = vdwg.mxu0
    %5081 = vmatpush.bf16.msra.mxu0 %v4853
    %5082 = vmatpush.bf16.msra.mxu0 %v4851
    %5083 = vmatpush.bf16.msra.mxu0 %v4849
    %5084 = vmatpush.bf16.msra.mxu0 %v4847
    %5085 = vmatpush.bf16.msra.mxu0 %v4845
    %5086 = vmatpush.bf16.msra.mxu0 %v4843
    %5087 = vmatpush.bf16.msra.mxu0 %v4841
    %5088 = vmatpush.bf16.msra.mxu0 %v4839
    %5089 = vmatmul.bf16.gmra.mxu0 %v4208
    %v5090 = vpop.f32.mrf.mxu0
    %v5091 = vadd.f32 %v5077, %v5090
    %v5092 = vpop.f32.mrf.mxu0
    %v5093 = vadd.f32 %v5079, %v5092
    %5094 = vdwg.mxu0
    %5095 = vmatpush.bf16.msra.mxu0 %v4742
    %5096 = vmatpush.bf16.msra.mxu0 %v4740
    %5097 = vmatpush.bf16.msra.mxu0 %v4738
    %5098 = vmatpush.bf16.msra.mxu0 %v4736
    %5099 = vmatpush.bf16.msra.mxu0 %v4734
    %5100 = vmatpush.bf16.msra.mxu0 %v4732
    %5101 = vmatpush.bf16.msra.mxu0 %v4730
    %5102 = vmatpush.bf16.msra.mxu0 %v4728
    %5103 = vmatmul.bf16.gmra.mxu0 %v4201
    %v5104 = vpop.f32.mrf.mxu0
    %v5105 = vadd.f32 %v4340, %v5104
    %v5106 = vpop.f32.mrf.mxu0
    %v5107 = vadd.f32 %v4340, %v5106
    %5108 = vdwg.mxu0
    %5109 = vmatpush.bf16.msra.mxu0 %v4758
    %5110 = vmatpush.bf16.msra.mxu0 %v4756
    %5111 = vmatpush.bf16.msra.mxu0 %v4754
    %5112 = vmatpush.bf16.msra.mxu0 %v4752
    %5113 = vmatpush.bf16.msra.mxu0 %v4750
    %5114 = vmatpush.bf16.msra.mxu0 %v4748
    %5115 = vmatpush.bf16.msra.mxu0 %v4746
    %5116 = vmatpush.bf16.msra.mxu0 %v4744
    %5117 = vmatmul.bf16.gmra.mxu0 %v4202
    %v5118 = vpop.f32.mrf.mxu0
    %v5119 = vadd.f32 %v5105, %v5118
    %v5120 = vpop.f32.mrf.mxu0
    %v5121 = vadd.f32 %v5107, %v5120
    %5122 = vdwg.mxu0
    %5123 = vmatpush.bf16.msra.mxu0 %v4774
    %5124 = vmatpush.bf16.msra.mxu0 %v4772
    %5125 = vmatpush.bf16.msra.mxu0 %v4770
    %5126 = vmatpush.bf16.msra.mxu0 %v4768
    %5127 = vmatpush.bf16.msra.mxu0 %v4766
    %5128 = vmatpush.bf16.msra.mxu0 %v4764
    %5129 = vmatpush.bf16.msra.mxu0 %v4762
    %5130 = vmatpush.bf16.msra.mxu0 %v4760
    %5131 = vmatmul.bf16.gmra.mxu0 %v4203
    %v5132 = vpop.f32.mrf.mxu0
    %v5133 = vadd.f32 %v5119, %v5132
    %v5134 = vpop.f32.mrf.mxu0
    %v5135 = vadd.f32 %v5121, %v5134
    %5136 = vdwg.mxu0
    %5137 = vmatpush.bf16.msra.mxu0 %v4790
    %5138 = vmatpush.bf16.msra.mxu0 %v4788
    %5139 = vmatpush.bf16.msra.mxu0 %v4786
    %5140 = vmatpush.bf16.msra.mxu0 %v4784
    %5141 = vmatpush.bf16.msra.mxu0 %v4782
    %5142 = vmatpush.bf16.msra.mxu0 %v4780
    %5143 = vmatpush.bf16.msra.mxu0 %v4778
    %5144 = vmatpush.bf16.msra.mxu0 %v4776
    %5145 = vmatmul.bf16.gmra.mxu0 %v4204
    %v5146 = vpop.f32.mrf.mxu0
    %v5147 = vadd.f32 %v5133, %v5146
    %v5148 = vpop.f32.mrf.mxu0
    %v5149 = vadd.f32 %v5135, %v5148
    %5150 = vdwg.mxu0
    %5151 = vmatpush.bf16.msra.mxu0 %v4806
    %5152 = vmatpush.bf16.msra.mxu0 %v4804
    %5153 = vmatpush.bf16.msra.mxu0 %v4802
    %5154 = vmatpush.bf16.msra.mxu0 %v4800
    %5155 = vmatpush.bf16.msra.mxu0 %v4798
    %5156 = vmatpush.bf16.msra.mxu0 %v4796
    %5157 = vmatpush.bf16.msra.mxu0 %v4794
    %5158 = vmatpush.bf16.msra.mxu0 %v4792
    %5159 = vmatmul.bf16.gmra.mxu0 %v4205
    %v5160 = vpop.f32.mrf.mxu0
    %v5161 = vadd.f32 %v5147, %v5160
    %v5162 = vpop.f32.mrf.mxu0
    %v5163 = vadd.f32 %v5149, %v5162
    %5164 = vdwg.mxu0
    %5165 = vmatpush.bf16.msra.mxu0 %v4822
    %5166 = vmatpush.bf16.msra.mxu0 %v4820
    %5167 = vmatpush.bf16.msra.mxu0 %v4818
    %5168 = vmatpush.bf16.msra.mxu0 %v4816
    %5169 = vmatpush.bf16.msra.mxu0 %v4814
    %5170 = vmatpush.bf16.msra.mxu0 %v4812
    %5171 = vmatpush.bf16.msra.mxu0 %v4810
    %5172 = vmatpush.bf16.msra.mxu0 %v4808
    %5173 = vmatmul.bf16.gmra.mxu0 %v4206
    %v5174 = vpop.f32.mrf.mxu0
    %v5175 = vadd.f32 %v5161, %v5174
    %v5176 = vpop.f32.mrf.mxu0
    %v5177 = vadd.f32 %v5163, %v5176
    %5178 = vdwg.mxu0
    %5179 = vmatpush.bf16.msra.mxu0 %v4838
    %5180 = vmatpush.bf16.msra.mxu0 %v4836
    %5181 = vmatpush.bf16.msra.mxu0 %v4834
    %5182 = vmatpush.bf16.msra.mxu0 %v4832
    %5183 = vmatpush.bf16.msra.mxu0 %v4830
    %5184 = vmatpush.bf16.msra.mxu0 %v4828
    %5185 = vmatpush.bf16.msra.mxu0 %v4826
    %5186 = vmatpush.bf16.msra.mxu0 %v4824
    %5187 = vmatmul.bf16.gmra.mxu0 %v4207
    %v5188 = vpop.f32.mrf.mxu0
    %v5189 = vadd.f32 %v5175, %v5188
    %v5190 = vpop.f32.mrf.mxu0
    %v5191 = vadd.f32 %v5177, %v5190
    %5192 = vdwg.mxu0
    %5193 = vmatpush.bf16.msra.mxu0 %v4854
    %5194 = vmatpush.bf16.msra.mxu0 %v4852
    %5195 = vmatpush.bf16.msra.mxu0 %v4850
    %5196 = vmatpush.bf16.msra.mxu0 %v4848
    %5197 = vmatpush.bf16.msra.mxu0 %v4846
    %5198 = vmatpush.bf16.msra.mxu0 %v4844
    %5199 = vmatpush.bf16.msra.mxu0 %v4842
    %5200 = vmatpush.bf16.msra.mxu0 %v4840
    %5201 = vmatmul.bf16.gmra.mxu0 %v4208
    %v5202 = vpop.f32.mrf.mxu0
    %v5203 = vadd.f32 %v5189, %v5202
    %v5204 = vpop.f32.mrf.mxu0
    %v5205 = vadd.f32 %v5191, %v5204
    %5206 = vdwg.mxu0
    %v5207 = vmax.f32 %v5091, 0.0
    %v5208 = vmax.f32 %v5203, 0.0
    %v5209 = vmax.f32 %v5093, 0.0
    %v5210 = vmax.f32 %v5205, 0.0
    %v5211 = vpack.c.bf16 %v5209, %v5207
    %v5212 = vpack.c.bf16 %v5210, %v5208
    %v5213 = vld [vmem:[%s5] sm:$0xf]
    %v5214 = vld [vmem:[%s5 + $0x4] sm:$0xf]
    %v5215 = vld [vmem:[%s5 + $0x8] sm:$0xf]
    %v5216 = vld [vmem:[%s5 + $0xc] sm:$0xf]
    %v5217 = vld [vmem:[%s5 + $0x10] sm:$0xf]
    %v5218 = vld [vmem:[%s5 + $0x14] sm:$0xf]
    %v5219 = vld [vmem:[%s5 + $0x18] sm:$0xf]
    %v5220 = vld [vmem:[%s5 + $0x1c] sm:$0xf]
    %v5221 = vld [vmem:[%s5 + $0x20] sm:$0xf]
    %v5222 = vld [vmem:[%s5 + $0x24] sm:$0xf]
    %v5223 = vld [vmem:[%s5 + $0x28] sm:$0xf]
    %v5224 = vld [vmem:[%s5 + $0x2c] sm:$0xf]
    %v5225 = vld [vmem:[%s5 + $0x30] sm:$0xf]
    %v5226 = vld [vmem:[%s5 + $0x34] sm:$0xf]
    %v5227 = vld [vmem:[%s5 + $0x38] sm:$0xf]
    %v5228 = vld [vmem:[%s5 + $0x3c] sm:$0xf]
    %v5229 = vld [vmem:[%s5 + $0x40] sm:$0xf]
    %v5230 = vld [vmem:[%s5 + $0x44] sm:$0xf]
    %v5231 = vld [vmem:[%s5 + $0x48] sm:$0xf]
    %v5232 = vld [vmem:[%s5 + $0x4c] sm:$0xf]
    %v5233 = vld [vmem:[%s5 + $0x50] sm:$0xf]
    %v5234 = vld [vmem:[%s5 + $0x54] sm:$0xf]
    %v5235 = vld [vmem:[%s5 + $0x58] sm:$0xf]
    %v5236 = vld [vmem:[%s5 + $0x5c] sm:$0xf]
    %v5237 = vld [vmem:[%s5 + $0x60] sm:$0xf]
    %v5238 = vld [vmem:[%s5 + $0x64] sm:$0xf]
    %v5239 = vld [vmem:[%s5 + $0x68] sm:$0xf]
    %v5240 = vld [vmem:[%s5 + $0x6c] sm:$0xf]
    %v5241 = vld [vmem:[%s5 + $0x70] sm:$0xf]
    %v5242 = vld [vmem:[%s5 + $0x74] sm:$0xf]
    %v5243 = vld [vmem:[%s5 + $0x78] sm:$0xf]
    %v5244 = vld [vmem:[%s5 + $0x7c] sm:$0xf]
    %v5245 = vld [vmem:[#allocation11] sm:$0x1]
    %v5247 = vperm.slane %v5245, 0
    %v5281 = vunpack.c.l.b16 %v5213
    %v5282 = vunpack.c.l.b16 %v5214
    %v5283 = vunpack.c.l.b16 %v5215
    %v5284 = vunpack.c.l.b16 %v5216
    %v5285 = vunpack.c.l.b16 %v5217
    %v5286 = vunpack.c.l.b16 %v5218
    %v5287 = vunpack.c.l.b16 %v5219
    %v5288 = vunpack.c.l.b16 %v5220
    %v5289 = vunpack.c.l.b16 %v5221
    %v5290 = vunpack.c.l.b16 %v5222
    %v5291 = vunpack.c.l.b16 %v5223
    %v5292 = vunpack.c.l.b16 %v5224
    %v5293 = vunpack.c.l.b16 %v5225
    %v5294 = vunpack.c.l.b16 %v5226
    %v5295 = vunpack.c.l.b16 %v5227
    %v5296 = vunpack.c.l.b16 %v5228
    %v5297 = vunpack.c.l.b16 %v5229
    %v5298 = vunpack.c.l.b16 %v5230
    %v5299 = vunpack.c.l.b16 %v5231
    %v5300 = vunpack.c.l.b16 %v5232
    %v5301 = vunpack.c.l.b16 %v5233
    %v5302 = vunpack.c.l.b16 %v5234
    %v5303 = vunpack.c.l.b16 %v5235
    %v5304 = vunpack.c.l.b16 %v5236
    %v5305 = vunpack.c.l.b16 %v5237
    %v5306 = vunpack.c.l.b16 %v5238
    %v5307 = vunpack.c.l.b16 %v5239
    %v5308 = vunpack.c.l.b16 %v5240
    %v5309 = vunpack.c.l.b16 %v5241
    %v5310 = vunpack.c.l.b16 %v5242
    %v5311 = vunpack.c.l.b16 %v5243
    %v5312 = vunpack.c.l.b16 %v5244
    %v5313 = vpack.c.b16 %v5282, %v5281
    %v5314 = vpack.c.b16 %v5284, %v5283
    %v5315 = vpack.c.b16 %v5286, %v5285
    %v5316 = vpack.c.b16 %v5288, %v5287
    %v5317 = vpack.c.b16 %v5290, %v5289
    %v5318 = vpack.c.b16 %v5292, %v5291
    %v5319 = vpack.c.b16 %v5294, %v5293
    %v5320 = vpack.c.b16 %v5296, %v5295
    %v5321 = vpack.c.b16 %v5298, %v5297
    %v5322 = vpack.c.b16 %v5300, %v5299
    %v5323 = vpack.c.b16 %v5302, %v5301
    %v5324 = vpack.c.b16 %v5304, %v5303
    %v5325 = vpack.c.b16 %v5306, %v5305
    %v5326 = vpack.c.b16 %v5308, %v5307
    %v5327 = vpack.c.b16 %v5310, %v5309
    %v5328 = vpack.c.b16 %v5312, %v5311
    %5345 = vmatpush.bf16.msra.mxu0 %v5320
    %5346 = vmatpush.bf16.msra.mxu0 %v5319
    %5347 = vmatpush.bf16.msra.mxu0 %v5318
    %5348 = vmatpush.bf16.msra.mxu0 %v5317
    %5349 = vmatpush.bf16.msra.mxu0 %v5316
    %5350 = vmatpush.bf16.msra.mxu0 %v5315
    %5351 = vmatpush.bf16.msra.mxu0 %v5314
    %5352 = vmatpush.bf16.msra.mxu0 %v5313
    %5353 = vmatmul.bf16.gmra.mxu0 %v5211
    %v5354 = vpop.f32.mrf.mxu0
    %v5355 = vadd.f32 %v5247, %v5354
    %v5356 = vpop.f32.mrf.mxu0
    %v5357 = vadd.f32 %v5247, %v5356
    %5358 = vdwg.mxu0
    %5359 = vmatpush.bf16.msra.mxu0 %v5328
    %5360 = vmatpush.bf16.msra.mxu0 %v5327
    %5361 = vmatpush.bf16.msra.mxu0 %v5326
    %5362 = vmatpush.bf16.msra.mxu0 %v5325
    %5363 = vmatpush.bf16.msra.mxu0 %v5324
    %5364 = vmatpush.bf16.msra.mxu0 %v5323
    %5365 = vmatpush.bf16.msra.mxu0 %v5322
    %5366 = vmatpush.bf16.msra.mxu0 %v5321
    %5367 = vmatmul.bf16.gmra.mxu0 %v5212
    %v5368 = vpop.f32.mrf.mxu0
    %v5369 = vadd.f32 %v5355, %v5368
    %v5370 = vpop.f32.mrf.mxu0
    %v5371 = vadd.f32 %v5357, %v5370
    %5372 = vdwg.mxu0
    %v5373 = vmax.f32 %v5369, 0.0
    %v5374 = vmax.f32 %v5371, 0.0
    %v5375 = vpack.c.bf16 %v5374, %v5373
    %v5376 = vld [vmem:[#allocation13] sm:$0xff]
    %v5377 = vld [vmem:[#allocation13 + $0x8] sm:$0xff]
    %v5378 = vld [vmem:[#allocation13 + $0x10] sm:$0xff]
    %v5379 = vld [vmem:[#allocation13 + $0x18] sm:$0xff]
    %v5380 = vld [vmem:[#allocation13 + $0x20] sm:$0xff]
    %v5381 = vld [vmem:[#allocation13 + $0x28] sm:$0xff]
    %v5382 = vld [vmem:[#allocation13 + $0x30] sm:$0xff]
    %v5383 = vld [vmem:[#allocation13 + $0x38] sm:$0xff]
    %v5384 = vld [vmem:[#allocation14] sm:$0x3]
    %v5386 = vperm.slane %v5384, 0
    %v5387 = vperm.slane %v5384, 1
    %v5398 = vunpack.c.l.b16 %v5376
    %v5399 = vunpack.c.h.b16 %v5376
    %v5400 = vunpack.c.l.b16 %v5377
    %v5401 = vunpack.c.h.b16 %v5377
    %v5402 = vunpack.c.l.b16 %v5378
    %v5403 = vunpack.c.h.b16 %v5378
    %v5404 = vunpack.c.l.b16 %v5379
    %v5405 = vunpack.c.h.b16 %v5379
    %v5406 = vunpack.c.l.b16 %v5380
    %v5407 = vunpack.c.h.b16 %v5380
    %v5408 = vunpack.c.l.b16 %v5381
    %v5409 = vunpack.c.h.b16 %v5381
    %v5410 = vunpack.c.l.b16 %v5382
    %v5411 = vunpack.c.h.b16 %v5382
    %v5412 = vunpack.c.l.b16 %v5383
    %v5413 = vunpack.c.h.b16 %v5383
    %v5414 = vpack.c.b16 %v5400, %v5398
    %v5415 = vpack.c.b16 %v5401, %v5399
    %v5416 = vpack.c.b16 %v5404, %v5402
    %v5417 = vpack.c.b16 %v5405, %v5403
    %v5418 = vpack.c.b16 %v5408, %v5406
    %v5419 = vpack.c.b16 %v5409, %v5407
    %v5420 = vpack.c.b16 %v5412, %v5410
    %v5421 = vpack.c.b16 %v5413, %v5411
    %vm5430 = vcmask 523264
    %v5432 = vsel %vm5430, %v5375, 0
    %5434 = vmatpush.bf16.msra.mxu0 0
    %5435 = vmatpush.bf16.msra.mxu0 0
    %5436 = vmatpush.bf16.msra.mxu0 0
    %5437 = vmatpush.bf16.msra.mxu0 0
    %5438 = vmatpush.bf16.msra.mxu0 %v5420
    %5439 = vmatpush.bf16.msra.mxu0 %v5418
    %5440 = vmatpush.bf16.msra.mxu0 %v5416
    %5441 = vmatpush.bf16.msra.mxu0 %v5414
    %5442 = vmatmul.bf16.gmra.mxu0 %v5432
    %v5443 = vpop.f32.mrf.mxu0
    %v5444 = vadd.f32 %v5386, %v5443
    %v5445 = vpop.f32.mrf.mxu0
    %v5446 = vadd.f32 %v5386, %v5445
    %5447 = vdwg.mxu0
    %5448 = vmatpush.bf16.msra.mxu0 0
    %5449 = vmatpush.bf16.msra.mxu0 0
    %5450 = vmatpush.bf16.msra.mxu0 0
    %5451 = vmatpush.bf16.msra.mxu0 0
    %5452 = vmatpush.bf16.msra.mxu0 %v5421
    %5453 = vmatpush.bf16.msra.mxu0 %v5419
    %5454 = vmatpush.bf16.msra.mxu0 %v5417
    %5455 = vmatpush.bf16.msra.mxu0 %v5415
    %5456 = vmatmul.bf16.gmra.mxu0 %v5432
    %v5457 = vpop.f32.mrf.mxu0
    %v5458 = vadd.f32 %v5387, %v5457
    %v5459 = vpop.f32.mrf.mxu0
    %v5460 = vadd.f32 %v5387, %v5459
    %5461 = vdwg.mxu0
    %5462 = vst [vmem:[#allocation16] sm:$0xff] %v5444
    %5463 = vst [vmem:[#allocation16 + $0x8] sm:$0xff] %v5458
    %5464 = vst [vmem:[#allocation16 + $0x10] sm:$0xff] %v5446
    %5465 = vst [vmem:[#allocation16 + $0x18] sm:$0xff] %v5460
    // Predicated region
    $region70: #{tpu_custom_call.1} parent=1 // pred_check
      _
    $region71: #{tpu_custom_call.1} parent=1 // pred_check_branch
      %5467 = sbr.rel (0) target = $region73
    $region72: #{tpu_custom_call.1} parent=1 // pred_region
      %5469 = vsyncadd [#allocation4], 0
      %s5470 = sshll.u32 [#allocation16], 4
      %s5471 = int_to_ptr.vmem [resolvable:$true] %s5470
      %s5472 = sshll.u32 %s9, 4
      %s5473 = int_to_ptr.hbm [resolvable:$true] %s5472
      %5478 = dma.vmem_to_hbm [thread:$0]  %s5471, 512, %s5473, [#allocation4], 256, 256, 16
    $region73: #{tpu_custom_call.1} parent=1 // pred_fallthru
      _
    // Predicated region
    $region74: #{tpu_custom_call.1} parent=1 // pred_check
      _
    $region75: #{tpu_custom_call.1} parent=1 // pred_check_branch
      %5480 = sbr.rel (0) target = $region77
    $region76: #{tpu_custom_call.1} parent=1 // pred_region
      %5482 = dma.done [#allocation4], 512
    $region77: #{tpu_custom_call.1} parent=1 // pred_fallthru
      _
    %5483 = vsyncpa [#allocation3], 1
    %5484 = vsyncpa [#allocation6], 1
    %5485 = vsyncpa [#allocation9], 1
    %5486 = vsyncpa [#allocation12], 1
    %5487 = vsyncpa [#allocation15], 1
    %5488 = vsyncpa [#allocation4], 1

</llo_original>
